<compile_context>
chip_gen: v7x
topology: tpu7x:2x2x1
jax: 0.10.0
libtpu: 0.0.40
codegen_flags: <defaults>
</compile_context>

<pallas_src>
import jax
import jax.numpy as jnp
from jax.experimental import pallas as pl
from jax.experimental.pallas import tpu as pltpu

I_DIM = 101       # LSTM input_size
I_PAD = 128       # padded input feature dim (8,128)-friendly
H = 128           # LSTM hidden_size
T = 8             # sequence length (small demo)
B = 4             # batch size
B_PAD = 8         # padded batch (one full sublane group; padded rows are discarded)
N_LABELS = 12     # n_labels for the final Linear
N_PAD = 128       # padded output lanes (avoid masked vst); sliced in the wrapper


def lstm_kernel(x_ref,       # (T*B_PAD, I_PAD)  bf16, time-major, flattened
                wih1_ref,    # (I_PAD, 4H)       bf16, gate cols permuted (i,f,o,g)
                whh1_ref,    # (H, 4H)           bf16
                b1_ref,      # (1, 4H)           f32  (bih1 + bhh1, permuted)
                wih2_ref,    # (H, 4H)           bf16
                whh2_ref,    # (H, 4H)           bf16
                b2_ref,      # (1, 4H)           f32  (bih2 + bhh2, permuted)
                wlin_ref,    # (H, N_PAD)        bf16
                out_ref,     # (B_PAD, N_PAD)    f32
                xproj_ref):  # VMEM scratch (T*B_PAD, 4H) f32
    # ---- Hoisted layer-1 input projection: one big matmul for ALL timesteps ----
    # T*B_PAD = 64 LHS rows instead of 8 per serial step; bias folded in here once.
    xproj_ref[...] = (
        jnp.dot(x_ref[...], wih1_ref[...], preferred_element_type=jnp.float32)
        + b1_ref[...])

    # Pre-broadcast layer-2 bias once (JAX does not CSE broadcast_in_dim).
    b2 = jnp.broadcast_to(b2_ref[...], (B_PAD, 4 * H))

    def activate(gates, c):
        # Gate columns are pre-permuted to (i, f, o, g):
        # one sigmoid EUP push over the first 3H lanes, one tanh push over the last H.
        sig = jax.nn.sigmoid(gates[:, :3 * H])
        g_g = jnp.tanh(gates[:, 3 * H:])
        i_g = sig[:, 0 * H:1 * H]
        f_g = sig[:, 1 * H:2 * H]
        o_g = sig[:, 2 * H:3 * H]
        c_new = f_g * c + i_g * g_g                       # f32 state math
        h_new = (o_g * jnp.tanh(c_new)).astype(jnp.bfloat16)
        return h_new, c_new

    def activate_zero_c(gates):
        # Specialization for c == 0: the f*c term vanishes.
        sig = jax.nn.sigmoid(gates[:, :3 * H])
        g_g = jnp.tanh(gates[:, 3 * H:])
        i_g = sig[:, 0 * H:1 * H]
        o_g = sig[:, 2 * H:3 * H]
        c_new = i_g * g_g
        h_new = (o_g * jnp.tanh(c_new)).astype(jnp.bfloat16)
        return h_new, c_new

    # ---- Peeled t = 0: initial h/c are zero, so both recurrent matmuls vanish ----
    g1 = xproj_ref[pl.ds(0, B_PAD), :]
    h1, c1 = activate_zero_c(g1)
    g2 = jnp.dot(h1, wih2_ref[...], preferred_element_type=jnp.float32) + b2
    h2, c2 = activate_zero_c(g2)

    def step(t, carry):
        h1, c1, h2, c2 = carry
        row = pl.multiple_of(t * B_PAD, B_PAD)
        # Layer-2 recurrent matmul depends only on h2 from the PREVIOUS step;
        # issuing it independently (no concat with h1n) lets its MXU push overlap
        # with layer-1's sigmoid/tanh on the serial critical path.
        r2 = jnp.dot(h2, whh2_ref[...], preferred_element_type=jnp.float32)
        # Layer 1: input projection precomputed; only the recurrent matmul remains.
        g1 = xproj_ref[pl.ds(row, B_PAD), :] + jnp.dot(
            h1, whh1_ref[...], preferred_element_type=jnp.float32)
        h1n, c1n = activate(g1, c1)
        # Layer 2: input-projection matmul (depends on h1n) + precomputed recurrent term.
        g2 = jnp.dot(h1n, wih2_ref[...],
                     preferred_element_type=jnp.float32) + r2 + b2
        h2n, c2n = activate(g2, c2)
        return h1n, c1n, h2n, c2n

    _, _, h2, _ = jax.lax.fori_loop(1, T, step, (h1, c1, h2, c2), unroll=True)

    # y = linear(embedding[:, -1, :])  (last-timestep layer-2 hidden state)
    out_ref[...] = jnp.dot(h2, wlin_ref[...], preferred_element_type=jnp.float32)


def _gate_perm():
    # PyTorch gate order is (i, f, g, o); reorder columns to (i, f, o, g).
    return jnp.concatenate([jnp.arange(0, H), jnp.arange(H, 2 * H),
                            jnp.arange(3 * H, 4 * H), jnp.arange(2 * H, 3 * H)])


@jax.jit
def lstm_forward(x, params):
    """x: (B, T, I) batch_first, float32. Returns (B, n_labels) float32."""
    perm = _gate_perm()

    # ---- input prep: pad batch->8 and feature->128, go time-major, flatten ----
    x_pad = jnp.pad(x, ((0, B_PAD - B), (0, 0), (0, I_PAD - I_DIM)))      # (B_PAD,T,I_PAD)
    x_tm = jnp.transpose(x_pad, (1, 0, 2)).reshape(T * B_PAD, I_PAD)
    x_tm = x_tm.astype(jnp.bfloat16)

    # ---- weight prep: transpose, pad, permute gates, cast to bf16 ----
    wih1_t = jnp.pad(params["wih1"].T, ((0, I_PAD - I_DIM), (0, 0)))[:, perm]
    wih1_t = wih1_t.astype(jnp.bfloat16)                                   # (I_PAD,4H)
    whh1_t = params["whh1"].T[:, perm].astype(jnp.bfloat16)                # (H,4H)
    b1 = (params["bih1"] + params["bhh1"])[perm].reshape(1, 4 * H)
    b1 = b1.astype(jnp.float32)

    wih2_t = params["wih2"].T[:, perm].astype(jnp.bfloat16)                # (H,4H)
    whh2_t = params["whh2"].T[:, perm].astype(jnp.bfloat16)                # (H,4H)
    b2 = (params["bih2"] + params["bhh2"])[perm].reshape(1, 4 * H)
    b2 = b2.astype(jnp.float32)

    wlin_t = jnp.pad(params["wlin"].T, ((0, 0), (0, N_PAD - N_LABELS)))    # (H,N_PAD)
    wlin_t = wlin_t.astype(jnp.bfloat16)

    vmem = pl.BlockSpec(memory_space=pltpu.MemorySpace.VMEM)
    out_pad = pl.pallas_call(
        lstm_kernel,
        out_shape=jax.ShapeDtypeStruct((B_PAD, N_PAD), jnp.float32),
        in_specs=[vmem] * 8,
        out_specs=vmem,
        scratch_shapes=[pltpu.VMEM((T * B_PAD, 4 * H), jnp.float32)],
    )(x_tm, wih1_t, whh1_t, b1, wih2_t, whh2_t, b2, wlin_t)
    return out_pad[:B, :N_LABELS]


def ref_forward(x, p):
    """Pure-JAX f32 reference mirroring PyTorch nn.LSTM + Linear semantics."""
    def run_layer(inp, wih, whh, bih, bhh):
        h = jnp.zeros((inp.shape[0], H), jnp.float32)
        c = jnp.zeros((inp.shape[0], H), jnp.float32)
        outs = []
        for t in range(inp.shape[1]):
            g = inp[:, t, :] @ wih.T + bih + h @ whh.T + bhh
            i = jax.nn.sigmoid(g[:, :H])
            f = jax.nn.sigmoid(g[:, H:2 * H])
            gg = jnp.tanh(g[:, 2 * H:3 * H])
            o = jax.nn.sigmoid(g[:, 3 * H:])
            c = f * c + i * gg
            h = o * jnp.tanh(c)
            outs.append(h)
        return jnp.stack(outs, axis=1)

    o1 = run_layer(x, p["wih1"], p["whh1"], p["bih1"], p["bhh1"])
    o2 = run_layer(o1, p["wih2"], p["whh2"], p["bih2"], p["bhh2"])
    return o2[:, -1, :] @ p["wlin"].T


def init_params(key):
    k = 1.0 / jnp.sqrt(jnp.float32(H))   # PyTorch default init scale
    shapes = {
        "wih1": (4 * H, I_DIM), "whh1": (4 * H, H),
        "bih1": (4 * H,),       "bhh1": (4 * H,),
        "wih2": (4 * H, H),     "whh2": (4 * H, H),
        "bih2": (4 * H,),       "bhh2": (4 * H,),
        "wlin": (N_LABELS, H),
    }
    params = {}
    for name, shape in shapes.items():
        key, sub = jax.random.split(key)
        params[name] = jax.random.uniform(sub, shape, jnp.float32, -k, k)
    return params


if __name__ == "__main__":
    root = jax.random.PRNGKey(0)
    kx, kp = jax.random.split(root)
    x = jax.random.normal(kx, (B, T, I_DIM), jnp.float32)
    params = init_params(kp)

    y = lstm_forward(x, params)
    jax.block_until_ready(y)

    y_ref = ref_forward(x, params)
    assert y.shape == (B, N_LABELS)
    # Tolerance loosened vs. the pure-f32 version: matmul operands are bf16
    # (f32 accumulation, f32 c-state math) across the 2-layer, T=8 recurrence.
    assert jnp.allclose(y, y_ref, atol=3e-2, rtol=3e-2), (
        f"max abs err {jnp.max(jnp.abs(y - y_ref))}")
    print("KERNEL_OK")
</pallas_src>

<mosaic_0001>
module attributes {stable_mosaic.version = 11 : i64} {
  func.func @lstm_kernel(%arg0: memref<64x128xbf16, #tpu.memory_space<vmem>>, %arg1: memref<128x512xbf16, #tpu.memory_space<vmem>>, %arg2: memref<128x512xbf16, #tpu.memory_space<vmem>>, %arg3: memref<1x512xf32, #tpu.memory_space<vmem>>, %arg4: memref<128x512xbf16, #tpu.memory_space<vmem>>, %arg5: memref<128x512xbf16, #tpu.memory_space<vmem>>, %arg6: memref<1x512xf32, #tpu.memory_space<vmem>>, %arg7: memref<128x128xbf16, #tpu.memory_space<vmem>>, %arg8: memref<8x128xf32, #tpu.memory_space<vmem>>, %arg9: memref<64x512xf32, #tpu.memory_space<vmem>>) attributes {dimension_semantics = [], scalar_prefetch = 0 : i64, scratch_operands = 1 : i64, tpu.core_type = #tpu.core_type<tc>} {
    %c0 = arith.constant 0 : index
    %c0_0 = arith.constant 0 : index
    %0 = vector.load %arg0[%c0, %c0_0] : memref<64x128xbf16, #tpu.memory_space<vmem>>, vector<64x128xbf16>
    %c0_1 = arith.constant 0 : index
    %c0_2 = arith.constant 0 : index
    %1 = vector.load %arg1[%c0_1, %c0_2] : memref<128x512xbf16, #tpu.memory_space<vmem>>, vector<128x512xbf16>
    %cst = arith.constant dense<0.000000e+00> : vector<64x512xf32>
    %2 = tpu.matmul %0, %1, %cst {dimension_numbers = #tpu.dot_dimension_numbers<[1], [0], [0], [1], [0, 0, 1, 1], [], []>} : vector<64x128xbf16>, vector<128x512xbf16>, vector<64x512xf32> -> vector<64x512xf32>
    %c0_3 = arith.constant 0 : index
    %c0_4 = arith.constant 0 : index
    %3 = vector.load %arg3[%c0_3, %c0_4] : memref<1x512xf32, #tpu.memory_space<vmem>>, vector<1x512xf32>
    %4 = vector.broadcast %3 : vector<1x512xf32> to vector<64x512xf32>
    %5 = arith.addf %2, %4 : vector<64x512xf32>
    %c0_5 = arith.constant 0 : index
    %c0_6 = arith.constant 0 : index
    %6 = vector.load %arg9[%c0_5, %c0_6] : memref<64x512xf32, #tpu.memory_space<vmem>>, vector<64x512xf32>
    tpu.vector_store %arg9[%c0_5, %c0_6], %5 {strides = array<i32>} : memref<64x512xf32, #tpu.memory_space<vmem>>, vector<64x512xf32>,
    %c0_7 = arith.constant 0 : index
    %c0_8 = arith.constant 0 : index
    %7 = vector.load %arg6[%c0_7, %c0_8] : memref<1x512xf32, #tpu.memory_space<vmem>>, vector<1x512xf32>
    %8 = vector.shape_cast %7 : vector<1x512xf32> to vector<1x512xf32>
    %9 = vector.broadcast %8 : vector<1x512xf32> to vector<8x512xf32>
    %c0_9 = arith.constant 0 : index
    %c0_10 = arith.constant 0 : index
    %10 = vector.load %arg9[%c0_9, %c0_10] : memref<64x512xf32, #tpu.memory_space<vmem>>, vector<8x512xf32>
    %11 = vector.extract_strided_slice %10 {offsets = [0, 0], sizes = [8, 384], strides = [1, 1]} : vector<8x512xf32> to vector<8x384xf32>
    %12 = arith.negf %11 : vector<8x384xf32>
    %13 = math.exp %12 : vector<8x384xf32>
    %cst_11 = arith.constant 1.000000e+00 : f32
    %14 = vector.broadcast %cst_11 : f32 to vector<8x384xf32>
    %15 = arith.addf %14, %13 : vector<8x384xf32>
    %16 = arith.divf %14, %15 : vector<8x384xf32>
    %17 = vector.extract_strided_slice %10 {offsets = [0, 384], sizes = [8, 128], strides = [1, 1]} : vector<8x512xf32> to vector<8x128xf32>
    %18 = math.tanh %17 : vector<8x128xf32>
    %19 = vector.extract_strided_slice %16 {offsets = [0, 0], sizes = [8, 128], strides = [1, 1]} : vector<8x384xf32> to vector<8x128xf32>
    %20 = vector.extract_strided_slice %16 {offsets = [0, 256], sizes = [8, 128], strides = [1, 1]} : vector<8x384xf32> to vector<8x128xf32>
    %21 = arith.mulf %19, %18 : vector<8x128xf32>
    %22 = math.tanh %21 : vector<8x128xf32>
    %23 = arith.mulf %20, %22 : vector<8x128xf32>
    %24 = arith.truncf %23 : vector<8x128xf32> to vector<8x128xbf16>
    %c0_12 = arith.constant 0 : index
    %c0_13 = arith.constant 0 : index
    %25 = vector.load %arg4[%c0_12, %c0_13] : memref<128x512xbf16, #tpu.memory_space<vmem>>, vector<128x512xbf16>
    %cst_14 = arith.constant dense<0.000000e+00> : vector<8x512xf32>
    %26 = tpu.matmul %24, %25, %cst_14 {dimension_numbers = #tpu.dot_dimension_numbers<[1], [0], [0], [1], [0, 0, 1, 1], [], []>} : vector<8x128xbf16>, vector<128x512xbf16>, vector<8x512xf32> -> vector<8x512xf32>
    %27 = arith.addf %26, %9 : vector<8x512xf32>
    %28 = vector.extract_strided_slice %27 {offsets = [0, 0], sizes = [8, 384], strides = [1, 1]} : vector<8x512xf32> to vector<8x384xf32>
    %29 = arith.negf %28 : vector<8x384xf32>
    %30 = math.exp %29 : vector<8x384xf32>
    %cst_15 = arith.constant 1.000000e+00 : f32
    %31 = vector.broadcast %cst_15 : f32 to vector<8x384xf32>
    %32 = arith.addf %31, %30 : vector<8x384xf32>
    %33 = arith.divf %31, %32 : vector<8x384xf32>
    %34 = vector.extract_strided_slice %27 {offsets = [0, 384], sizes = [8, 128], strides = [1, 1]} : vector<8x512xf32> to vector<8x128xf32>
    %35 = math.tanh %34 : vector<8x128xf32>
    %36 = vector.extract_strided_slice %33 {offsets = [0, 0], sizes = [8, 128], strides = [1, 1]} : vector<8x384xf32> to vector<8x128xf32>
    %37 = vector.extract_strided_slice %33 {offsets = [0, 256], sizes = [8, 128], strides = [1, 1]} : vector<8x384xf32> to vector<8x128xf32>
    %38 = arith.mulf %36, %35 : vector<8x128xf32>
    %39 = math.tanh %38 : vector<8x128xf32>
    %40 = arith.mulf %37, %39 : vector<8x128xf32>
    %41 = arith.truncf %40 : vector<8x128xf32> to vector<8x128xbf16>
    %c1_i32 = arith.constant 1 : i32
    %c8_i32 = arith.constant 8 : i32
    %42 = arith.muli %c1_i32, %c8_i32 : i32
    %43 = tpu.assume_multiple %42, 8 : i32
    %c0_16 = arith.constant 0 : index
    %c0_17 = arith.constant 0 : index
    %44 = vector.load %arg5[%c0_16, %c0_17] : memref<128x512xbf16, #tpu.memory_space<vmem>>, vector<128x512xbf16>
    %cst_18 = arith.constant dense<0.000000e+00> : vector<8x512xf32>
    %45 = tpu.matmul %41, %44, %cst_18 {dimension_numbers = #tpu.dot_dimension_numbers<[1], [0], [0], [1], [0, 0, 1, 1], [], []>} : vector<8x128xbf16>, vector<128x512xbf16>, vector<8x512xf32> -> vector<8x512xf32>
    %46 = arith.index_cast %43 : i32 to index
    %c0_19 = arith.constant 0 : index
    %47 = vector.load %arg9[%46, %c0_19] : memref<64x512xf32, #tpu.memory_space<vmem>>, vector<8x512xf32>
    %c0_20 = arith.constant 0 : index
    %c0_21 = arith.constant 0 : index
    %48 = vector.load %arg2[%c0_20, %c0_21] : memref<128x512xbf16, #tpu.memory_space<vmem>>, vector<128x512xbf16>
    %cst_22 = arith.constant dense<0.000000e+00> : vector<8x512xf32>
    %49 = tpu.matmul %24, %48, %cst_22 {dimension_numbers = #tpu.dot_dimension_numbers<[1], [0], [0], [1], [0, 0, 1, 1], [], []>} : vector<8x128xbf16>, vector<128x512xbf16>, vector<8x512xf32> -> vector<8x512xf32>
    %50 = arith.addf %47, %49 : vector<8x512xf32>
    %51 = vector.extract_strided_slice %50 {offsets = [0, 0], sizes = [8, 384], strides = [1, 1]} : vector<8x512xf32> to vector<8x384xf32>
    %52 = arith.negf %51 : vector<8x384xf32>
    %53 = math.exp %52 : vector<8x384xf32>
    %cst_23 = arith.constant 1.000000e+00 : f32
    %54 = vector.broadcast %cst_23 : f32 to vector<8x384xf32>
    %55 = arith.addf %54, %53 : vector<8x384xf32>
    %56 = arith.divf %54, %55 : vector<8x384xf32>
    %57 = vector.extract_strided_slice %50 {offsets = [0, 384], sizes = [8, 128], strides = [1, 1]} : vector<8x512xf32> to vector<8x128xf32>
    %58 = math.tanh %57 : vector<8x128xf32>
    %59 = vector.extract_strided_slice %56 {offsets = [0, 0], sizes = [8, 128], strides = [1, 1]} : vector<8x384xf32> to vector<8x128xf32>
    %60 = vector.extract_strided_slice %56 {offsets = [0, 128], sizes = [8, 128], strides = [1, 1]} : vector<8x384xf32> to vector<8x128xf32>
    %61 = vector.extract_strided_slice %56 {offsets = [0, 256], sizes = [8, 128], strides = [1, 1]} : vector<8x384xf32> to vector<8x128xf32>
    %62 = arith.mulf %60, %21 : vector<8x128xf32>
    %63 = arith.mulf %59, %58 : vector<8x128xf32>
    %64 = arith.addf %62, %63 : vector<8x128xf32>
    %65 = math.tanh %64 : vector<8x128xf32>
    %66 = arith.mulf %61, %65 : vector<8x128xf32>
    %67 = arith.truncf %66 : vector<8x128xf32> to vector<8x128xbf16>
    %c0_24 = arith.constant 0 : index
    %c0_25 = arith.constant 0 : index
    %68 = vector.load %arg4[%c0_24, %c0_25] : memref<128x512xbf16, #tpu.memory_space<vmem>>, vector<128x512xbf16>
    %cst_26 = arith.constant dense<0.000000e+00> : vector<8x512xf32>
    %69 = tpu.matmul %67, %68, %cst_26 {dimension_numbers = #tpu.dot_dimension_numbers<[1], [0], [0], [1], [0, 0, 1, 1], [], []>} : vector<8x128xbf16>, vector<128x512xbf16>, vector<8x512xf32> -> vector<8x512xf32>
    %70 = arith.addf %69, %45 : vector<8x512xf32>
    %71 = arith.addf %70, %9 : vector<8x512xf32>
    %72 = vector.extract_strided_slice %71 {offsets = [0, 0], sizes = [8, 384], strides = [1, 1]} : vector<8x512xf32> to vector<8x384xf32>
    %73 = arith.negf %72 : vector<8x384xf32>
    %74 = math.exp %73 : vector<8x384xf32>
    %cst_27 = arith.constant 1.000000e+00 : f32
    %75 = vector.broadcast %cst_27 : f32 to vector<8x384xf32>
    %76 = arith.addf %75, %74 : vector<8x384xf32>
    %77 = arith.divf %75, %76 : vector<8x384xf32>
    %78 = vector.extract_strided_slice %71 {offsets = [0, 384], sizes = [8, 128], strides = [1, 1]} : vector<8x512xf32> to vector<8x128xf32>
    %79 = math.tanh %78 : vector<8x128xf32>
    %80 = vector.extract_strided_slice %77 {offsets = [0, 0], sizes = [8, 128], strides = [1, 1]} : vector<8x384xf32> to vector<8x128xf32>
    %81 = vector.extract_strided_slice %77 {offsets = [0, 128], sizes = [8, 128], strides = [1, 1]} : vector<8x384xf32> to vector<8x128xf32>
    %82 = vector.extract_strided_slice %77 {offsets = [0, 256], sizes = [8, 128], strides = [1, 1]} : vector<8x384xf32> to vector<8x128xf32>
    %83 = arith.mulf %81, %38 : vector<8x128xf32>
    %84 = arith.mulf %80, %79 : vector<8x128xf32>
    %85 = arith.addf %83, %84 : vector<8x128xf32>
    %86 = math.tanh %85 : vector<8x128xf32>
    %87 = arith.mulf %82, %86 : vector<8x128xf32>
    %88 = arith.truncf %87 : vector<8x128xf32> to vector<8x128xbf16>
    %c2_i32 = arith.constant 2 : i32
    %c8_i32_28 = arith.constant 8 : i32
    %89 = arith.muli %c2_i32, %c8_i32_28 : i32
    %90 = tpu.assume_multiple %89, 8 : i32
    %c0_29 = arith.constant 0 : index
    %c0_30 = arith.constant 0 : index
    %91 = vector.load %arg5[%c0_29, %c0_30] : memref<128x512xbf16, #tpu.memory_space<vmem>>, vector<128x512xbf16>
    %cst_31 = arith.constant dense<0.000000e+00> : vector<8x512xf32>
    %92 = tpu.matmul %88, %91, %cst_31 {dimension_numbers = #tpu.dot_dimension_numbers<[1], [0], [0], [1], [0, 0, 1, 1], [], []>} : vector<8x128xbf16>, vector<128x512xbf16>, vector<8x512xf32> -> vector<8x512xf32>
    %93 = arith.index_cast %90 : i32 to index
    %c0_32 = arith.constant 0 : index
    %94 = vector.load %arg9[%93, %c0_32] : memref<64x512xf32, #tpu.memory_space<vmem>>, vector<8x512xf32>
    %c0_33 = arith.constant 0 : index
    %c0_34 = arith.constant 0 : index
    %95 = vector.load %arg2[%c0_33, %c0_34] : memref<128x512xbf16, #tpu.memory_space<vmem>>, vector<128x512xbf16>
    %cst_35 = arith.constant dense<0.000000e+00> : vector<8x512xf32>
    %96 = tpu.matmul %67, %95, %cst_35 {dimension_numbers = #tpu.dot_dimension_numbers<[1], [0], [0], [1], [0, 0, 1, 1], [], []>} : vector<8x128xbf16>, vector<128x512xbf16>, vector<8x512xf32> -> vector<8x512xf32>
    %97 = arith.addf %94, %96 : vector<8x512xf32>
    %98 = vector.extract_strided_slice %97 {offsets = [0, 0], sizes = [8, 384], strides = [1, 1]} : vector<8x512xf32> to vector<8x384xf32>
    %99 = arith.negf %98 : vector<8x384xf32>
    %100 = math.exp %99 : vector<8x384xf32>
    %cst_36 = arith.constant 1.000000e+00 : f32
    %101 = vector.broadcast %cst_36 : f32 to vector<8x384xf32>
    %102 = arith.addf %101, %100 : vector<8x384xf32>
    %103 = arith.divf %101, %102 : vector<8x384xf32>
    %104 = vector.extract_strided_slice %97 {offsets = [0, 384], sizes = [8, 128], strides = [1, 1]} : vector<8x512xf32> to vector<8x128xf32>
    %105 = math.tanh %104 : vector<8x128xf32>
    %106 = vector.extract_strided_slice %103 {offsets = [0, 0], sizes = [8, 128], strides = [1, 1]} : vector<8x384xf32> to vector<8x128xf32>
    %107 = vector.extract_strided_slice %103 {offsets = [0, 128], sizes = [8, 128], strides = [1, 1]} : vector<8x384xf32> to vector<8x128xf32>
    %108 = vector.extract_strided_slice %103 {offsets = [0, 256], sizes = [8, 128], strides = [1, 1]} : vector<8x384xf32> to vector<8x128xf32>
    %109 = arith.mulf %107, %64 : vector<8x128xf32>
    %110 = arith.mulf %106, %105 : vector<8x128xf32>
    %111 = arith.addf %109, %110 : vector<8x128xf32>
    %112 = math.tanh %111 : vector<8x128xf32>
    %113 = arith.mulf %108, %112 : vector<8x128xf32>
    %114 = arith.truncf %113 : vector<8x128xf32> to vector<8x128xbf16>
    %c0_37 = arith.constant 0 : index
    %c0_38 = arith.constant 0 : index
    %115 = vector.load %arg4[%c0_37, %c0_38] : memref<128x512xbf16, #tpu.memory_space<vmem>>, vector<128x512xbf16>
    %cst_39 = arith.constant dense<0.000000e+00> : vector<8x512xf32>
    %116 = tpu.matmul %114, %115, %cst_39 {dimension_numbers = #tpu.dot_dimension_numbers<[1], [0], [0], [1], [0, 0, 1, 1], [], []>} : vector<8x128xbf16>, vector<128x512xbf16>, vector<8x512xf32> -> vector<8x512xf32>
    %117 = arith.addf %116, %92 : vector<8x512xf32>
    %118 = arith.addf %117, %9 : vector<8x512xf32>
    %119 = vector.extract_strided_slice %118 {offsets = [0, 0], sizes = [8, 384], strides = [1, 1]} : vector<8x512xf32> to vector<8x384xf32>
    %120 = arith.negf %119 : vector<8x384xf32>
    %121 = math.exp %120 : vector<8x384xf32>
    %cst_40 = arith.constant 1.000000e+00 : f32
    %122 = vector.broadcast %cst_40 : f32 to vector<8x384xf32>
    %123 = arith.addf %122, %121 : vector<8x384xf32>
    %124 = arith.divf %122, %123 : vector<8x384xf32>
    %125 = vector.extract_strided_slice %118 {offsets = [0, 384], sizes = [8, 128], strides = [1, 1]} : vector<8x512xf32> to vector<8x128xf32>
    %126 = math.tanh %125 : vector<8x128xf32>
    %127 = vector.extract_strided_slice %124 {offsets = [0, 0], sizes = [8, 128], strides = [1, 1]} : vector<8x384xf32> to vector<8x128xf32>
    %128 = vector.extract_strided_slice %124 {offsets = [0, 128], sizes = [8, 128], strides = [1, 1]} : vector<8x384xf32> to vector<8x128xf32>
    %129 = vector.extract_strided_slice %124 {offsets = [0, 256], sizes = [8, 128], strides = [1, 1]} : vector<8x384xf32> to vector<8x128xf32>
    %130 = arith.mulf %128, %85 : vector<8x128xf32>
    %131 = arith.mulf %127, %126 : vector<8x128xf32>
    %132 = arith.addf %130, %131 : vector<8x128xf32>
    %133 = math.tanh %132 : vector<8x128xf32>
    %134 = arith.mulf %129, %133 : vector<8x128xf32>
    %135 = arith.truncf %134 : vector<8x128xf32> to vector<8x128xbf16>
    %c3_i32 = arith.constant 3 : i32
    %c8_i32_41 = arith.constant 8 : i32
    %136 = arith.muli %c3_i32, %c8_i32_41 : i32
    %137 = tpu.assume_multiple %136, 8 : i32
    %c0_42 = arith.constant 0 : index
    %c0_43 = arith.constant 0 : index
    %138 = vector.load %arg5[%c0_42, %c0_43] : memref<128x512xbf16, #tpu.memory_space<vmem>>, vector<128x512xbf16>
    %cst_44 = arith.constant dense<0.000000e+00> : vector<8x512xf32>
    %139 = tpu.matmul %135, %138, %cst_44 {dimension_numbers = #tpu.dot_dimension_numbers<[1], [0], [0], [1], [0, 0, 1, 1], [], []>} : vector<8x128xbf16>, vector<128x512xbf16>, vector<8x512xf32> -> vector<8x512xf32>
    %140 = arith.index_cast %137 : i32 to index
    %c0_45 = arith.constant 0 : index
    %141 = vector.load %arg9[%140, %c0_45] : memref<64x512xf32, #tpu.memory_space<vmem>>, vector<8x512xf32>
    %c0_46 = arith.constant 0 : index
    %c0_47 = arith.constant 0 : index
    %142 = vector.load %arg2[%c0_46, %c0_47] : memref<128x512xbf16, #tpu.memory_space<vmem>>, vector<128x512xbf16>
    %cst_48 = arith.constant dense<0.000000e+00> : vector<8x512xf32>
    %143 = tpu.matmul %114, %142, %cst_48 {dimension_numbers = #tpu.dot_dimension_numbers<[1], [0], [0], [1], [0, 0, 1, 1], [], []>} : vector<8x128xbf16>, vector<128x512xbf16>, vector<8x512xf32> -> vector<8x512xf32>
    %144 = arith.addf %141, %143 : vector<8x512xf32>
    %145 = vector.extract_strided_slice %144 {offsets = [0, 0], sizes = [8, 384], strides = [1, 1]} : vector<8x512xf32> to vector<8x384xf32>
    %146 = arith.negf %145 : vector<8x384xf32>
    %147 = math.exp %146 : vector<8x384xf32>
    %cst_49 = arith.constant 1.000000e+00 : f32
    %148 = vector.broadcast %cst_49 : f32 to vector<8x384xf32>
    %149 = arith.addf %148, %147 : vector<8x384xf32>
    %150 = arith.divf %148, %149 : vector<8x384xf32>
    %151 = vector.extract_strided_slice %144 {offsets = [0, 384], sizes = [8, 128], strides = [1, 1]} : vector<8x512xf32> to vector<8x128xf32>
    %152 = math.tanh %151 : vector<8x128xf32>
    %153 = vector.extract_strided_slice %150 {offsets = [0, 0], sizes = [8, 128], strides = [1, 1]} : vector<8x384xf32> to vector<8x128xf32>
    %154 = vector.extract_strided_slice %150 {offsets = [0, 128], sizes = [8, 128], strides = [1, 1]} : vector<8x384xf32> to vector<8x128xf32>
    %155 = vector.extract_strided_slice %150 {offsets = [0, 256], sizes = [8, 128], strides = [1, 1]} : vector<8x384xf32> to vector<8x128xf32>
    %156 = arith.mulf %154, %111 : vector<8x128xf32>
    %157 = arith.mulf %153, %152 : vector<8x128xf32>
    %158 = arith.addf %156, %157 : vector<8x128xf32>
    %159 = math.tanh %158 : vector<8x128xf32>
    %160 = arith.mulf %155, %159 : vector<8x128xf32>
    %161 = arith.truncf %160 : vector<8x128xf32> to vector<8x128xbf16>
    %c0_50 = arith.constant 0 : index
    %c0_51 = arith.constant 0 : index
    %162 = vector.load %arg4[%c0_50, %c0_51] : memref<128x512xbf16, #tpu.memory_space<vmem>>, vector<128x512xbf16>
    %cst_52 = arith.constant dense<0.000000e+00> : vector<8x512xf32>
    %163 = tpu.matmul %161, %162, %cst_52 {dimension_numbers = #tpu.dot_dimension_numbers<[1], [0], [0], [1], [0, 0, 1, 1], [], []>} : vector<8x128xbf16>, vector<128x512xbf16>, vector<8x512xf32> -> vector<8x512xf32>
    %164 = arith.addf %163, %139 : vector<8x512xf32>
    %165 = arith.addf %164, %9 : vector<8x512xf32>
    %166 = vector.extract_strided_slice %165 {offsets = [0, 0], sizes = [8, 384], strides = [1, 1]} : vector<8x512xf32> to vector<8x384xf32>
    %167 = arith.negf %166 : vector<8x384xf32>
    %168 = math.exp %167 : vector<8x384xf32>
    %cst_53 = arith.constant 1.000000e+00 : f32
    %169 = vector.broadcast %cst_53 : f32 to vector<8x384xf32>
    %170 = arith.addf %169, %168 : vector<8x384xf32>
    %171 = arith.divf %169, %170 : vector<8x384xf32>
    %172 = vector.extract_strided_slice %165 {offsets = [0, 384], sizes = [8, 128], strides = [1, 1]} : vector<8x512xf32> to vector<8x128xf32>
    %173 = math.tanh %172 : vector<8x128xf32>
    %174 = vector.extract_strided_slice %171 {offsets = [0, 0], sizes = [8, 128], strides = [1, 1]} : vector<8x384xf32> to vector<8x128xf32>
    %175 = vector.extract_strided_slice %171 {offsets = [0, 128], sizes = [8, 128], strides = [1, 1]} : vector<8x384xf32> to vector<8x128xf32>
    %176 = vector.extract_strided_slice %171 {offsets = [0, 256], sizes = [8, 128], strides = [1, 1]} : vector<8x384xf32> to vector<8x128xf32>
    %177 = arith.mulf %175, %132 : vector<8x128xf32>
    %178 = arith.mulf %174, %173 : vector<8x128xf32>
    %179 = arith.addf %177, %178 : vector<8x128xf32>
    %180 = math.tanh %179 : vector<8x128xf32>
    %181 = arith.mulf %176, %180 : vector<8x128xf32>
    %182 = arith.truncf %181 : vector<8x128xf32> to vector<8x128xbf16>
    %c4_i32 = arith.constant 4 : i32
    %c8_i32_54 = arith.constant 8 : i32
    %183 = arith.muli %c4_i32, %c8_i32_54 : i32
    %184 = tpu.assume_multiple %183, 8 : i32
    %c0_55 = arith.constant 0 : index
    %c0_56 = arith.constant 0 : index
    %185 = vector.load %arg5[%c0_55, %c0_56] : memref<128x512xbf16, #tpu.memory_space<vmem>>, vector<128x512xbf16>
    %cst_57 = arith.constant dense<0.000000e+00> : vector<8x512xf32>
    %186 = tpu.matmul %182, %185, %cst_57 {dimension_numbers = #tpu.dot_dimension_numbers<[1], [0], [0], [1], [0, 0, 1, 1], [], []>} : vector<8x128xbf16>, vector<128x512xbf16>, vector<8x512xf32> -> vector<8x512xf32>
    %187 = arith.index_cast %184 : i32 to index
    %c0_58 = arith.constant 0 : index
    %188 = vector.load %arg9[%187, %c0_58] : memref<64x512xf32, #tpu.memory_space<vmem>>, vector<8x512xf32>
    %c0_59 = arith.constant 0 : index
    %c0_60 = arith.constant 0 : index
    %189 = vector.load %arg2[%c0_59, %c0_60] : memref<128x512xbf16, #tpu.memory_space<vmem>>, vector<128x512xbf16>
    %cst_61 = arith.constant dense<0.000000e+00> : vector<8x512xf32>
    %190 = tpu.matmul %161, %189, %cst_61 {dimension_numbers = #tpu.dot_dimension_numbers<[1], [0], [0], [1], [0, 0, 1, 1], [], []>} : vector<8x128xbf16>, vector<128x512xbf16>, vector<8x512xf32> -> vector<8x512xf32>
    %191 = arith.addf %188, %190 : vector<8x512xf32>
    %192 = vector.extract_strided_slice %191 {offsets = [0, 0], sizes = [8, 384], strides = [1, 1]} : vector<8x512xf32> to vector<8x384xf32>
    %193 = arith.negf %192 : vector<8x384xf32>
    %194 = math.exp %193 : vector<8x384xf32>
    %cst_62 = arith.constant 1.000000e+00 : f32
    %195 = vector.broadcast %cst_62 : f32 to vector<8x384xf32>
    %196 = arith.addf %195, %194 : vector<8x384xf32>
    %197 = arith.divf %195, %196 : vector<8x384xf32>
    %198 = vector.extract_strided_slice %191 {offsets = [0, 384], sizes = [8, 128], strides = [1, 1]} : vector<8x512xf32> to vector<8x128xf32>
    %199 = math.tanh %198 : vector<8x128xf32>
    %200 = vector.extract_strided_slice %197 {offsets = [0, 0], sizes = [8, 128], strides = [1, 1]} : vector<8x384xf32> to vector<8x128xf32>
    %201 = vector.extract_strided_slice %197 {offsets = [0, 128], sizes = [8, 128], strides = [1, 1]} : vector<8x384xf32> to vector<8x128xf32>
    %202 = vector.extract_strided_slice %197 {offsets = [0, 256], sizes = [8, 128], strides = [1, 1]} : vector<8x384xf32> to vector<8x128xf32>
    %203 = arith.mulf %201, %158 : vector<8x128xf32>
    %204 = arith.mulf %200, %199 : vector<8x128xf32>
    %205 = arith.addf %203, %204 : vector<8x128xf32>
    %206 = math.tanh %205 : vector<8x128xf32>
    %207 = arith.mulf %202, %206 : vector<8x128xf32>
    %208 = arith.truncf %207 : vector<8x128xf32> to vector<8x128xbf16>
    %c0_63 = arith.constant 0 : index
    %c0_64 = arith.constant 0 : index
    %209 = vector.load %arg4[%c0_63, %c0_64] : memref<128x512xbf16, #tpu.memory_space<vmem>>, vector<128x512xbf16>
    %cst_65 = arith.constant dense<0.000000e+00> : vector<8x512xf32>
    %210 = tpu.matmul %208, %209, %cst_65 {dimension_numbers = #tpu.dot_dimension_numbers<[1], [0], [0], [1], [0, 0, 1, 1], [], []>} : vector<8x128xbf16>, vector<128x512xbf16>, vector<8x512xf32> -> vector<8x512xf32>
    %211 = arith.addf %210, %186 : vector<8x512xf32>
    %212 = arith.addf %211, %9 : vector<8x512xf32>
    %213 = vector.extract_strided_slice %212 {offsets = [0, 0], sizes = [8, 384], strides = [1, 1]} : vector<8x512xf32> to vector<8x384xf32>
    %214 = arith.negf %213 : vector<8x384xf32>
    %215 = math.exp %214 : vector<8x384xf32>
    %cst_66 = arith.constant 1.000000e+00 : f32
    %216 = vector.broadcast %cst_66 : f32 to vector<8x384xf32>
    %217 = arith.addf %216, %215 : vector<8x384xf32>
    %218 = arith.divf %216, %217 : vector<8x384xf32>
    %219 = vector.extract_strided_slice %212 {offsets = [0, 384], sizes = [8, 128], strides = [1, 1]} : vector<8x512xf32> to vector<8x128xf32>
    %220 = math.tanh %219 : vector<8x128xf32>
    %221 = vector.extract_strided_slice %218 {offsets = [0, 0], sizes = [8, 128], strides = [1, 1]} : vector<8x384xf32> to vector<8x128xf32>
    %222 = vector.extract_strided_slice %218 {offsets = [0, 128], sizes = [8, 128], strides = [1, 1]} : vector<8x384xf32> to vector<8x128xf32>
    %223 = vector.extract_strided_slice %218 {offsets = [0, 256], sizes = [8, 128], strides = [1, 1]} : vector<8x384xf32> to vector<8x128xf32>
    %224 = arith.mulf %222, %179 : vector<8x128xf32>
    %225 = arith.mulf %221, %220 : vector<8x128xf32>
    %226 = arith.addf %224, %225 : vector<8x128xf32>
    %227 = math.tanh %226 : vector<8x128xf32>
    %228 = arith.mulf %223, %227 : vector<8x128xf32>
    %229 = arith.truncf %228 : vector<8x128xf32> to vector<8x128xbf16>
    %c5_i32 = arith.constant 5 : i32
    %c8_i32_67 = arith.constant 8 : i32
    %230 = arith.muli %c5_i32, %c8_i32_67 : i32
    %231 = tpu.assume_multiple %230, 8 : i32
    %c0_68 = arith.constant 0 : index
    %c0_69 = arith.constant 0 : index
    %232 = vector.load %arg5[%c0_68, %c0_69] : memref<128x512xbf16, #tpu.memory_space<vmem>>, vector<128x512xbf16>
    %cst_70 = arith.constant dense<0.000000e+00> : vector<8x512xf32>
    %233 = tpu.matmul %229, %232, %cst_70 {dimension_numbers = #tpu.dot_dimension_numbers<[1], [0], [0], [1], [0, 0, 1, 1], [], []>} : vector<8x128xbf16>, vector<128x512xbf16>, vector<8x512xf32> -> vector<8x512xf32>
    %234 = arith.index_cast %231 : i32 to index
    %c0_71 = arith.constant 0 : index
    %235 = vector.load %arg9[%234, %c0_71] : memref<64x512xf32, #tpu.memory_space<vmem>>, vector<8x512xf32>
    %c0_72 = arith.constant 0 : index
    %c0_73 = arith.constant 0 : index
    %236 = vector.load %arg2[%c0_72, %c0_73] : memref<128x512xbf16, #tpu.memory_space<vmem>>, vector<128x512xbf16>
    %cst_74 = arith.constant dense<0.000000e+00> : vector<8x512xf32>
    %237 = tpu.matmul %208, %236, %cst_74 {dimension_numbers = #tpu.dot_dimension_numbers<[1], [0], [0], [1], [0, 0, 1, 1], [], []>} : vector<8x128xbf16>, vector<128x512xbf16>, vector<8x512xf32> -> vector<8x512xf32>
    %238 = arith.addf %235, %237 : vector<8x512xf32>
    %239 = vector.extract_strided_slice %238 {offsets = [0, 0], sizes = [8, 384], strides = [1, 1]} : vector<8x512xf32> to vector<8x384xf32>
    %240 = arith.negf %239 : vector<8x384xf32>
    %241 = math.exp %240 : vector<8x384xf32>
    %cst_75 = arith.constant 1.000000e+00 : f32
    %242 = vector.broadcast %cst_75 : f32 to vector<8x384xf32>
    %243 = arith.addf %242, %241 : vector<8x384xf32>
    %244 = arith.divf %242, %243 : vector<8x384xf32>
    %245 = vector.extract_strided_slice %238 {offsets = [0, 384], sizes = [8, 128], strides = [1, 1]} : vector<8x512xf32> to vector<8x128xf32>
    %246 = math.tanh %245 : vector<8x128xf32>
    %247 = vector.extract_strided_slice %244 {offsets = [0, 0], sizes = [8, 128], strides = [1, 1]} : vector<8x384xf32> to vector<8x128xf32>
    %248 = vector.extract_strided_slice %244 {offsets = [0, 128], sizes = [8, 128], strides = [1, 1]} : vector<8x384xf32> to vector<8x128xf32>
    %249 = vector.extract_strided_slice %244 {offsets = [0, 256], sizes = [8, 128], strides = [1, 1]} : vector<8x384xf32> to vector<8x128xf32>
    %250 = arith.mulf %248, %205 : vector<8x128xf32>
    %251 = arith.mulf %247, %246 : vector<8x128xf32>
    %252 = arith.addf %250, %251 : vector<8x128xf32>
    %253 = math.tanh %252 : vector<8x128xf32>
    %254 = arith.mulf %249, %253 : vector<8x128xf32>
    %255 = arith.truncf %254 : vector<8x128xf32> to vector<8x128xbf16>
    %c0_76 = arith.constant 0 : index
    %c0_77 = arith.constant 0 : index
    %256 = vector.load %arg4[%c0_76, %c0_77] : memref<128x512xbf16, #tpu.memory_space<vmem>>, vector<128x512xbf16>
    %cst_78 = arith.constant dense<0.000000e+00> : vector<8x512xf32>
    %257 = tpu.matmul %255, %256, %cst_78 {dimension_numbers = #tpu.dot_dimension_numbers<[1], [0], [0], [1], [0, 0, 1, 1], [], []>} : vector<8x128xbf16>, vector<128x512xbf16>, vector<8x512xf32> -> vector<8x512xf32>
    %258 = arith.addf %257, %233 : vector<8x512xf32>
    %259 = arith.addf %258, %9 : vector<8x512xf32>
    %260 = vector.extract_strided_slice %259 {offsets = [0, 0], sizes = [8, 384], strides = [1, 1]} : vector<8x512xf32> to vector<8x384xf32>
    %261 = arith.negf %260 : vector<8x384xf32>
    %262 = math.exp %261 : vector<8x384xf32>
    %cst_79 = arith.constant 1.000000e+00 : f32
    %263 = vector.broadcast %cst_79 : f32 to vector<8x384xf32>
    %264 = arith.addf %263, %262 : vector<8x384xf32>
    %265 = arith.divf %263, %264 : vector<8x384xf32>
    %266 = vector.extract_strided_slice %259 {offsets = [0, 384], sizes = [8, 128], strides = [1, 1]} : vector<8x512xf32> to vector<8x128xf32>
    %267 = math.tanh %266 : vector<8x128xf32>
    %268 = vector.extract_strided_slice %265 {offsets = [0, 0], sizes = [8, 128], strides = [1, 1]} : vector<8x384xf32> to vector<8x128xf32>
    %269 = vector.extract_strided_slice %265 {offsets = [0, 128], sizes = [8, 128], strides = [1, 1]} : vector<8x384xf32> to vector<8x128xf32>
    %270 = vector.extract_strided_slice %265 {offsets = [0, 256], sizes = [8, 128], strides = [1, 1]} : vector<8x384xf32> to vector<8x128xf32>
    %271 = arith.mulf %269, %226 : vector<8x128xf32>
    %272 = arith.mulf %268, %267 : vector<8x128xf32>
    %273 = arith.addf %271, %272 : vector<8x128xf32>
    %274 = math.tanh %273 : vector<8x128xf32>
    %275 = arith.mulf %270, %274 : vector<8x128xf32>
    %276 = arith.truncf %275 : vector<8x128xf32> to vector<8x128xbf16>
    %c6_i32 = arith.constant 6 : i32
    %c8_i32_80 = arith.constant 8 : i32
    %277 = arith.muli %c6_i32, %c8_i32_80 : i32
    %278 = tpu.assume_multiple %277, 8 : i32
    %c0_81 = arith.constant 0 : index
    %c0_82 = arith.constant 0 : index
    %279 = vector.load %arg5[%c0_81, %c0_82] : memref<128x512xbf16, #tpu.memory_space<vmem>>, vector<128x512xbf16>
    %cst_83 = arith.constant dense<0.000000e+00> : vector<8x512xf32>
    %280 = tpu.matmul %276, %279, %cst_83 {dimension_numbers = #tpu.dot_dimension_numbers<[1], [0], [0], [1], [0, 0, 1, 1], [], []>} : vector<8x128xbf16>, vector<128x512xbf16>, vector<8x512xf32> -> vector<8x512xf32>
    %281 = arith.index_cast %278 : i32 to index
    %c0_84 = arith.constant 0 : index
    %282 = vector.load %arg9[%281, %c0_84] : memref<64x512xf32, #tpu.memory_space<vmem>>, vector<8x512xf32>
    %c0_85 = arith.constant 0 : index
    %c0_86 = arith.constant 0 : index
    %283 = vector.load %arg2[%c0_85, %c0_86] : memref<128x512xbf16, #tpu.memory_space<vmem>>, vector<128x512xbf16>
    %cst_87 = arith.constant dense<0.000000e+00> : vector<8x512xf32>
    %284 = tpu.matmul %255, %283, %cst_87 {dimension_numbers = #tpu.dot_dimension_numbers<[1], [0], [0], [1], [0, 0, 1, 1], [], []>} : vector<8x128xbf16>, vector<128x512xbf16>, vector<8x512xf32> -> vector<8x512xf32>
    %285 = arith.addf %282, %284 : vector<8x512xf32>
    %286 = vector.extract_strided_slice %285 {offsets = [0, 0], sizes = [8, 384], strides = [1, 1]} : vector<8x512xf32> to vector<8x384xf32>
    %287 = arith.negf %286 : vector<8x384xf32>
    %288 = math.exp %287 : vector<8x384xf32>
    %cst_88 = arith.constant 1.000000e+00 : f32
    %289 = vector.broadcast %cst_88 : f32 to vector<8x384xf32>
    %290 = arith.addf %289, %288 : vector<8x384xf32>
    %291 = arith.divf %289, %290 : vector<8x384xf32>
    %292 = vector.extract_strided_slice %285 {offsets = [0, 384], sizes = [8, 128], strides = [1, 1]} : vector<8x512xf32> to vector<8x128xf32>
    %293 = math.tanh %292 : vector<8x128xf32>
    %294 = vector.extract_strided_slice %291 {offsets = [0, 0], sizes = [8, 128], strides = [1, 1]} : vector<8x384xf32> to vector<8x128xf32>
    %295 = vector.extract_strided_slice %291 {offsets = [0, 128], sizes = [8, 128], strides = [1, 1]} : vector<8x384xf32> to vector<8x128xf32>
    %296 = vector.extract_strided_slice %291 {offsets = [0, 256], sizes = [8, 128], strides = [1, 1]} : vector<8x384xf32> to vector<8x128xf32>
    %297 = arith.mulf %295, %252 : vector<8x128xf32>
    %298 = arith.mulf %294, %293 : vector<8x128xf32>
    %299 = arith.addf %297, %298 : vector<8x128xf32>
    %300 = math.tanh %299 : vector<8x128xf32>
    %301 = arith.mulf %296, %300 : vector<8x128xf32>
    %302 = arith.truncf %301 : vector<8x128xf32> to vector<8x128xbf16>
    %c0_89 = arith.constant 0 : index
    %c0_90 = arith.constant 0 : index
    %303 = vector.load %arg4[%c0_89, %c0_90] : memref<128x512xbf16, #tpu.memory_space<vmem>>, vector<128x512xbf16>
    %cst_91 = arith.constant dense<0.000000e+00> : vector<8x512xf32>
    %304 = tpu.matmul %302, %303, %cst_91 {dimension_numbers = #tpu.dot_dimension_numbers<[1], [0], [0], [1], [0, 0, 1, 1], [], []>} : vector<8x128xbf16>, vector<128x512xbf16>, vector<8x512xf32> -> vector<8x512xf32>
    %305 = arith.addf %304, %280 : vector<8x512xf32>
    %306 = arith.addf %305, %9 : vector<8x512xf32>
    %307 = vector.extract_strided_slice %306 {offsets = [0, 0], sizes = [8, 384], strides = [1, 1]} : vector<8x512xf32> to vector<8x384xf32>
    %308 = arith.negf %307 : vector<8x384xf32>
    %309 = math.exp %308 : vector<8x384xf32>
    %cst_92 = arith.constant 1.000000e+00 : f32
    %310 = vector.broadcast %cst_92 : f32 to vector<8x384xf32>
    %311 = arith.addf %310, %309 : vector<8x384xf32>
    %312 = arith.divf %310, %311 : vector<8x384xf32>
    %313 = vector.extract_strided_slice %306 {offsets = [0, 384], sizes = [8, 128], strides = [1, 1]} : vector<8x512xf32> to vector<8x128xf32>
    %314 = math.tanh %313 : vector<8x128xf32>
    %315 = vector.extract_strided_slice %312 {offsets = [0, 0], sizes = [8, 128], strides = [1, 1]} : vector<8x384xf32> to vector<8x128xf32>
    %316 = vector.extract_strided_slice %312 {offsets = [0, 128], sizes = [8, 128], strides = [1, 1]} : vector<8x384xf32> to vector<8x128xf32>
    %317 = vector.extract_strided_slice %312 {offsets = [0, 256], sizes = [8, 128], strides = [1, 1]} : vector<8x384xf32> to vector<8x128xf32>
    %318 = arith.mulf %316, %273 : vector<8x128xf32>
    %319 = arith.mulf %315, %314 : vector<8x128xf32>
    %320 = arith.addf %318, %319 : vector<8x128xf32>
    %321 = math.tanh %320 : vector<8x128xf32>
    %322 = arith.mulf %317, %321 : vector<8x128xf32>
    %323 = arith.truncf %322 : vector<8x128xf32> to vector<8x128xbf16>
    %c7_i32 = arith.constant 7 : i32
    %c8_i32_93 = arith.constant 8 : i32
    %324 = arith.muli %c7_i32, %c8_i32_93 : i32
    %325 = tpu.assume_multiple %324, 8 : i32
    %c0_94 = arith.constant 0 : index
    %c0_95 = arith.constant 0 : index
    %326 = vector.load %arg5[%c0_94, %c0_95] : memref<128x512xbf16, #tpu.memory_space<vmem>>, vector<128x512xbf16>
    %cst_96 = arith.constant dense<0.000000e+00> : vector<8x512xf32>
    %327 = tpu.matmul %323, %326, %cst_96 {dimension_numbers = #tpu.dot_dimension_numbers<[1], [0], [0], [1], [0, 0, 1, 1], [], []>} : vector<8x128xbf16>, vector<128x512xbf16>, vector<8x512xf32> -> vector<8x512xf32>
    %328 = arith.index_cast %325 : i32 to index
    %c0_97 = arith.constant 0 : index
    %329 = vector.load %arg9[%328, %c0_97] : memref<64x512xf32, #tpu.memory_space<vmem>>, vector<8x512xf32>
    %c0_98 = arith.constant 0 : index
    %c0_99 = arith.constant 0 : index
    %330 = vector.load %arg2[%c0_98, %c0_99] : memref<128x512xbf16, #tpu.memory_space<vmem>>, vector<128x512xbf16>
    %cst_100 = arith.constant dense<0.000000e+00> : vector<8x512xf32>
    %331 = tpu.matmul %302, %330, %cst_100 {dimension_numbers = #tpu.dot_dimension_numbers<[1], [0], [0], [1], [0, 0, 1, 1], [], []>} : vector<8x128xbf16>, vector<128x512xbf16>, vector<8x512xf32> -> vector<8x512xf32>
    %332 = arith.addf %329, %331 : vector<8x512xf32>
    %333 = vector.extract_strided_slice %332 {offsets = [0, 0], sizes = [8, 384], strides = [1, 1]} : vector<8x512xf32> to vector<8x384xf32>
    %334 = arith.negf %333 : vector<8x384xf32>
    %335 = math.exp %334 : vector<8x384xf32>
    %cst_101 = arith.constant 1.000000e+00 : f32
    %336 = vector.broadcast %cst_101 : f32 to vector<8x384xf32>
    %337 = arith.addf %336, %335 : vector<8x384xf32>
    %338 = arith.divf %336, %337 : vector<8x384xf32>
    %339 = vector.extract_strided_slice %332 {offsets = [0, 384], sizes = [8, 128], strides = [1, 1]} : vector<8x512xf32> to vector<8x128xf32>
    %340 = math.tanh %339 : vector<8x128xf32>
    %341 = vector.extract_strided_slice %338 {offsets = [0, 0], sizes = [8, 128], strides = [1, 1]} : vector<8x384xf32> to vector<8x128xf32>
    %342 = vector.extract_strided_slice %338 {offsets = [0, 128], sizes = [8, 128], strides = [1, 1]} : vector<8x384xf32> to vector<8x128xf32>
    %343 = vector.extract_strided_slice %338 {offsets = [0, 256], sizes = [8, 128], strides = [1, 1]} : vector<8x384xf32> to vector<8x128xf32>
    %344 = arith.mulf %342, %299 : vector<8x128xf32>
    %345 = arith.mulf %341, %340 : vector<8x128xf32>
    %346 = arith.addf %344, %345 : vector<8x128xf32>
    %347 = math.tanh %346 : vector<8x128xf32>
    %348 = arith.mulf %343, %347 : vector<8x128xf32>
    %349 = arith.truncf %348 : vector<8x128xf32> to vector<8x128xbf16>
    %c0_102 = arith.constant 0 : index
    %c0_103 = arith.constant 0 : index
    %350 = vector.load %arg4[%c0_102, %c0_103] : memref<128x512xbf16, #tpu.memory_space<vmem>>, vector<128x512xbf16>
    %cst_104 = arith.constant dense<0.000000e+00> : vector<8x512xf32>
    %351 = tpu.matmul %349, %350, %cst_104 {dimension_numbers = #tpu.dot_dimension_numbers<[1], [0], [0], [1], [0, 0, 1, 1], [], []>} : vector<8x128xbf16>, vector<128x512xbf16>, vector<8x512xf32> -> vector<8x512xf32>
    %352 = arith.addf %351, %327 : vector<8x512xf32>
    %353 = arith.addf %352, %9 : vector<8x512xf32>
    %354 = vector.extract_strided_slice %353 {offsets = [0, 0], sizes = [8, 384], strides = [1, 1]} : vector<8x512xf32> to vector<8x384xf32>
    %355 = arith.negf %354 : vector<8x384xf32>
    %356 = math.exp %355 : vector<8x384xf32>
    %cst_105 = arith.constant 1.000000e+00 : f32
    %357 = vector.broadcast %cst_105 : f32 to vector<8x384xf32>
    %358 = arith.addf %357, %356 : vector<8x384xf32>
    %359 = arith.divf %357, %358 : vector<8x384xf32>
    %360 = vector.extract_strided_slice %353 {offsets = [0, 384], sizes = [8, 128], strides = [1, 1]} : vector<8x512xf32> to vector<8x128xf32>
    %361 = math.tanh %360 : vector<8x128xf32>
    %362 = vector.extract_strided_slice %359 {offsets = [0, 0], sizes = [8, 128], strides = [1, 1]} : vector<8x384xf32> to vector<8x128xf32>
    %363 = vector.extract_strided_slice %359 {offsets = [0, 128], sizes = [8, 128], strides = [1, 1]} : vector<8x384xf32> to vector<8x128xf32>
    %364 = vector.extract_strided_slice %359 {offsets = [0, 256], sizes = [8, 128], strides = [1, 1]} : vector<8x384xf32> to vector<8x128xf32>
    %365 = arith.mulf %363, %320 : vector<8x128xf32>
    %366 = arith.mulf %362, %361 : vector<8x128xf32>
    %367 = arith.addf %365, %366 : vector<8x128xf32>
    %368 = math.tanh %367 : vector<8x128xf32>
    %369 = arith.mulf %364, %368 : vector<8x128xf32>
    %370 = arith.truncf %369 : vector<8x128xf32> to vector<8x128xbf16>
    %c7_i32_106 = arith.constant 7 : i32
    %c0_107 = arith.constant 0 : index
    %c0_108 = arith.constant 0 : index
    %371 = vector.load %arg7[%c0_107, %c0_108] : memref<128x128xbf16, #tpu.memory_space<vmem>>, vector<128x128xbf16>
    %cst_109 = arith.constant dense<0.000000e+00> : vector<8x128xf32>
    %372 = tpu.matmul %370, %371, %cst_109 {dimension_numbers = #tpu.dot_dimension_numbers<[1], [0], [0], [1], [0, 0, 1, 1], [], []>} : vector<8x128xbf16>, vector<128x128xbf16>, vector<8x128xf32> -> vector<8x128xf32>
    %c0_110 = arith.constant 0 : index
    %c0_111 = arith.constant 0 : index
    %373 = vector.load %arg8[%c0_110, %c0_111] : memref<8x128xf32, #tpu.memory_space<vmem>>, vector<8x128xf32>
    tpu.vector_store %arg8[%c0_110, %c0_111], %372 {strides = array<i32>} : memref<8x128xf32, #tpu.memory_space<vmem>>, vector<8x128xf32>,
    return
  }
}

</mosaic_0001>

<llo_original>
// kernel: lstm_forward.1
$region0: #{lstm_forward.1}
  #allocation0 [shape = 'u32[]', space=smem, size = 0x4, offset = 0x4, fixed_abs, tag = 'smem constant byte address 0x4 - core index']
  #allocation1 [shape = 'u32[144,128]{1,0:T(1,128)}', space=vmem, size = 0x12000, scoped, tag = 'internal scratch']
  #allocation2 [shape = 'f32[64,512]{1,0:T(8,128)}', space=vmem, size = 0x20000, scoped, tag = 'scratch operand']
  %s0 = inlined_call_operand.vmem [shape: bf16[64,128], index: 0, kind: input, shape index: {}]
  %s1 = inlined_call_operand.vmem [shape: bf16[128,512], index: 1, kind: input, shape index: {}]
  %s2 = inlined_call_operand.vmem [shape: bf16[128,512], index: 2, kind: input, shape index: {}]
  %s3 = inlined_call_operand.vmem [shape: f32[1,512], index: 3, kind: input, shape index: {}]
  %s4 = inlined_call_operand.vmem [shape: bf16[128,512], index: 4, kind: input, shape index: {}]
  %s5 = inlined_call_operand.vmem [shape: bf16[128,512], index: 5, kind: input, shape index: {}]
  %s6 = inlined_call_operand.vmem [shape: f32[1,512], index: 6, kind: input, shape index: {}]
  %s7 = inlined_call_operand.vmem [shape: bf16[128,128], index: 7, kind: input, shape index: {}]
  %s8 = inlined_call_operand.vmem [shape: f32[8,128], index: 8, kind: output, shape index: {}]
  %s9 = sld [smem:[#allocation0]]
  $region42: #{lstm_forward.1} parent=0
    _
  %s11 = ssub.s32 1, %s9
  %s12 = scalar_select 0, %s11, %s9
  // Predicated region
  $region2: #{lstm_forward.1} parent=0 // pred_check
    _
  $region3: #{lstm_forward.1} parent=0 // pred_check_branch
    %14 = sbr.rel (0) target = $region5
  $region4: #{lstm_forward.1} parent=0 // pred_region
    _
  $region5: #{lstm_forward.1} parent=0 // pred_fallthru
    _
  // Predicated region
  $region6: #{lstm_forward.1} parent=0 // pred_check
    _
  $region7: #{lstm_forward.1} parent=0 // pred_check_branch
    %16 = sbr.rel (0) target = $region9
  $region8: #{lstm_forward.1} parent=0 // pred_region
    _
  $region9: #{lstm_forward.1} parent=0 // pred_fallthru
    _
  // Predicated region
  $region10: #{lstm_forward.1} parent=0 // pred_check
    _
  $region11: #{lstm_forward.1} parent=0 // pred_check_branch
    %18 = sbr.rel (0) target = $region13
  $region12: #{lstm_forward.1} parent=0 // pred_region
    _
  $region13: #{lstm_forward.1} parent=0 // pred_fallthru
    _
  // Predicated region
  $region14: #{lstm_forward.1} parent=0 // pred_check
    _
  $region15: #{lstm_forward.1} parent=0 // pred_check_branch
    %20 = sbr.rel (0) target = $region17
  $region16: #{lstm_forward.1} parent=0 // pred_region
    _
  $region17: #{lstm_forward.1} parent=0 // pred_fallthru
    _
  // Predicated region
  $region18: #{lstm_forward.1} parent=0 // pred_check
    _
  $region19: #{lstm_forward.1} parent=0 // pred_check_branch
    %22 = sbr.rel (0) target = $region21
  $region20: #{lstm_forward.1} parent=0 // pred_region
    _
  $region21: #{lstm_forward.1} parent=0 // pred_fallthru
    _
  // Predicated region
  $region22: #{lstm_forward.1} parent=0 // pred_check
    _
  $region23: #{lstm_forward.1} parent=0 // pred_check_branch
    %24 = sbr.rel (0) target = $region25
  $region24: #{lstm_forward.1} parent=0 // pred_region
    _
  $region25: #{lstm_forward.1} parent=0 // pred_fallthru
    _
  // Predicated region
  $region26: #{lstm_forward.1} parent=0 // pred_check
    _
  $region27: #{lstm_forward.1} parent=0 // pred_check_branch
    %26 = sbr.rel (0) target = $region29
  $region28: #{lstm_forward.1} parent=0 // pred_region
    _
  $region29: #{lstm_forward.1} parent=0 // pred_fallthru
    _
  // Predicated region
  $region30: #{lstm_forward.1} parent=0 // pred_check
    _
  $region31: #{lstm_forward.1} parent=0 // pred_check_branch
    %28 = sbr.rel (0) target = $region33
  $region32: #{lstm_forward.1} parent=0 // pred_region
    _
  $region33: #{lstm_forward.1} parent=0 // pred_fallthru
    _
  %v30 = vld [vmem:[%s0] sm:$0xf]
  %v31 = vld [vmem:[%s0 + $0x4] sm:$0xf]
  %v32 = vld [vmem:[%s0 + $0x8] sm:$0xf]
  %v33 = vld [vmem:[%s0 + $0xc] sm:$0xf]
  %v34 = vld [vmem:[%s0 + $0x10] sm:$0xf]
  %v35 = vld [vmem:[%s0 + $0x14] sm:$0xf]
  %v36 = vld [vmem:[%s0 + $0x18] sm:$0xf]
  %v37 = vld [vmem:[%s0 + $0x1c] sm:$0xf]
  %v38 = vld [vmem:[%s1] sm:$0xff]
  %v39 = vld [vmem:[%s1 + $0x8] sm:$0xff]
  %v40 = vld [vmem:[%s1 + $0x10] sm:$0xff]
  %v41 = vld [vmem:[%s1 + $0x18] sm:$0xff]
  %v42 = vld [vmem:[%s1 + $0x20] sm:$0xff]
  %v43 = vld [vmem:[%s1 + $0x28] sm:$0xff]
  %v44 = vld [vmem:[%s1 + $0x30] sm:$0xff]
  %v45 = vld [vmem:[%s1 + $0x38] sm:$0xff]
  %v46 = vld [vmem:[%s1 + $0x40] sm:$0xff]
  %v47 = vld [vmem:[%s1 + $0x48] sm:$0xff]
  %v48 = vld [vmem:[%s1 + $0x50] sm:$0xff]
  %v49 = vld [vmem:[%s1 + $0x58] sm:$0xff]
  %v50 = vld [vmem:[%s1 + $0x60] sm:$0xff]
  %v51 = vld [vmem:[%s1 + $0x68] sm:$0xff]
  %v52 = vld [vmem:[%s1 + $0x70] sm:$0xff]
  %v53 = vld [vmem:[%s1 + $0x78] sm:$0xff]
  %v54 = vld [vmem:[%s1 + $0x80] sm:$0xff]
  %v55 = vld [vmem:[%s1 + $0x88] sm:$0xff]
  %v56 = vld [vmem:[%s1 + $0x90] sm:$0xff]
  %v57 = vld [vmem:[%s1 + $0x98] sm:$0xff]
  %v58 = vld [vmem:[%s1 + $0xa0] sm:$0xff]
  %v59 = vld [vmem:[%s1 + $0xa8] sm:$0xff]
  %v60 = vld [vmem:[%s1 + $0xb0] sm:$0xff]
  %v61 = vld [vmem:[%s1 + $0xb8] sm:$0xff]
  %v62 = vld [vmem:[%s1 + $0xc0] sm:$0xff]
  %v63 = vld [vmem:[%s1 + $0xc8] sm:$0xff]
  %v64 = vld [vmem:[%s1 + $0xd0] sm:$0xff]
  %v65 = vld [vmem:[%s1 + $0xd8] sm:$0xff]
  %v66 = vld [vmem:[%s1 + $0xe0] sm:$0xff]
  %v67 = vld [vmem:[%s1 + $0xe8] sm:$0xff]
  %v68 = vld [vmem:[%s1 + $0xf0] sm:$0xff]
  %v69 = vld [vmem:[%s1 + $0xf8] sm:$0xff]
  %v70 = vld [vmem:[%s3] sm:$0xf]
  %v72 = vlaneseq
  %v73 = vshrl.u32 %v72, 7
  %v74 = vsub.s32 0, %v73
  %v75 = vrot.slane %v70, %v74
  %v76 = vlaneseq
  %v77 = vshrl.u32 %v76, 7
  %v78 = vsub.s32 1, %v77
  %v79 = vrot.slane %v70, %v78
  %v80 = vlaneseq
  %v81 = vshrl.u32 %v80, 7
  %v82 = vsub.s32 2, %v81
  %v83 = vrot.slane %v70, %v82
  %v84 = vlaneseq
  %v85 = vshrl.u32 %v84, 7
  %v86 = vsub.s32 3, %v85
  %v87 = vrot.slane %v70, %v86
  %v100 = vunpack.c.l.b16 %v30
  %v101 = vunpack.c.l.b16 %v31
  %v102 = vunpack.c.l.b16 %v32
  %v103 = vunpack.c.l.b16 %v33
  %v104 = vunpack.c.l.b16 %v34
  %v105 = vunpack.c.l.b16 %v35
  %v106 = vunpack.c.l.b16 %v36
  %v107 = vunpack.c.l.b16 %v37
  %v108 = vpack.c.b16 %v101, %v100
  %v109 = vpack.c.b16 %v103, %v102
  %v110 = vpack.c.b16 %v105, %v104
  %v111 = vpack.c.b16 %v107, %v106
  %v148 = vunpack.c.l.b16 %v38
  %v149 = vunpack.c.h.b16 %v38
  %v150 = vunpack.c.l.b16 %v39
  %v151 = vunpack.c.h.b16 %v39
  %v152 = vunpack.c.l.b16 %v40
  %v153 = vunpack.c.h.b16 %v40
  %v154 = vunpack.c.l.b16 %v41
  %v155 = vunpack.c.h.b16 %v41
  %v156 = vunpack.c.l.b16 %v42
  %v157 = vunpack.c.h.b16 %v42
  %v158 = vunpack.c.l.b16 %v43
  %v159 = vunpack.c.h.b16 %v43
  %v160 = vunpack.c.l.b16 %v44
  %v161 = vunpack.c.h.b16 %v44
  %v162 = vunpack.c.l.b16 %v45
  %v163 = vunpack.c.h.b16 %v45
  %v164 = vunpack.c.l.b16 %v46
  %v165 = vunpack.c.h.b16 %v46
  %v166 = vunpack.c.l.b16 %v47
  %v167 = vunpack.c.h.b16 %v47
  %v168 = vunpack.c.l.b16 %v48
  %v169 = vunpack.c.h.b16 %v48
  %v170 = vunpack.c.l.b16 %v49
  %v171 = vunpack.c.h.b16 %v49
  %v172 = vunpack.c.l.b16 %v50
  %v173 = vunpack.c.h.b16 %v50
  %v174 = vunpack.c.l.b16 %v51
  %v175 = vunpack.c.h.b16 %v51
  %v176 = vunpack.c.l.b16 %v52
  %v177 = vunpack.c.h.b16 %v52
  %v178 = vunpack.c.l.b16 %v53
  %v179 = vunpack.c.h.b16 %v53
  %v180 = vunpack.c.l.b16 %v54
  %v181 = vunpack.c.h.b16 %v54
  %v182 = vunpack.c.l.b16 %v55
  %v183 = vunpack.c.h.b16 %v55
  %v184 = vunpack.c.l.b16 %v56
  %v185 = vunpack.c.h.b16 %v56
  %v186 = vunpack.c.l.b16 %v57
  %v187 = vunpack.c.h.b16 %v57
  %v188 = vunpack.c.l.b16 %v58
  %v189 = vunpack.c.h.b16 %v58
  %v190 = vunpack.c.l.b16 %v59
  %v191 = vunpack.c.h.b16 %v59
  %v192 = vunpack.c.l.b16 %v60
  %v193 = vunpack.c.h.b16 %v60
  %v194 = vunpack.c.l.b16 %v61
  %v195 = vunpack.c.h.b16 %v61
  %v196 = vunpack.c.l.b16 %v62
  %v197 = vunpack.c.h.b16 %v62
  %v198 = vunpack.c.l.b16 %v63
  %v199 = vunpack.c.h.b16 %v63
  %v200 = vunpack.c.l.b16 %v64
  %v201 = vunpack.c.h.b16 %v64
  %v202 = vunpack.c.l.b16 %v65
  %v203 = vunpack.c.h.b16 %v65
  %v204 = vunpack.c.l.b16 %v66
  %v205 = vunpack.c.h.b16 %v66
  %v206 = vunpack.c.l.b16 %v67
  %v207 = vunpack.c.h.b16 %v67
  %v208 = vunpack.c.l.b16 %v68
  %v209 = vunpack.c.h.b16 %v68
  %v210 = vunpack.c.l.b16 %v69
  %v211 = vunpack.c.h.b16 %v69
  %v212 = vpack.c.b16 %v152, %v148
  %v213 = vpack.c.b16 %v153, %v149
  %v214 = vpack.c.b16 %v154, %v150
  %v215 = vpack.c.b16 %v155, %v151
  %v216 = vpack.c.b16 %v160, %v156
  %v217 = vpack.c.b16 %v161, %v157
  %v218 = vpack.c.b16 %v162, %v158
  %v219 = vpack.c.b16 %v163, %v159
  %v220 = vpack.c.b16 %v168, %v164
  %v221 = vpack.c.b16 %v169, %v165
  %v222 = vpack.c.b16 %v170, %v166
  %v223 = vpack.c.b16 %v171, %v167
  %v224 = vpack.c.b16 %v176, %v172
  %v225 = vpack.c.b16 %v177, %v173
  %v226 = vpack.c.b16 %v178, %v174
  %v227 = vpack.c.b16 %v179, %v175
  %v228 = vpack.c.b16 %v184, %v180
  %v229 = vpack.c.b16 %v185, %v181
  %v230 = vpack.c.b16 %v186, %v182
  %v231 = vpack.c.b16 %v187, %v183
  %v232 = vpack.c.b16 %v192, %v188
  %v233 = vpack.c.b16 %v193, %v189
  %v234 = vpack.c.b16 %v194, %v190
  %v235 = vpack.c.b16 %v195, %v191
  %v236 = vpack.c.b16 %v200, %v196
  %v237 = vpack.c.b16 %v201, %v197
  %v238 = vpack.c.b16 %v202, %v198
  %v239 = vpack.c.b16 %v203, %v199
  %v240 = vpack.c.b16 %v208, %v204
  %v241 = vpack.c.b16 %v209, %v205
  %v242 = vpack.c.b16 %v210, %v206
  %v243 = vpack.c.b16 %v211, %v207
  %276 = vmatprep.subr.bf16.mxu0 %v213
  %277 = vmatpush1.bf16.msra.mxu0 %v212
  %278 = vmatprep.subr.bf16.mxu0 %v217
  %279 = vmatpush1.bf16.msra.mxu0 %v216
  %280 = vmatprep.subr.bf16.mxu0 %v221
  %281 = vmatpush1.bf16.msra.mxu0 %v220
  %282 = vmatprep.subr.bf16.mxu0 %v225
  %283 = vmatpush1.bf16.msra.mxu0 %v224
  %284 = vmatprep.subr.bf16.mxu0 %v229
  %285 = vmatpush1.bf16.msra.mxu0 %v228
  %286 = vmatprep.subr.bf16.mxu0 %v233
  %287 = vmatpush1.bf16.msra.mxu0 %v232
  %288 = vmatprep.subr.bf16.mxu0 %v237
  %289 = vmatpush1.bf16.msra.mxu0 %v236
  %290 = vmatprep.subr.bf16.mxu0 %v241
  %291 = vmatpush1.bf16.msra.mxu0 %v240
  %292 = vmatprep.subr.bf16.mxu0 0
  %293 = vmatpush1.bf16.msra.mxu0 0
  %294 = vmatprep.subr.bf16.mxu0 0
  %295 = vmatpush1.bf16.msra.mxu0 0
  %296 = vmatprep.subr.bf16.mxu0 0
  %297 = vmatpush1.bf16.msra.mxu0 0
  %298 = vmatprep.subr.bf16.mxu0 0
  %299 = vmatpush1.bf16.msra.mxu0 0
  %300 = vmatprep.subr.bf16.mxu0 0
  %301 = vmatpush1.bf16.msra.mxu0 0
  %302 = vmatprep.subr.bf16.mxu0 0
  %303 = vmatpush1.bf16.msra.mxu0 0
  %304 = vmatprep.subr.bf16.mxu0 0
  %305 = vmatpush1.bf16.msra.mxu0 0
  %306 = vmatprep.subr.bf16.mxu0 0
  %307 = vmatpush1.bf16.msra.mxu0 0
  %308 = vmatprep.mubr.bf16.mxu0 0
  %309 = vmatmul.mubr.bf16.gmra.mrb[0].mxu0 %v108
  %v310 = vpop.f32.mrb[0].mxu0
  %v311 = vadd.f32 %v75, %v310
  %v312 = vpop.f32.mrb[0].mxu0
  %v313 = vadd.f32 %v79, %v312
  %v314 = vpop.f32.mrb[0].mxu0
  %v315 = vadd.f32 %v75, %v314
  %v316 = vpop.f32.mrb[0].mxu0
  %v317 = vadd.f32 %v79, %v316
  %318 = vmatprep.mubr.bf16.mxu0 0
  %319 = vmatmul.mubr.bf16.gmra.mrb[0].mxu0 %v109
  %v320 = vpop.f32.mrb[0].mxu0
  %v321 = vadd.f32 %v75, %v320
  %v322 = vpop.f32.mrb[0].mxu0
  %v323 = vadd.f32 %v79, %v322
  %v324 = vpop.f32.mrb[0].mxu0
  %v325 = vadd.f32 %v75, %v324
  %v326 = vpop.f32.mrb[0].mxu0
  %v327 = vadd.f32 %v79, %v326
  %328 = vmatprep.mubr.bf16.mxu0 0
  %329 = vmatmul.mubr.bf16.gmra.mrb[0].mxu0 %v110
  %v330 = vpop.f32.mrb[0].mxu0
  %v331 = vadd.f32 %v75, %v330
  %v332 = vpop.f32.mrb[0].mxu0
  %v333 = vadd.f32 %v79, %v332
  %v334 = vpop.f32.mrb[0].mxu0
  %v335 = vadd.f32 %v75, %v334
  %v336 = vpop.f32.mrb[0].mxu0
  %v337 = vadd.f32 %v79, %v336
  %338 = vmatprep.mubr.bf16.mxu0 0
  %339 = vmatmul.mubr.bf16.gmra.mrb[0].mxu0 %v111
  %v340 = vpop.f32.mrb[0].mxu0
  %v341 = vadd.f32 %v75, %v340
  %v342 = vpop.f32.mrb[0].mxu0
  %v343 = vadd.f32 %v79, %v342
  %v344 = vpop.f32.mrb[0].mxu0
  %v345 = vadd.f32 %v75, %v344
  %v346 = vpop.f32.mrb[0].mxu0
  %v347 = vadd.f32 %v79, %v346
  %348 = vdwg.mxu0
  %349 = vmatprep.subr.bf16.mxu0 %v215
  %350 = vmatpush1.bf16.msra.mxu0 %v214
  %351 = vmatprep.subr.bf16.mxu0 %v219
  %352 = vmatpush1.bf16.msra.mxu0 %v218
  %353 = vmatprep.subr.bf16.mxu0 %v223
  %354 = vmatpush1.bf16.msra.mxu0 %v222
  %355 = vmatprep.subr.bf16.mxu0 %v227
  %356 = vmatpush1.bf16.msra.mxu0 %v226
  %357 = vmatprep.subr.bf16.mxu0 %v231
  %358 = vmatpush1.bf16.msra.mxu0 %v230
  %359 = vmatprep.subr.bf16.mxu0 %v235
  %360 = vmatpush1.bf16.msra.mxu0 %v234
  %361 = vmatprep.subr.bf16.mxu0 %v239
  %362 = vmatpush1.bf16.msra.mxu0 %v238
  %363 = vmatprep.subr.bf16.mxu0 %v243
  %364 = vmatpush1.bf16.msra.mxu0 %v242
  %365 = vmatprep.subr.bf16.mxu0 0
  %366 = vmatpush1.bf16.msra.mxu0 0
  %367 = vmatprep.subr.bf16.mxu0 0
  %368 = vmatpush1.bf16.msra.mxu0 0
  %369 = vmatprep.subr.bf16.mxu0 0
  %370 = vmatpush1.bf16.msra.mxu0 0
  %371 = vmatprep.subr.bf16.mxu0 0
  %372 = vmatpush1.bf16.msra.mxu0 0
  %373 = vmatprep.subr.bf16.mxu0 0
  %374 = vmatpush1.bf16.msra.mxu0 0
  %375 = vmatprep.subr.bf16.mxu0 0
  %376 = vmatpush1.bf16.msra.mxu0 0
  %377 = vmatprep.subr.bf16.mxu0 0
  %378 = vmatpush1.bf16.msra.mxu0 0
  %379 = vmatprep.subr.bf16.mxu0 0
  %380 = vmatpush1.bf16.msra.mxu0 0
  %381 = vmatprep.mubr.bf16.mxu0 0
  %382 = vmatmul.mubr.bf16.gmra.mrb[0].mxu0 %v108
  %v383 = vpop.f32.mrb[0].mxu0
  %v384 = vadd.f32 %v83, %v383
  %v385 = vpop.f32.mrb[0].mxu0
  %v386 = vadd.f32 %v87, %v385
  %v387 = vpop.f32.mrb[0].mxu0
  %v388 = vadd.f32 %v83, %v387
  %v389 = vpop.f32.mrb[0].mxu0
  %v390 = vadd.f32 %v87, %v389
  %391 = vmatprep.mubr.bf16.mxu0 0
  %392 = vmatmul.mubr.bf16.gmra.mrb[0].mxu0 %v109
  %v393 = vpop.f32.mrb[0].mxu0
  %v394 = vadd.f32 %v83, %v393
  %v395 = vpop.f32.mrb[0].mxu0
  %v396 = vadd.f32 %v87, %v395
  %v397 = vpop.f32.mrb[0].mxu0
  %v398 = vadd.f32 %v83, %v397
  %v399 = vpop.f32.mrb[0].mxu0
  %v400 = vadd.f32 %v87, %v399
  %401 = vmatprep.mubr.bf16.mxu0 0
  %402 = vmatmul.mubr.bf16.gmra.mrb[0].mxu0 %v110
  %v403 = vpop.f32.mrb[0].mxu0
  %v404 = vadd.f32 %v83, %v403
  %v405 = vpop.f32.mrb[0].mxu0
  %v406 = vadd.f32 %v87, %v405
  %v407 = vpop.f32.mrb[0].mxu0
  %v408 = vadd.f32 %v83, %v407
  %v409 = vpop.f32.mrb[0].mxu0
  %v410 = vadd.f32 %v87, %v409
  %411 = vmatprep.mubr.bf16.mxu0 0
  %412 = vmatmul.mubr.bf16.gmra.mrb[0].mxu0 %v111
  %v413 = vpop.f32.mrb[0].mxu0
  %v414 = vadd.f32 %v83, %v413
  %v415 = vpop.f32.mrb[0].mxu0
  %v416 = vadd.f32 %v87, %v415
  %v417 = vpop.f32.mrb[0].mxu0
  %v418 = vadd.f32 %v83, %v417
  %v419 = vpop.f32.mrb[0].mxu0
  %v420 = vadd.f32 %v87, %v419
  %421 = vdwg.mxu0
  %422 = vst [vmem:[#allocation2] sm:$0xff] %v311
  %423 = vst [vmem:[#allocation2 + $0x8] sm:$0xff] %v313
  %424 = vst [vmem:[#allocation2 + $0x10] sm:$0xff] %v384
  %425 = vst [vmem:[#allocation2 + $0x18] sm:$0xff] %v386
  %426 = vst [vmem:[#allocation2 + $0x20] sm:$0xff] %v315
  %427 = vst [vmem:[#allocation2 + $0x28] sm:$0xff] %v317
  %428 = vst [vmem:[#allocation2 + $0x30] sm:$0xff] %v388
  %429 = vst [vmem:[#allocation2 + $0x38] sm:$0xff] %v390
  %430 = vst [vmem:[#allocation2 + $0x40] sm:$0xff] %v321
  %431 = vst [vmem:[#allocation2 + $0x48] sm:$0xff] %v323
  %432 = vst [vmem:[#allocation2 + $0x50] sm:$0xff] %v394
  %433 = vst [vmem:[#allocation2 + $0x58] sm:$0xff] %v396
  %434 = vst [vmem:[#allocation2 + $0x60] sm:$0xff] %v325
  %435 = vst [vmem:[#allocation2 + $0x68] sm:$0xff] %v327
  %436 = vst [vmem:[#allocation2 + $0x70] sm:$0xff] %v398
  %437 = vst [vmem:[#allocation2 + $0x78] sm:$0xff] %v400
  %438 = vst [vmem:[#allocation2 + $0x80] sm:$0xff] %v331
  %439 = vst [vmem:[#allocation2 + $0x88] sm:$0xff] %v333
  %440 = vst [vmem:[#allocation2 + $0x90] sm:$0xff] %v404
  %441 = vst [vmem:[#allocation2 + $0x98] sm:$0xff] %v406
  %442 = vst [vmem:[#allocation2 + $0xa0] sm:$0xff] %v335
  %443 = vst [vmem:[#allocation2 + $0xa8] sm:$0xff] %v337
  %444 = vst [vmem:[#allocation2 + $0xb0] sm:$0xff] %v408
  %445 = vst [vmem:[#allocation2 + $0xb8] sm:$0xff] %v410
  %446 = vst [vmem:[#allocation2 + $0xc0] sm:$0xff] %v341
  %447 = vst [vmem:[#allocation2 + $0xc8] sm:$0xff] %v343
  %448 = vst [vmem:[#allocation2 + $0xd0] sm:$0xff] %v414
  %449 = vst [vmem:[#allocation2 + $0xd8] sm:$0xff] %v416
  %450 = vst [vmem:[#allocation2 + $0xe0] sm:$0xff] %v345
  %451 = vst [vmem:[#allocation2 + $0xe8] sm:$0xff] %v347
  %452 = vst [vmem:[#allocation2 + $0xf0] sm:$0xff] %v418
  %453 = vst [vmem:[#allocation2 + $0xf8] sm:$0xff] %v420
  %v454 = vld [vmem:[%s6] sm:$0xf]
  %v456 = vlaneseq
  %v457 = vshrl.u32 %v456, 7
  %v458 = vsub.s32 0, %v457
  %v459 = vrot.slane %v454, %v458
  %v460 = vlaneseq
  %v461 = vshrl.u32 %v460, 7
  %v462 = vsub.s32 1, %v461
  %v463 = vrot.slane %v454, %v462
  %v464 = vlaneseq
  %v465 = vshrl.u32 %v464, 7
  %v466 = vsub.s32 2, %v465
  %v467 = vrot.slane %v454, %v466
  %v468 = vlaneseq
  %v469 = vshrl.u32 %v468, 7
  %v470 = vsub.s32 3, %v469
  %v471 = vrot.slane %v454, %v470
  %v476 = vld [vmem:[#allocation2] sm:$0xff]
  %v477 = vld [vmem:[#allocation2 + $0x10] sm:$0xff]
  %v478 = vld [vmem:[#allocation2 + $0x18] sm:$0xff]
  %v479 = vxor.u32 %v476, 2147483648
  %v480 = vxor.u32 %v477, 2147483648
  %v481 = vmul.f32 %v479, 1.442695
  %v482 = vpow.pop %v481
  %v483 = vmul.f32 %v480, 1.442695
  %v484 = vpow.pop %v483
  %v485 = vadd.f32 %v482, 1.0
  %v486 = vadd.f32 %v484, 1.0
  %v487 = vrcp.pop %v485
  %v488 = vmul.f32 1.0, %v487
  %v489 = vrcp.pop %v486
  %v490 = vmul.f32 1.0, %v489
  %v491 = vtanh.pop %v478
  %v492 = vmul.f32 %v488, %v491
  %v493 = vtanh.pop %v492
  %v494 = vmul.f32 %v490, %v493
  %v495 = vpack.c.bf16 %v494, %v494
  %v496 = vld [vmem:[%s4] sm:$0xff]
  %v497 = vld [vmem:[%s4 + $0x8] sm:$0xff]
  %v498 = vld [vmem:[%s4 + $0x10] sm:$0xff]
  %v499 = vld [vmem:[%s4 + $0x18] sm:$0xff]
  %v500 = vld [vmem:[%s4 + $0x20] sm:$0xff]
  %v501 = vld [vmem:[%s4 + $0x28] sm:$0xff]
  %v502 = vld [vmem:[%s4 + $0x30] sm:$0xff]
  %v503 = vld [vmem:[%s4 + $0x38] sm:$0xff]
  %v504 = vld [vmem:[%s4 + $0x40] sm:$0xff]
  %v505 = vld [vmem:[%s4 + $0x48] sm:$0xff]
  %v506 = vld [vmem:[%s4 + $0x50] sm:$0xff]
  %v507 = vld [vmem:[%s4 + $0x58] sm:$0xff]
  %v508 = vld [vmem:[%s4 + $0x60] sm:$0xff]
  %v509 = vld [vmem:[%s4 + $0x68] sm:$0xff]
  %v510 = vld [vmem:[%s4 + $0x70] sm:$0xff]
  %v511 = vld [vmem:[%s4 + $0x78] sm:$0xff]
  %v512 = vld [vmem:[%s4 + $0x80] sm:$0xff]
  %v513 = vld [vmem:[%s4 + $0x88] sm:$0xff]
  %v514 = vld [vmem:[%s4 + $0x90] sm:$0xff]
  %v515 = vld [vmem:[%s4 + $0x98] sm:$0xff]
  %v516 = vld [vmem:[%s4 + $0xa0] sm:$0xff]
  %v517 = vld [vmem:[%s4 + $0xa8] sm:$0xff]
  %v518 = vld [vmem:[%s4 + $0xb0] sm:$0xff]
  %v519 = vld [vmem:[%s4 + $0xb8] sm:$0xff]
  %v520 = vld [vmem:[%s4 + $0xc0] sm:$0xff]
  %v521 = vld [vmem:[%s4 + $0xc8] sm:$0xff]
  %v522 = vld [vmem:[%s4 + $0xd0] sm:$0xff]
  %v523 = vld [vmem:[%s4 + $0xd8] sm:$0xff]
  %v524 = vld [vmem:[%s4 + $0xe0] sm:$0xff]
  %v525 = vld [vmem:[%s4 + $0xe8] sm:$0xff]
  %v526 = vld [vmem:[%s4 + $0xf0] sm:$0xff]
  %v527 = vld [vmem:[%s4 + $0xf8] sm:$0xff]
  %v560 = vunpack.c.l.b16 %v496
  %v561 = vunpack.c.h.b16 %v496
  %v562 = vunpack.c.l.b16 %v497
  %v563 = vunpack.c.h.b16 %v497
  %v564 = vunpack.c.l.b16 %v498
  %v565 = vunpack.c.h.b16 %v498
  %v566 = vunpack.c.l.b16 %v499
  %v567 = vunpack.c.h.b16 %v499
  %v568 = vunpack.c.l.b16 %v500
  %v569 = vunpack.c.h.b16 %v500
  %v570 = vunpack.c.l.b16 %v501
  %v571 = vunpack.c.h.b16 %v501
  %v572 = vunpack.c.l.b16 %v502
  %v573 = vunpack.c.h.b16 %v502
  %v574 = vunpack.c.l.b16 %v503
  %v575 = vunpack.c.h.b16 %v503
  %v576 = vunpack.c.l.b16 %v504
  %v577 = vunpack.c.h.b16 %v504
  %v578 = vunpack.c.l.b16 %v505
  %v579 = vunpack.c.h.b16 %v505
  %v580 = vunpack.c.l.b16 %v506
  %v581 = vunpack.c.h.b16 %v506
  %v582 = vunpack.c.l.b16 %v507
  %v583 = vunpack.c.h.b16 %v507
  %v584 = vunpack.c.l.b16 %v508
  %v585 = vunpack.c.h.b16 %v508
  %v586 = vunpack.c.l.b16 %v509
  %v587 = vunpack.c.h.b16 %v509
  %v588 = vunpack.c.l.b16 %v510
  %v589 = vunpack.c.h.b16 %v510
  %v590 = vunpack.c.l.b16 %v511
  %v591 = vunpack.c.h.b16 %v511
  %v592 = vunpack.c.l.b16 %v512
  %v593 = vunpack.c.h.b16 %v512
  %v594 = vunpack.c.l.b16 %v513
  %v595 = vunpack.c.h.b16 %v513
  %v596 = vunpack.c.l.b16 %v514
  %v597 = vunpack.c.h.b16 %v514
  %v598 = vunpack.c.l.b16 %v515
  %v599 = vunpack.c.h.b16 %v515
  %v600 = vunpack.c.l.b16 %v516
  %v601 = vunpack.c.h.b16 %v516
  %v602 = vunpack.c.l.b16 %v517
  %v603 = vunpack.c.h.b16 %v517
  %v604 = vunpack.c.l.b16 %v518
  %v605 = vunpack.c.h.b16 %v518
  %v606 = vunpack.c.l.b16 %v519
  %v607 = vunpack.c.h.b16 %v519
  %v608 = vunpack.c.l.b16 %v520
  %v609 = vunpack.c.h.b16 %v520
  %v610 = vunpack.c.l.b16 %v521
  %v611 = vunpack.c.h.b16 %v521
  %v612 = vunpack.c.l.b16 %v522
  %v613 = vunpack.c.h.b16 %v522
  %v614 = vunpack.c.l.b16 %v523
  %v615 = vunpack.c.h.b16 %v523
  %v616 = vunpack.c.l.b16 %v524
  %v617 = vunpack.c.h.b16 %v524
  %v618 = vunpack.c.l.b16 %v525
  %v619 = vunpack.c.h.b16 %v525
  %v620 = vunpack.c.l.b16 %v526
  %v621 = vunpack.c.h.b16 %v526
  %v622 = vunpack.c.l.b16 %v527
  %v623 = vunpack.c.h.b16 %v527
  %v624 = vpack.c.b16 %v564, %v560
  %v625 = vpack.c.b16 %v565, %v561
  %v626 = vpack.c.b16 %v566, %v562
  %v627 = vpack.c.b16 %v567, %v563
  %v628 = vpack.c.b16 %v572, %v568
  %v629 = vpack.c.b16 %v573, %v569
  %v630 = vpack.c.b16 %v574, %v570
  %v631 = vpack.c.b16 %v575, %v571
  %v632 = vpack.c.b16 %v580, %v576
  %v633 = vpack.c.b16 %v581, %v577
  %v634 = vpack.c.b16 %v582, %v578
  %v635 = vpack.c.b16 %v583, %v579
  %v636 = vpack.c.b16 %v588, %v584
  %v637 = vpack.c.b16 %v589, %v585
  %v638 = vpack.c.b16 %v590, %v586
  %v639 = vpack.c.b16 %v591, %v587
  %v640 = vpack.c.b16 %v596, %v592
  %v641 = vpack.c.b16 %v597, %v593
  %v642 = vpack.c.b16 %v598, %v594
  %v643 = vpack.c.b16 %v599, %v595
  %v644 = vpack.c.b16 %v604, %v600
  %v645 = vpack.c.b16 %v605, %v601
  %v646 = vpack.c.b16 %v606, %v602
  %v647 = vpack.c.b16 %v607, %v603
  %v648 = vpack.c.b16 %v612, %v608
  %v649 = vpack.c.b16 %v613, %v609
  %v650 = vpack.c.b16 %v614, %v610
  %v651 = vpack.c.b16 %v615, %v611
  %v652 = vpack.c.b16 %v620, %v616
  %v653 = vpack.c.b16 %v621, %v617
  %v654 = vpack.c.b16 %v622, %v618
  %v655 = vpack.c.b16 %v623, %v619
  %688 = vmatprep.subr.bf16.mxu0 %v625
  %689 = vmatpush1.bf16.msra.mxu0 %v624
  %690 = vmatprep.subr.bf16.mxu0 %v629
  %691 = vmatpush1.bf16.msra.mxu0 %v628
  %692 = vmatprep.subr.bf16.mxu0 %v633
  %693 = vmatpush1.bf16.msra.mxu0 %v632
  %694 = vmatprep.subr.bf16.mxu0 %v637
  %695 = vmatpush1.bf16.msra.mxu0 %v636
  %696 = vmatprep.subr.bf16.mxu0 %v641
  %697 = vmatpush1.bf16.msra.mxu0 %v640
  %698 = vmatprep.subr.bf16.mxu0 %v645
  %699 = vmatpush1.bf16.msra.mxu0 %v644
  %700 = vmatprep.subr.bf16.mxu0 %v649
  %701 = vmatpush1.bf16.msra.mxu0 %v648
  %702 = vmatprep.subr.bf16.mxu0 %v653
  %703 = vmatpush1.bf16.msra.mxu0 %v652
  %704 = vmatprep.subr.bf16.mxu0 0
  %705 = vmatpush1.bf16.msra.mxu0 0
  %706 = vmatprep.subr.bf16.mxu0 0
  %707 = vmatpush1.bf16.msra.mxu0 0
  %708 = vmatprep.subr.bf16.mxu0 0
  %709 = vmatpush1.bf16.msra.mxu0 0
  %710 = vmatprep.subr.bf16.mxu0 0
  %711 = vmatpush1.bf16.msra.mxu0 0
  %712 = vmatprep.subr.bf16.mxu0 0
  %713 = vmatpush1.bf16.msra.mxu0 0
  %714 = vmatprep.subr.bf16.mxu0 0
  %715 = vmatpush1.bf16.msra.mxu0 0
  %716 = vmatprep.subr.bf16.mxu0 0
  %717 = vmatpush1.bf16.msra.mxu0 0
  %718 = vmatprep.subr.bf16.mxu0 0
  %719 = vmatpush1.bf16.msra.mxu0 0
  %720 = vmatprep.mubr.bf16.mxu0 0
  %721 = vmatmul.mubr.bf16.gmra.mrb[0].mxu0 %v495
  %v722 = vpop.f32.mrb[0].mxu0
  %v723 = vadd.f32 %v459, %v722
  %v724 = vpop.f32.mrb[0].mxu0
  %v725 = vpop.f32.mrb[0].mxu0
  %v726 = vpop.f32.mrb[0].mxu0
  %727 = vdwg.mxu0
  %728 = vmatprep.subr.bf16.mxu0 %v627
  %729 = vmatpush1.bf16.msra.mxu0 %v626
  %730 = vmatprep.subr.bf16.mxu0 %v631
  %731 = vmatpush1.bf16.msra.mxu0 %v630
  %732 = vmatprep.subr.bf16.mxu0 %v635
  %733 = vmatpush1.bf16.msra.mxu0 %v634
  %734 = vmatprep.subr.bf16.mxu0 %v639
  %735 = vmatpush1.bf16.msra.mxu0 %v638
  %736 = vmatprep.subr.bf16.mxu0 %v643
  %737 = vmatpush1.bf16.msra.mxu0 %v642
  %738 = vmatprep.subr.bf16.mxu0 %v647
  %739 = vmatpush1.bf16.msra.mxu0 %v646
  %740 = vmatprep.subr.bf16.mxu0 %v651
  %741 = vmatpush1.bf16.msra.mxu0 %v650
  %742 = vmatprep.subr.bf16.mxu0 %v655
  %743 = vmatpush1.bf16.msra.mxu0 %v654
  %744 = vmatprep.subr.bf16.mxu0 0
  %745 = vmatpush1.bf16.msra.mxu0 0
  %746 = vmatprep.subr.bf16.mxu0 0
  %747 = vmatpush1.bf16.msra.mxu0 0
  %748 = vmatprep.subr.bf16.mxu0 0
  %749 = vmatpush1.bf16.msra.mxu0 0
  %750 = vmatprep.subr.bf16.mxu0 0
  %751 = vmatpush1.bf16.msra.mxu0 0
  %752 = vmatprep.subr.bf16.mxu0 0
  %753 = vmatpush1.bf16.msra.mxu0 0
  %754 = vmatprep.subr.bf16.mxu0 0
  %755 = vmatpush1.bf16.msra.mxu0 0
  %756 = vmatprep.subr.bf16.mxu0 0
  %757 = vmatpush1.bf16.msra.mxu0 0
  %758 = vmatprep.subr.bf16.mxu0 0
  %759 = vmatpush1.bf16.msra.mxu0 0
  %760 = vmatprep.mubr.bf16.mxu0 0
  %761 = vmatmul.mubr.bf16.gmra.mrb[0].mxu0 %v495
  %v762 = vpop.f32.mrb[0].mxu0
  %v763 = vadd.f32 %v467, %v762
  %v764 = vpop.f32.mrb[0].mxu0
  %v765 = vadd.f32 %v471, %v764
  %v766 = vpop.f32.mrb[0].mxu0
  %v767 = vpop.f32.mrb[0].mxu0
  %768 = vdwg.mxu0
  %v769 = vxor.u32 %v723, 2147483648
  %v770 = vxor.u32 %v763, 2147483648
  %v771 = vmul.f32 %v769, 1.442695
  %v772 = vpow.pop %v771
  %v773 = vmul.f32 %v770, 1.442695
  %v774 = vpow.pop %v773
  %v775 = vadd.f32 %v772, 1.0
  %v776 = vadd.f32 %v774, 1.0
  %v777 = vrcp.pop %v775
  %v778 = vmul.f32 1.0, %v777
  %v779 = vrcp.pop %v776
  %v780 = vmul.f32 1.0, %v779
  %v781 = vtanh.pop %v765
  %v782 = vmul.f32 %v778, %v781
  %v783 = vtanh.pop %v782
  %v784 = vmul.f32 %v780, %v783
  %v785 = vpack.c.bf16 %v784, %v784
  %v786 = vld [vmem:[%s5] sm:$0xff]
  %v787 = vld [vmem:[%s5 + $0x8] sm:$0xff]
  %v788 = vld [vmem:[%s5 + $0x10] sm:$0xff]
  %v789 = vld [vmem:[%s5 + $0x18] sm:$0xff]
  %v790 = vld [vmem:[%s5 + $0x20] sm:$0xff]
  %v791 = vld [vmem:[%s5 + $0x28] sm:$0xff]
  %v792 = vld [vmem:[%s5 + $0x30] sm:$0xff]
  %v793 = vld [vmem:[%s5 + $0x38] sm:$0xff]
  %v794 = vld [vmem:[%s5 + $0x40] sm:$0xff]
  %v795 = vld [vmem:[%s5 + $0x48] sm:$0xff]
  %v796 = vld [vmem:[%s5 + $0x50] sm:$0xff]
  %v797 = vld [vmem:[%s5 + $0x58] sm:$0xff]
  %v798 = vld [vmem:[%s5 + $0x60] sm:$0xff]
  %v799 = vld [vmem:[%s5 + $0x68] sm:$0xff]
  %v800 = vld [vmem:[%s5 + $0x70] sm:$0xff]
  %v801 = vld [vmem:[%s5 + $0x78] sm:$0xff]
  %v802 = vld [vmem:[%s5 + $0x80] sm:$0xff]
  %v803 = vld [vmem:[%s5 + $0x88] sm:$0xff]
  %v804 = vld [vmem:[%s5 + $0x90] sm:$0xff]
  %v805 = vld [vmem:[%s5 + $0x98] sm:$0xff]
  %v806 = vld [vmem:[%s5 + $0xa0] sm:$0xff]
  %v807 = vld [vmem:[%s5 + $0xa8] sm:$0xff]
  %v808 = vld [vmem:[%s5 + $0xb0] sm:$0xff]
  %v809 = vld [vmem:[%s5 + $0xb8] sm:$0xff]
  %v810 = vld [vmem:[%s5 + $0xc0] sm:$0xff]
  %v811 = vld [vmem:[%s5 + $0xc8] sm:$0xff]
  %v812 = vld [vmem:[%s5 + $0xd0] sm:$0xff]
  %v813 = vld [vmem:[%s5 + $0xd8] sm:$0xff]
  %v814 = vld [vmem:[%s5 + $0xe0] sm:$0xff]
  %v815 = vld [vmem:[%s5 + $0xe8] sm:$0xff]
  %v816 = vld [vmem:[%s5 + $0xf0] sm:$0xff]
  %v817 = vld [vmem:[%s5 + $0xf8] sm:$0xff]
  %v850 = vunpack.c.l.b16 %v786
  %v851 = vunpack.c.h.b16 %v786
  %v852 = vunpack.c.l.b16 %v787
  %v853 = vunpack.c.h.b16 %v787
  %v854 = vunpack.c.l.b16 %v788
  %v855 = vunpack.c.h.b16 %v788
  %v856 = vunpack.c.l.b16 %v789
  %v857 = vunpack.c.h.b16 %v789
  %v858 = vunpack.c.l.b16 %v790
  %v859 = vunpack.c.h.b16 %v790
  %v860 = vunpack.c.l.b16 %v791
  %v861 = vunpack.c.h.b16 %v791
  %v862 = vunpack.c.l.b16 %v792
  %v863 = vunpack.c.h.b16 %v792
  %v864 = vunpack.c.l.b16 %v793
  %v865 = vunpack.c.h.b16 %v793
  %v866 = vunpack.c.l.b16 %v794
  %v867 = vunpack.c.h.b16 %v794
  %v868 = vunpack.c.l.b16 %v795
  %v869 = vunpack.c.h.b16 %v795
  %v870 = vunpack.c.l.b16 %v796
  %v871 = vunpack.c.h.b16 %v796
  %v872 = vunpack.c.l.b16 %v797
  %v873 = vunpack.c.h.b16 %v797
  %v874 = vunpack.c.l.b16 %v798
  %v875 = vunpack.c.h.b16 %v798
  %v876 = vunpack.c.l.b16 %v799
  %v877 = vunpack.c.h.b16 %v799
  %v878 = vunpack.c.l.b16 %v800
  %v879 = vunpack.c.h.b16 %v800
  %v880 = vunpack.c.l.b16 %v801
  %v881 = vunpack.c.h.b16 %v801
  %v882 = vunpack.c.l.b16 %v802
  %v883 = vunpack.c.h.b16 %v802
  %v884 = vunpack.c.l.b16 %v803
  %v885 = vunpack.c.h.b16 %v803
  %v886 = vunpack.c.l.b16 %v804
  %v887 = vunpack.c.h.b16 %v804
  %v888 = vunpack.c.l.b16 %v805
  %v889 = vunpack.c.h.b16 %v805
  %v890 = vunpack.c.l.b16 %v806
  %v891 = vunpack.c.h.b16 %v806
  %v892 = vunpack.c.l.b16 %v807
  %v893 = vunpack.c.h.b16 %v807
  %v894 = vunpack.c.l.b16 %v808
  %v895 = vunpack.c.h.b16 %v808
  %v896 = vunpack.c.l.b16 %v809
  %v897 = vunpack.c.h.b16 %v809
  %v898 = vunpack.c.l.b16 %v810
  %v899 = vunpack.c.h.b16 %v810
  %v900 = vunpack.c.l.b16 %v811
  %v901 = vunpack.c.h.b16 %v811
  %v902 = vunpack.c.l.b16 %v812
  %v903 = vunpack.c.h.b16 %v812
  %v904 = vunpack.c.l.b16 %v813
  %v905 = vunpack.c.h.b16 %v813
  %v906 = vunpack.c.l.b16 %v814
  %v907 = vunpack.c.h.b16 %v814
  %v908 = vunpack.c.l.b16 %v815
  %v909 = vunpack.c.h.b16 %v815
  %v910 = vunpack.c.l.b16 %v816
  %v911 = vunpack.c.h.b16 %v816
  %v912 = vunpack.c.l.b16 %v817
  %v913 = vunpack.c.h.b16 %v817
  %v914 = vpack.c.b16 %v854, %v850
  %v915 = vpack.c.b16 %v855, %v851
  %v916 = vpack.c.b16 %v856, %v852
  %v917 = vpack.c.b16 %v857, %v853
  %v918 = vpack.c.b16 %v862, %v858
  %v919 = vpack.c.b16 %v863, %v859
  %v920 = vpack.c.b16 %v864, %v860
  %v921 = vpack.c.b16 %v865, %v861
  %v922 = vpack.c.b16 %v870, %v866
  %v923 = vpack.c.b16 %v871, %v867
  %v924 = vpack.c.b16 %v872, %v868
  %v925 = vpack.c.b16 %v873, %v869
  %v926 = vpack.c.b16 %v878, %v874
  %v927 = vpack.c.b16 %v879, %v875
  %v928 = vpack.c.b16 %v880, %v876
  %v929 = vpack.c.b16 %v881, %v877
  %v930 = vpack.c.b16 %v886, %v882
  %v931 = vpack.c.b16 %v887, %v883
  %v932 = vpack.c.b16 %v888, %v884
  %v933 = vpack.c.b16 %v889, %v885
  %v934 = vpack.c.b16 %v894, %v890
  %v935 = vpack.c.b16 %v895, %v891
  %v936 = vpack.c.b16 %v896, %v892
  %v937 = vpack.c.b16 %v897, %v893
  %v938 = vpack.c.b16 %v902, %v898
  %v939 = vpack.c.b16 %v903, %v899
  %v940 = vpack.c.b16 %v904, %v900
  %v941 = vpack.c.b16 %v905, %v901
  %v942 = vpack.c.b16 %v910, %v906
  %v943 = vpack.c.b16 %v911, %v907
  %v944 = vpack.c.b16 %v912, %v908
  %v945 = vpack.c.b16 %v913, %v909
  %978 = vmatprep.subr.bf16.mxu0 %v915
  %979 = vmatpush1.bf16.msra.mxu0 %v914
  %980 = vmatprep.subr.bf16.mxu0 %v919
  %981 = vmatpush1.bf16.msra.mxu0 %v918
  %982 = vmatprep.subr.bf16.mxu0 %v923
  %983 = vmatpush1.bf16.msra.mxu0 %v922
  %984 = vmatprep.subr.bf16.mxu0 %v927
  %985 = vmatpush1.bf16.msra.mxu0 %v926
  %986 = vmatprep.subr.bf16.mxu0 %v931
  %987 = vmatpush1.bf16.msra.mxu0 %v930
  %988 = vmatprep.subr.bf16.mxu0 %v935
  %989 = vmatpush1.bf16.msra.mxu0 %v934
  %990 = vmatprep.subr.bf16.mxu0 %v939
  %991 = vmatpush1.bf16.msra.mxu0 %v938
  %992 = vmatprep.subr.bf16.mxu0 %v943
  %993 = vmatpush1.bf16.msra.mxu0 %v942
  %994 = vmatprep.subr.bf16.mxu0 0
  %995 = vmatpush1.bf16.msra.mxu0 0
  %996 = vmatprep.subr.bf16.mxu0 0
  %997 = vmatpush1.bf16.msra.mxu0 0
  %998 = vmatprep.subr.bf16.mxu0 0
  %999 = vmatpush1.bf16.msra.mxu0 0
  %1000 = vmatprep.subr.bf16.mxu0 0
  %1001 = vmatpush1.bf16.msra.mxu0 0
  %1002 = vmatprep.subr.bf16.mxu0 0
  %1003 = vmatpush1.bf16.msra.mxu0 0
  %1004 = vmatprep.subr.bf16.mxu0 0
  %1005 = vmatpush1.bf16.msra.mxu0 0
  %1006 = vmatprep.subr.bf16.mxu0 0
  %1007 = vmatpush1.bf16.msra.mxu0 0
  %1008 = vmatprep.subr.bf16.mxu0 0
  %1009 = vmatpush1.bf16.msra.mxu0 0
  %1010 = vmatprep.mubr.bf16.mxu0 0
  %1011 = vmatmul.mubr.bf16.gmra.mrb[0].mxu0 %v785
  %v1012 = vpop.f32.mrb[0].mxu0
  %v1013 = vadd.f32 0.0, %v1012
  %v1014 = vpop.f32.mrb[0].mxu0
  %v1015 = vadd.f32 0.0, %v1014
  %v1016 = vpop.f32.mrb[0].mxu0
  %v1017 = vpop.f32.mrb[0].mxu0
  %1018 = vdwg.mxu0
  %1019 = vmatprep.subr.bf16.mxu0 %v917
  %1020 = vmatpush1.bf16.msra.mxu0 %v916
  %1021 = vmatprep.subr.bf16.mxu0 %v921
  %1022 = vmatpush1.bf16.msra.mxu0 %v920
  %1023 = vmatprep.subr.bf16.mxu0 %v925
  %1024 = vmatpush1.bf16.msra.mxu0 %v924
  %1025 = vmatprep.subr.bf16.mxu0 %v929
  %1026 = vmatpush1.bf16.msra.mxu0 %v928
  %1027 = vmatprep.subr.bf16.mxu0 %v933
  %1028 = vmatpush1.bf16.msra.mxu0 %v932
  %1029 = vmatprep.subr.bf16.mxu0 %v937
  %1030 = vmatpush1.bf16.msra.mxu0 %v936
  %1031 = vmatprep.subr.bf16.mxu0 %v941
  %1032 = vmatpush1.bf16.msra.mxu0 %v940
  %1033 = vmatprep.subr.bf16.mxu0 %v945
  %1034 = vmatpush1.bf16.msra.mxu0 %v944
  %1035 = vmatprep.subr.bf16.mxu0 0
  %1036 = vmatpush1.bf16.msra.mxu0 0
  %1037 = vmatprep.subr.bf16.mxu0 0
  %1038 = vmatpush1.bf16.msra.mxu0 0
  %1039 = vmatprep.subr.bf16.mxu0 0
  %1040 = vmatpush1.bf16.msra.mxu0 0
  %1041 = vmatprep.subr.bf16.mxu0 0
  %1042 = vmatpush1.bf16.msra.mxu0 0
  %1043 = vmatprep.subr.bf16.mxu0 0
  %1044 = vmatpush1.bf16.msra.mxu0 0
  %1045 = vmatprep.subr.bf16.mxu0 0
  %1046 = vmatpush1.bf16.msra.mxu0 0
  %1047 = vmatprep.subr.bf16.mxu0 0
  %1048 = vmatpush1.bf16.msra.mxu0 0
  %1049 = vmatprep.subr.bf16.mxu0 0
  %1050 = vmatpush1.bf16.msra.mxu0 0
  %1051 = vmatprep.mubr.bf16.mxu0 0
  %1052 = vmatmul.mubr.bf16.gmra.mrb[0].mxu0 %v785
  %v1053 = vpop.f32.mrb[0].mxu0
  %v1054 = vadd.f32 0.0, %v1053
  %v1055 = vpop.f32.mrb[0].mxu0
  %v1056 = vadd.f32 0.0, %v1055
  %v1057 = vpop.f32.mrb[0].mxu0
  %v1058 = vpop.f32.mrb[0].mxu0
  %1059 = vdwg.mxu0
  %s1060 = smul.u32 1, 4
  %s1061 = smul.addr %s1060, 8
  %s1062 = scalar_lea.vmem [#allocation2], %s1061
  %v1063 = vld [vmem:[%s1062] sm:$0xff]
  %v1064 = vld [vmem:[%s1062 + $0x8] sm:$0xff]
  %v1065 = vld [vmem:[%s1062 + $0x10] sm:$0xff]
  %v1066 = vld [vmem:[%s1062 + $0x18] sm:$0xff]
  %v1067 = vld [vmem:[%s2] sm:$0xff]
  %v1068 = vld [vmem:[%s2 + $0x8] sm:$0xff]
  %v1069 = vld [vmem:[%s2 + $0x10] sm:$0xff]
  %v1070 = vld [vmem:[%s2 + $0x18] sm:$0xff]
  %v1071 = vld [vmem:[%s2 + $0x20] sm:$0xff]
  %v1072 = vld [vmem:[%s2 + $0x28] sm:$0xff]
  %v1073 = vld [vmem:[%s2 + $0x30] sm:$0xff]
  %v1074 = vld [vmem:[%s2 + $0x38] sm:$0xff]
  %v1075 = vld [vmem:[%s2 + $0x40] sm:$0xff]
  %v1076 = vld [vmem:[%s2 + $0x48] sm:$0xff]
  %v1077 = vld [vmem:[%s2 + $0x50] sm:$0xff]
  %v1078 = vld [vmem:[%s2 + $0x58] sm:$0xff]
  %v1079 = vld [vmem:[%s2 + $0x60] sm:$0xff]
  %v1080 = vld [vmem:[%s2 + $0x68] sm:$0xff]
  %v1081 = vld [vmem:[%s2 + $0x70] sm:$0xff]
  %v1082 = vld [vmem:[%s2 + $0x78] sm:$0xff]
  %v1083 = vld [vmem:[%s2 + $0x80] sm:$0xff]
  %v1084 = vld [vmem:[%s2 + $0x88] sm:$0xff]
  %v1085 = vld [vmem:[%s2 + $0x90] sm:$0xff]
  %v1086 = vld [vmem:[%s2 + $0x98] sm:$0xff]
  %v1087 = vld [vmem:[%s2 + $0xa0] sm:$0xff]
  %v1088 = vld [vmem:[%s2 + $0xa8] sm:$0xff]
  %v1089 = vld [vmem:[%s2 + $0xb0] sm:$0xff]
  %v1090 = vld [vmem:[%s2 + $0xb8] sm:$0xff]
  %v1091 = vld [vmem:[%s2 + $0xc0] sm:$0xff]
  %v1092 = vld [vmem:[%s2 + $0xc8] sm:$0xff]
  %v1093 = vld [vmem:[%s2 + $0xd0] sm:$0xff]
  %v1094 = vld [vmem:[%s2 + $0xd8] sm:$0xff]
  %v1095 = vld [vmem:[%s2 + $0xe0] sm:$0xff]
  %v1096 = vld [vmem:[%s2 + $0xe8] sm:$0xff]
  %v1097 = vld [vmem:[%s2 + $0xf0] sm:$0xff]
  %v1098 = vld [vmem:[%s2 + $0xf8] sm:$0xff]
  %v1131 = vunpack.c.l.b16 %v1067
  %v1132 = vunpack.c.h.b16 %v1067
  %v1133 = vunpack.c.l.b16 %v1068
  %v1134 = vunpack.c.h.b16 %v1068
  %v1135 = vunpack.c.l.b16 %v1069
  %v1136 = vunpack.c.h.b16 %v1069
  %v1137 = vunpack.c.l.b16 %v1070
  %v1138 = vunpack.c.h.b16 %v1070
  %v1139 = vunpack.c.l.b16 %v1071
  %v1140 = vunpack.c.h.b16 %v1071
  %v1141 = vunpack.c.l.b16 %v1072
  %v1142 = vunpack.c.h.b16 %v1072
  %v1143 = vunpack.c.l.b16 %v1073
  %v1144 = vunpack.c.h.b16 %v1073
  %v1145 = vunpack.c.l.b16 %v1074
  %v1146 = vunpack.c.h.b16 %v1074
  %v1147 = vunpack.c.l.b16 %v1075
  %v1148 = vunpack.c.h.b16 %v1075
  %v1149 = vunpack.c.l.b16 %v1076
  %v1150 = vunpack.c.h.b16 %v1076
  %v1151 = vunpack.c.l.b16 %v1077
  %v1152 = vunpack.c.h.b16 %v1077
  %v1153 = vunpack.c.l.b16 %v1078
  %v1154 = vunpack.c.h.b16 %v1078
  %v1155 = vunpack.c.l.b16 %v1079
  %v1156 = vunpack.c.h.b16 %v1079
  %v1157 = vunpack.c.l.b16 %v1080
  %v1158 = vunpack.c.h.b16 %v1080
  %v1159 = vunpack.c.l.b16 %v1081
  %v1160 = vunpack.c.h.b16 %v1081
  %v1161 = vunpack.c.l.b16 %v1082
  %v1162 = vunpack.c.h.b16 %v1082
  %v1163 = vunpack.c.l.b16 %v1083
  %v1164 = vunpack.c.h.b16 %v1083
  %v1165 = vunpack.c.l.b16 %v1084
  %v1166 = vunpack.c.h.b16 %v1084
  %v1167 = vunpack.c.l.b16 %v1085
  %v1168 = vunpack.c.h.b16 %v1085
  %v1169 = vunpack.c.l.b16 %v1086
  %v1170 = vunpack.c.h.b16 %v1086
  %v1171 = vunpack.c.l.b16 %v1087
  %v1172 = vunpack.c.h.b16 %v1087
  %v1173 = vunpack.c.l.b16 %v1088
  %v1174 = vunpack.c.h.b16 %v1088
  %v1175 = vunpack.c.l.b16 %v1089
  %v1176 = vunpack.c.h.b16 %v1089
  %v1177 = vunpack.c.l.b16 %v1090
  %v1178 = vunpack.c.h.b16 %v1090
  %v1179 = vunpack.c.l.b16 %v1091
  %v1180 = vunpack.c.h.b16 %v1091
  %v1181 = vunpack.c.l.b16 %v1092
  %v1182 = vunpack.c.h.b16 %v1092
  %v1183 = vunpack.c.l.b16 %v1093
  %v1184 = vunpack.c.h.b16 %v1093
  %v1185 = vunpack.c.l.b16 %v1094
  %v1186 = vunpack.c.h.b16 %v1094
  %v1187 = vunpack.c.l.b16 %v1095
  %v1188 = vunpack.c.h.b16 %v1095
  %v1189 = vunpack.c.l.b16 %v1096
  %v1190 = vunpack.c.h.b16 %v1096
  %v1191 = vunpack.c.l.b16 %v1097
  %v1192 = vunpack.c.h.b16 %v1097
  %v1193 = vunpack.c.l.b16 %v1098
  %v1194 = vunpack.c.h.b16 %v1098
  %v1195 = vpack.c.b16 %v1135, %v1131
  %v1196 = vpack.c.b16 %v1136, %v1132
  %v1197 = vpack.c.b16 %v1137, %v1133
  %v1198 = vpack.c.b16 %v1138, %v1134
  %v1199 = vpack.c.b16 %v1143, %v1139
  %v1200 = vpack.c.b16 %v1144, %v1140
  %v1201 = vpack.c.b16 %v1145, %v1141
  %v1202 = vpack.c.b16 %v1146, %v1142
  %v1203 = vpack.c.b16 %v1151, %v1147
  %v1204 = vpack.c.b16 %v1152, %v1148
  %v1205 = vpack.c.b16 %v1153, %v1149
  %v1206 = vpack.c.b16 %v1154, %v1150
  %v1207 = vpack.c.b16 %v1159, %v1155
  %v1208 = vpack.c.b16 %v1160, %v1156
  %v1209 = vpack.c.b16 %v1161, %v1157
  %v1210 = vpack.c.b16 %v1162, %v1158
  %v1211 = vpack.c.b16 %v1167, %v1163
  %v1212 = vpack.c.b16 %v1168, %v1164
  %v1213 = vpack.c.b16 %v1169, %v1165
  %v1214 = vpack.c.b16 %v1170, %v1166
  %v1215 = vpack.c.b16 %v1175, %v1171
  %v1216 = vpack.c.b16 %v1176, %v1172
  %v1217 = vpack.c.b16 %v1177, %v1173
  %v1218 = vpack.c.b16 %v1178, %v1174
  %v1219 = vpack.c.b16 %v1183, %v1179
  %v1220 = vpack.c.b16 %v1184, %v1180
  %v1221 = vpack.c.b16 %v1185, %v1181
  %v1222 = vpack.c.b16 %v1186, %v1182
  %v1223 = vpack.c.b16 %v1191, %v1187
  %v1224 = vpack.c.b16 %v1192, %v1188
  %v1225 = vpack.c.b16 %v1193, %v1189
  %v1226 = vpack.c.b16 %v1194, %v1190
  %1259 = vmatprep.subr.bf16.mxu0 %v1196
  %1260 = vmatpush1.bf16.msra.mxu0 %v1195
  %1261 = vmatprep.subr.bf16.mxu0 %v1200
  %1262 = vmatpush1.bf16.msra.mxu0 %v1199
  %1263 = vmatprep.subr.bf16.mxu0 %v1204
  %1264 = vmatpush1.bf16.msra.mxu0 %v1203
  %1265 = vmatprep.subr.bf16.mxu0 %v1208
  %1266 = vmatpush1.bf16.msra.mxu0 %v1207
  %1267 = vmatprep.subr.bf16.mxu0 %v1212
  %1268 = vmatpush1.bf16.msra.mxu0 %v1211
  %1269 = vmatprep.subr.bf16.mxu0 %v1216
  %1270 = vmatpush1.bf16.msra.mxu0 %v1215
  %1271 = vmatprep.subr.bf16.mxu0 %v1220
  %1272 = vmatpush1.bf16.msra.mxu0 %v1219
  %1273 = vmatprep.subr.bf16.mxu0 %v1224
  %1274 = vmatpush1.bf16.msra.mxu0 %v1223
  %1275 = vmatprep.subr.bf16.mxu0 0
  %1276 = vmatpush1.bf16.msra.mxu0 0
  %1277 = vmatprep.subr.bf16.mxu0 0
  %1278 = vmatpush1.bf16.msra.mxu0 0
  %1279 = vmatprep.subr.bf16.mxu0 0
  %1280 = vmatpush1.bf16.msra.mxu0 0
  %1281 = vmatprep.subr.bf16.mxu0 0
  %1282 = vmatpush1.bf16.msra.mxu0 0
  %1283 = vmatprep.subr.bf16.mxu0 0
  %1284 = vmatpush1.bf16.msra.mxu0 0
  %1285 = vmatprep.subr.bf16.mxu0 0
  %1286 = vmatpush1.bf16.msra.mxu0 0
  %1287 = vmatprep.subr.bf16.mxu0 0
  %1288 = vmatpush1.bf16.msra.mxu0 0
  %1289 = vmatprep.subr.bf16.mxu0 0
  %1290 = vmatpush1.bf16.msra.mxu0 0
  %1291 = vmatprep.mubr.bf16.mxu0 0
  %1292 = vmatmul.mubr.bf16.gmra.mrb[0].mxu0 %v495
  %v1293 = vpop.f32.mrb[0].mxu0
  %v1294 = vadd.f32 0.0, %v1293
  %v1295 = vpop.f32.mrb[0].mxu0
  %v1296 = vadd.f32 0.0, %v1295
  %v1297 = vpop.f32.mrb[0].mxu0
  %v1298 = vpop.f32.mrb[0].mxu0
  %1299 = vdwg.mxu0
  %1300 = vmatprep.subr.bf16.mxu0 %v1198
  %1301 = vmatpush1.bf16.msra.mxu0 %v1197
  %1302 = vmatprep.subr.bf16.mxu0 %v1202
  %1303 = vmatpush1.bf16.msra.mxu0 %v1201
  %1304 = vmatprep.subr.bf16.mxu0 %v1206
  %1305 = vmatpush1.bf16.msra.mxu0 %v1205
  %1306 = vmatprep.subr.bf16.mxu0 %v1210
  %1307 = vmatpush1.bf16.msra.mxu0 %v1209
  %1308 = vmatprep.subr.bf16.mxu0 %v1214
  %1309 = vmatpush1.bf16.msra.mxu0 %v1213
  %1310 = vmatprep.subr.bf16.mxu0 %v1218
  %1311 = vmatpush1.bf16.msra.mxu0 %v1217
  %1312 = vmatprep.subr.bf16.mxu0 %v1222
  %1313 = vmatpush1.bf16.msra.mxu0 %v1221
  %1314 = vmatprep.subr.bf16.mxu0 %v1226
  %1315 = vmatpush1.bf16.msra.mxu0 %v1225
  %1316 = vmatprep.subr.bf16.mxu0 0
  %1317 = vmatpush1.bf16.msra.mxu0 0
  %1318 = vmatprep.subr.bf16.mxu0 0
  %1319 = vmatpush1.bf16.msra.mxu0 0
  %1320 = vmatprep.subr.bf16.mxu0 0
  %1321 = vmatpush1.bf16.msra.mxu0 0
  %1322 = vmatprep.subr.bf16.mxu0 0
  %1323 = vmatpush1.bf16.msra.mxu0 0
  %1324 = vmatprep.subr.bf16.mxu0 0
  %1325 = vmatpush1.bf16.msra.mxu0 0
  %1326 = vmatprep.subr.bf16.mxu0 0
  %1327 = vmatpush1.bf16.msra.mxu0 0
  %1328 = vmatprep.subr.bf16.mxu0 0
  %1329 = vmatpush1.bf16.msra.mxu0 0
  %1330 = vmatprep.subr.bf16.mxu0 0
  %1331 = vmatpush1.bf16.msra.mxu0 0
  %1332 = vmatprep.mubr.bf16.mxu0 0
  %1333 = vmatmul.mubr.bf16.gmra.mrb[0].mxu0 %v495
  %v1334 = vpop.f32.mrb[0].mxu0
  %v1335 = vadd.f32 0.0, %v1334
  %v1336 = vpop.f32.mrb[0].mxu0
  %v1337 = vadd.f32 0.0, %v1336
  %v1338 = vpop.f32.mrb[0].mxu0
  %v1339 = vpop.f32.mrb[0].mxu0
  %1340 = vdwg.mxu0
  %v1341 = vadd.f32 %v1063, %v1294
  %v1342 = vadd.f32 %v1064, %v1296
  %v1343 = vadd.f32 %v1065, %v1335
  %v1344 = vadd.f32 %v1066, %v1337
  %v1345 = vxor.u32 %v1341, 2147483648
  %v1346 = vxor.u32 %v1342, 2147483648
  %v1347 = vxor.u32 %v1343, 2147483648
  %v1348 = vmul.f32 %v1345, 1.442695
  %v1349 = vpow.pop %v1348
  %v1350 = vmul.f32 %v1346, 1.442695
  %v1351 = vpow.pop %v1350
  %v1352 = vmul.f32 %v1347, 1.442695
  %v1353 = vpow.pop %v1352
  %v1354 = vadd.f32 %v1349, 1.0
  %v1355 = vadd.f32 %v1351, 1.0
  %v1356 = vadd.f32 %v1353, 1.0
  %v1357 = vrcp.pop %v1354
  %v1358 = vmul.f32 1.0, %v1357
  %v1359 = vrcp.pop %v1355
  %v1360 = vmul.f32 1.0, %v1359
  %v1361 = vrcp.pop %v1356
  %v1362 = vmul.f32 1.0, %v1361
  %v1363 = vtanh.pop %v1344
  %v1364 = vmul.f32 %v1360, %v492
  %v1365 = vmul.f32 %v1358, %v1363
  %v1366 = vadd.f32 %v1364, %v1365
  %v1367 = vtanh.pop %v1366
  %v1368 = vmul.f32 %v1362, %v1367
  %v1369 = vpack.c.bf16 %v1368, %v1368
  %1370 = vmatprep.subr.bf16.mxu0 %v625
  %1371 = vmatpush1.bf16.msra.mxu0 %v624
  %1372 = vmatprep.subr.bf16.mxu0 %v629
  %1373 = vmatpush1.bf16.msra.mxu0 %v628
  %1374 = vmatprep.subr.bf16.mxu0 %v633
  %1375 = vmatpush1.bf16.msra.mxu0 %v632
  %1376 = vmatprep.subr.bf16.mxu0 %v637
  %1377 = vmatpush1.bf16.msra.mxu0 %v636
  %1378 = vmatprep.subr.bf16.mxu0 %v641
  %1379 = vmatpush1.bf16.msra.mxu0 %v640
  %1380 = vmatprep.subr.bf16.mxu0 %v645
  %1381 = vmatpush1.bf16.msra.mxu0 %v644
  %1382 = vmatprep.subr.bf16.mxu0 %v649
  %1383 = vmatpush1.bf16.msra.mxu0 %v648
  %1384 = vmatprep.subr.bf16.mxu0 %v653
  %1385 = vmatpush1.bf16.msra.mxu0 %v652
  %1386 = vmatprep.subr.bf16.mxu0 0
  %1387 = vmatpush1.bf16.msra.mxu0 0
  %1388 = vmatprep.subr.bf16.mxu0 0
  %1389 = vmatpush1.bf16.msra.mxu0 0
  %1390 = vmatprep.subr.bf16.mxu0 0
  %1391 = vmatpush1.bf16.msra.mxu0 0
  %1392 = vmatprep.subr.bf16.mxu0 0
  %1393 = vmatpush1.bf16.msra.mxu0 0
  %1394 = vmatprep.subr.bf16.mxu0 0
  %1395 = vmatpush1.bf16.msra.mxu0 0
  %1396 = vmatprep.subr.bf16.mxu0 0
  %1397 = vmatpush1.bf16.msra.mxu0 0
  %1398 = vmatprep.subr.bf16.mxu0 0
  %1399 = vmatpush1.bf16.msra.mxu0 0
  %1400 = vmatprep.subr.bf16.mxu0 0
  %1401 = vmatpush1.bf16.msra.mxu0 0
  %1402 = vmatprep.mubr.bf16.mxu0 0
  %1403 = vmatmul.mubr.bf16.gmra.mrb[0].mxu0 %v1369
  %v1404 = vpop.f32.mrb[0].mxu0
  %v1405 = vadd.f32 %v1013, %v1404
  %v1406 = vpop.f32.mrb[0].mxu0
  %v1407 = vadd.f32 %v1015, %v1406
  %v1408 = vpop.f32.mrb[0].mxu0
  %v1409 = vpop.f32.mrb[0].mxu0
  %1410 = vdwg.mxu0
  %1411 = vmatprep.subr.bf16.mxu0 %v627
  %1412 = vmatpush1.bf16.msra.mxu0 %v626
  %1413 = vmatprep.subr.bf16.mxu0 %v631
  %1414 = vmatpush1.bf16.msra.mxu0 %v630
  %1415 = vmatprep.subr.bf16.mxu0 %v635
  %1416 = vmatpush1.bf16.msra.mxu0 %v634
  %1417 = vmatprep.subr.bf16.mxu0 %v639
  %1418 = vmatpush1.bf16.msra.mxu0 %v638
  %1419 = vmatprep.subr.bf16.mxu0 %v643
  %1420 = vmatpush1.bf16.msra.mxu0 %v642
  %1421 = vmatprep.subr.bf16.mxu0 %v647
  %1422 = vmatpush1.bf16.msra.mxu0 %v646
  %1423 = vmatprep.subr.bf16.mxu0 %v651
  %1424 = vmatpush1.bf16.msra.mxu0 %v650
  %1425 = vmatprep.subr.bf16.mxu0 %v655
  %1426 = vmatpush1.bf16.msra.mxu0 %v654
  %1427 = vmatprep.subr.bf16.mxu0 0
  %1428 = vmatpush1.bf16.msra.mxu0 0
  %1429 = vmatprep.subr.bf16.mxu0 0
  %1430 = vmatpush1.bf16.msra.mxu0 0
  %1431 = vmatprep.subr.bf16.mxu0 0
  %1432 = vmatpush1.bf16.msra.mxu0 0
  %1433 = vmatprep.subr.bf16.mxu0 0
  %1434 = vmatpush1.bf16.msra.mxu0 0
  %1435 = vmatprep.subr.bf16.mxu0 0
  %1436 = vmatpush1.bf16.msra.mxu0 0
  %1437 = vmatprep.subr.bf16.mxu0 0
  %1438 = vmatpush1.bf16.msra.mxu0 0
  %1439 = vmatprep.subr.bf16.mxu0 0
  %1440 = vmatpush1.bf16.msra.mxu0 0
  %1441 = vmatprep.subr.bf16.mxu0 0
  %1442 = vmatpush1.bf16.msra.mxu0 0
  %1443 = vmatprep.mubr.bf16.mxu0 0
  %1444 = vmatmul.mubr.bf16.gmra.mrb[0].mxu0 %v1369
  %v1445 = vpop.f32.mrb[0].mxu0
  %v1446 = vadd.f32 %v1054, %v1445
  %v1447 = vpop.f32.mrb[0].mxu0
  %v1448 = vadd.f32 %v1056, %v1447
  %v1449 = vpop.f32.mrb[0].mxu0
  %v1450 = vpop.f32.mrb[0].mxu0
  %1451 = vdwg.mxu0
  %v1452 = vadd.f32 %v1405, %v459
  %v1453 = vadd.f32 %v1407, %v463
  %v1454 = vadd.f32 %v1446, %v467
  %v1455 = vadd.f32 %v1448, %v471
  %v1456 = vxor.u32 %v1452, 2147483648
  %v1457 = vxor.u32 %v1453, 2147483648
  %v1458 = vxor.u32 %v1454, 2147483648
  %v1459 = vmul.f32 %v1456, 1.442695
  %v1460 = vpow.pop %v1459
  %v1461 = vmul.f32 %v1457, 1.442695
  %v1462 = vpow.pop %v1461
  %v1463 = vmul.f32 %v1458, 1.442695
  %v1464 = vpow.pop %v1463
  %v1465 = vadd.f32 %v1460, 1.0
  %v1466 = vadd.f32 %v1462, 1.0
  %v1467 = vadd.f32 %v1464, 1.0
  %v1468 = vrcp.pop %v1465
  %v1469 = vmul.f32 1.0, %v1468
  %v1470 = vrcp.pop %v1466
  %v1471 = vmul.f32 1.0, %v1470
  %v1472 = vrcp.pop %v1467
  %v1473 = vmul.f32 1.0, %v1472
  %v1474 = vtanh.pop %v1455
  %v1475 = vmul.f32 %v1471, %v782
  %v1476 = vmul.f32 %v1469, %v1474
  %v1477 = vadd.f32 %v1475, %v1476
  %v1478 = vtanh.pop %v1477
  %v1479 = vmul.f32 %v1473, %v1478
  %v1480 = vpack.c.bf16 %v1479, %v1479
  %1481 = vmatprep.subr.bf16.mxu0 %v915
  %1482 = vmatpush1.bf16.msra.mxu0 %v914
  %1483 = vmatprep.subr.bf16.mxu0 %v919
  %1484 = vmatpush1.bf16.msra.mxu0 %v918
  %1485 = vmatprep.subr.bf16.mxu0 %v923
  %1486 = vmatpush1.bf16.msra.mxu0 %v922
  %1487 = vmatprep.subr.bf16.mxu0 %v927
  %1488 = vmatpush1.bf16.msra.mxu0 %v926
  %1489 = vmatprep.subr.bf16.mxu0 %v931
  %1490 = vmatpush1.bf16.msra.mxu0 %v930
  %1491 = vmatprep.subr.bf16.mxu0 %v935
  %1492 = vmatpush1.bf16.msra.mxu0 %v934
  %1493 = vmatprep.subr.bf16.mxu0 %v939
  %1494 = vmatpush1.bf16.msra.mxu0 %v938
  %1495 = vmatprep.subr.bf16.mxu0 %v943
  %1496 = vmatpush1.bf16.msra.mxu0 %v942
  %1497 = vmatprep.subr.bf16.mxu0 0
  %1498 = vmatpush1.bf16.msra.mxu0 0
  %1499 = vmatprep.subr.bf16.mxu0 0
  %1500 = vmatpush1.bf16.msra.mxu0 0
  %1501 = vmatprep.subr.bf16.mxu0 0
  %1502 = vmatpush1.bf16.msra.mxu0 0
  %1503 = vmatprep.subr.bf16.mxu0 0
  %1504 = vmatpush1.bf16.msra.mxu0 0
  %1505 = vmatprep.subr.bf16.mxu0 0
  %1506 = vmatpush1.bf16.msra.mxu0 0
  %1507 = vmatprep.subr.bf16.mxu0 0
  %1508 = vmatpush1.bf16.msra.mxu0 0
  %1509 = vmatprep.subr.bf16.mxu0 0
  %1510 = vmatpush1.bf16.msra.mxu0 0
  %1511 = vmatprep.subr.bf16.mxu0 0
  %1512 = vmatpush1.bf16.msra.mxu0 0
  %1513 = vmatprep.mubr.bf16.mxu0 0
  %1514 = vmatmul.mubr.bf16.gmra.mrb[0].mxu0 %v1480
  %v1515 = vpop.f32.mrb[0].mxu0
  %v1516 = vadd.f32 0.0, %v1515
  %v1517 = vpop.f32.mrb[0].mxu0
  %v1518 = vadd.f32 0.0, %v1517
  %v1519 = vpop.f32.mrb[0].mxu0
  %v1520 = vpop.f32.mrb[0].mxu0
  %1521 = vdwg.mxu0
  %1522 = vmatprep.subr.bf16.mxu0 %v917
  %1523 = vmatpush1.bf16.msra.mxu0 %v916
  %1524 = vmatprep.subr.bf16.mxu0 %v921
  %1525 = vmatpush1.bf16.msra.mxu0 %v920
  %1526 = vmatprep.subr.bf16.mxu0 %v925
  %1527 = vmatpush1.bf16.msra.mxu0 %v924
  %1528 = vmatprep.subr.bf16.mxu0 %v929
  %1529 = vmatpush1.bf16.msra.mxu0 %v928
  %1530 = vmatprep.subr.bf16.mxu0 %v933
  %1531 = vmatpush1.bf16.msra.mxu0 %v932
  %1532 = vmatprep.subr.bf16.mxu0 %v937
  %1533 = vmatpush1.bf16.msra.mxu0 %v936
  %1534 = vmatprep.subr.bf16.mxu0 %v941
  %1535 = vmatpush1.bf16.msra.mxu0 %v940
  %1536 = vmatprep.subr.bf16.mxu0 %v945
  %1537 = vmatpush1.bf16.msra.mxu0 %v944
  %1538 = vmatprep.subr.bf16.mxu0 0
  %1539 = vmatpush1.bf16.msra.mxu0 0
  %1540 = vmatprep.subr.bf16.mxu0 0
  %1541 = vmatpush1.bf16.msra.mxu0 0
  %1542 = vmatprep.subr.bf16.mxu0 0
  %1543 = vmatpush1.bf16.msra.mxu0 0
  %1544 = vmatprep.subr.bf16.mxu0 0
  %1545 = vmatpush1.bf16.msra.mxu0 0
  %1546 = vmatprep.subr.bf16.mxu0 0
  %1547 = vmatpush1.bf16.msra.mxu0 0
  %1548 = vmatprep.subr.bf16.mxu0 0
  %1549 = vmatpush1.bf16.msra.mxu0 0
  %1550 = vmatprep.subr.bf16.mxu0 0
  %1551 = vmatpush1.bf16.msra.mxu0 0
  %1552 = vmatprep.subr.bf16.mxu0 0
  %1553 = vmatpush1.bf16.msra.mxu0 0
  %1554 = vmatprep.mubr.bf16.mxu0 0
  %1555 = vmatmul.mubr.bf16.gmra.mrb[0].mxu0 %v1480
  %v1556 = vpop.f32.mrb[0].mxu0
  %v1557 = vadd.f32 0.0, %v1556
  %v1558 = vpop.f32.mrb[0].mxu0
  %v1559 = vadd.f32 0.0, %v1558
  %v1560 = vpop.f32.mrb[0].mxu0
  %v1561 = vpop.f32.mrb[0].mxu0
  %1562 = vdwg.mxu0
  %s1563 = smul.u32 2, 4
  %s1564 = smul.addr %s1563, 8
  %s1565 = scalar_lea.vmem [#allocation2], %s1564
  %v1566 = vld [vmem:[%s1565] sm:$0xff]
  %v1567 = vld [vmem:[%s1565 + $0x8] sm:$0xff]
  %v1568 = vld [vmem:[%s1565 + $0x10] sm:$0xff]
  %v1569 = vld [vmem:[%s1565 + $0x18] sm:$0xff]
  %1570 = vmatprep.subr.bf16.mxu0 %v1196
  %1571 = vmatpush1.bf16.msra.mxu0 %v1195
  %1572 = vmatprep.subr.bf16.mxu0 %v1200
  %1573 = vmatpush1.bf16.msra.mxu0 %v1199
  %1574 = vmatprep.subr.bf16.mxu0 %v1204
  %1575 = vmatpush1.bf16.msra.mxu0 %v1203
  %1576 = vmatprep.subr.bf16.mxu0 %v1208
  %1577 = vmatpush1.bf16.msra.mxu0 %v1207
  %1578 = vmatprep.subr.bf16.mxu0 %v1212
  %1579 = vmatpush1.bf16.msra.mxu0 %v1211
  %1580 = vmatprep.subr.bf16.mxu0 %v1216
  %1581 = vmatpush1.bf16.msra.mxu0 %v1215
  %1582 = vmatprep.subr.bf16.mxu0 %v1220
  %1583 = vmatpush1.bf16.msra.mxu0 %v1219
  %1584 = vmatprep.subr.bf16.mxu0 %v1224
  %1585 = vmatpush1.bf16.msra.mxu0 %v1223
  %1586 = vmatprep.subr.bf16.mxu0 0
  %1587 = vmatpush1.bf16.msra.mxu0 0
  %1588 = vmatprep.subr.bf16.mxu0 0
  %1589 = vmatpush1.bf16.msra.mxu0 0
  %1590 = vmatprep.subr.bf16.mxu0 0
  %1591 = vmatpush1.bf16.msra.mxu0 0
  %1592 = vmatprep.subr.bf16.mxu0 0
  %1593 = vmatpush1.bf16.msra.mxu0 0
  %1594 = vmatprep.subr.bf16.mxu0 0
  %1595 = vmatpush1.bf16.msra.mxu0 0
  %1596 = vmatprep.subr.bf16.mxu0 0
  %1597 = vmatpush1.bf16.msra.mxu0 0
  %1598 = vmatprep.subr.bf16.mxu0 0
  %1599 = vmatpush1.bf16.msra.mxu0 0
  %1600 = vmatprep.subr.bf16.mxu0 0
  %1601 = vmatpush1.bf16.msra.mxu0 0
  %1602 = vmatprep.mubr.bf16.mxu0 0
  %1603 = vmatmul.mubr.bf16.gmra.mrb[0].mxu0 %v1369
  %v1604 = vpop.f32.mrb[0].mxu0
  %v1605 = vadd.f32 0.0, %v1604
  %v1606 = vpop.f32.mrb[0].mxu0
  %v1607 = vadd.f32 0.0, %v1606
  %v1608 = vpop.f32.mrb[0].mxu0
  %v1609 = vpop.f32.mrb[0].mxu0
  %1610 = vdwg.mxu0
  %1611 = vmatprep.subr.bf16.mxu0 %v1198
  %1612 = vmatpush1.bf16.msra.mxu0 %v1197
  %1613 = vmatprep.subr.bf16.mxu0 %v1202
  %1614 = vmatpush1.bf16.msra.mxu0 %v1201
  %1615 = vmatprep.subr.bf16.mxu0 %v1206
  %1616 = vmatpush1.bf16.msra.mxu0 %v1205
  %1617 = vmatprep.subr.bf16.mxu0 %v1210
  %1618 = vmatpush1.bf16.msra.mxu0 %v1209
  %1619 = vmatprep.subr.bf16.mxu0 %v1214
  %1620 = vmatpush1.bf16.msra.mxu0 %v1213
  %1621 = vmatprep.subr.bf16.mxu0 %v1218
  %1622 = vmatpush1.bf16.msra.mxu0 %v1217
  %1623 = vmatprep.subr.bf16.mxu0 %v1222
  %1624 = vmatpush1.bf16.msra.mxu0 %v1221
  %1625 = vmatprep.subr.bf16.mxu0 %v1226
  %1626 = vmatpush1.bf16.msra.mxu0 %v1225
  %1627 = vmatprep.subr.bf16.mxu0 0
  %1628 = vmatpush1.bf16.msra.mxu0 0
  %1629 = vmatprep.subr.bf16.mxu0 0
  %1630 = vmatpush1.bf16.msra.mxu0 0
  %1631 = vmatprep.subr.bf16.mxu0 0
  %1632 = vmatpush1.bf16.msra.mxu0 0
  %1633 = vmatprep.subr.bf16.mxu0 0
  %1634 = vmatpush1.bf16.msra.mxu0 0
  %1635 = vmatprep.subr.bf16.mxu0 0
  %1636 = vmatpush1.bf16.msra.mxu0 0
  %1637 = vmatprep.subr.bf16.mxu0 0
  %1638 = vmatpush1.bf16.msra.mxu0 0
  %1639 = vmatprep.subr.bf16.mxu0 0
  %1640 = vmatpush1.bf16.msra.mxu0 0
  %1641 = vmatprep.subr.bf16.mxu0 0
  %1642 = vmatpush1.bf16.msra.mxu0 0
  %1643 = vmatprep.mubr.bf16.mxu0 0
  %1644 = vmatmul.mubr.bf16.gmra.mrb[0].mxu0 %v1369
  %v1645 = vpop.f32.mrb[0].mxu0
  %v1646 = vadd.f32 0.0, %v1645
  %v1647 = vpop.f32.mrb[0].mxu0
  %v1648 = vadd.f32 0.0, %v1647
  %v1649 = vpop.f32.mrb[0].mxu0
  %v1650 = vpop.f32.mrb[0].mxu0
  %1651 = vdwg.mxu0
  %v1652 = vadd.f32 %v1566, %v1605
  %v1653 = vadd.f32 %v1567, %v1607
  %v1654 = vadd.f32 %v1568, %v1646
  %v1655 = vadd.f32 %v1569, %v1648
  %v1656 = vxor.u32 %v1652, 2147483648
  %v1657 = vxor.u32 %v1653, 2147483648
  %v1658 = vxor.u32 %v1654, 2147483648
  %v1659 = vmul.f32 %v1656, 1.442695
  %v1660 = vpow.pop %v1659
  %v1661 = vmul.f32 %v1657, 1.442695
  %v1662 = vpow.pop %v1661
  %v1663 = vmul.f32 %v1658, 1.442695
  %v1664 = vpow.pop %v1663
  %v1665 = vadd.f32 %v1660, 1.0
  %v1666 = vadd.f32 %v1662, 1.0
  %v1667 = vadd.f32 %v1664, 1.0
  %v1668 = vrcp.pop %v1665
  %v1669 = vmul.f32 1.0, %v1668
  %v1670 = vrcp.pop %v1666
  %v1671 = vmul.f32 1.0, %v1670
  %v1672 = vrcp.pop %v1667
  %v1673 = vmul.f32 1.0, %v1672
  %v1674 = vtanh.pop %v1655
  %v1675 = vmul.f32 %v1671, %v1366
  %v1676 = vmul.f32 %v1669, %v1674
  %v1677 = vadd.f32 %v1675, %v1676
  %v1678 = vtanh.pop %v1677
  %v1679 = vmul.f32 %v1673, %v1678
  %v1680 = vpack.c.bf16 %v1679, %v1679
  %1681 = vmatprep.subr.bf16.mxu0 %v625
  %1682 = vmatpush1.bf16.msra.mxu0 %v624
  %1683 = vmatprep.subr.bf16.mxu0 %v629
  %1684 = vmatpush1.bf16.msra.mxu0 %v628
  %1685 = vmatprep.subr.bf16.mxu0 %v633
  %1686 = vmatpush1.bf16.msra.mxu0 %v632
  %1687 = vmatprep.subr.bf16.mxu0 %v637
  %1688 = vmatpush1.bf16.msra.mxu0 %v636
  %1689 = vmatprep.subr.bf16.mxu0 %v641
  %1690 = vmatpush1.bf16.msra.mxu0 %v640
  %1691 = vmatprep.subr.bf16.mxu0 %v645
  %1692 = vmatpush1.bf16.msra.mxu0 %v644
  %1693 = vmatprep.subr.bf16.mxu0 %v649
  %1694 = vmatpush1.bf16.msra.mxu0 %v648
  %1695 = vmatprep.subr.bf16.mxu0 %v653
  %1696 = vmatpush1.bf16.msra.mxu0 %v652
  %1697 = vmatprep.subr.bf16.mxu0 0
  %1698 = vmatpush1.bf16.msra.mxu0 0
  %1699 = vmatprep.subr.bf16.mxu0 0
  %1700 = vmatpush1.bf16.msra.mxu0 0
  %1701 = vmatprep.subr.bf16.mxu0 0
  %1702 = vmatpush1.bf16.msra.mxu0 0
  %1703 = vmatprep.subr.bf16.mxu0 0
  %1704 = vmatpush1.bf16.msra.mxu0 0
  %1705 = vmatprep.subr.bf16.mxu0 0
  %1706 = vmatpush1.bf16.msra.mxu0 0
  %1707 = vmatprep.subr.bf16.mxu0 0
  %1708 = vmatpush1.bf16.msra.mxu0 0
  %1709 = vmatprep.subr.bf16.mxu0 0
  %1710 = vmatpush1.bf16.msra.mxu0 0
  %1711 = vmatprep.subr.bf16.mxu0 0
  %1712 = vmatpush1.bf16.msra.mxu0 0
  %1713 = vmatprep.mubr.bf16.mxu0 0
  %1714 = vmatmul.mubr.bf16.gmra.mrb[0].mxu0 %v1680
  %v1715 = vpop.f32.mrb[0].mxu0
  %v1716 = vadd.f32 %v1516, %v1715
  %v1717 = vpop.f32.mrb[0].mxu0
  %v1718 = vadd.f32 %v1518, %v1717
  %v1719 = vpop.f32.mrb[0].mxu0
  %v1720 = vpop.f32.mrb[0].mxu0
  %1721 = vdwg.mxu0
  %1722 = vmatprep.subr.bf16.mxu0 %v627
  %1723 = vmatpush1.bf16.msra.mxu0 %v626
  %1724 = vmatprep.subr.bf16.mxu0 %v631
  %1725 = vmatpush1.bf16.msra.mxu0 %v630
  %1726 = vmatprep.subr.bf16.mxu0 %v635
  %1727 = vmatpush1.bf16.msra.mxu0 %v634
  %1728 = vmatprep.subr.bf16.mxu0 %v639
  %1729 = vmatpush1.bf16.msra.mxu0 %v638
  %1730 = vmatprep.subr.bf16.mxu0 %v643
  %1731 = vmatpush1.bf16.msra.mxu0 %v642
  %1732 = vmatprep.subr.bf16.mxu0 %v647
  %1733 = vmatpush1.bf16.msra.mxu0 %v646
  %1734 = vmatprep.subr.bf16.mxu0 %v651
  %1735 = vmatpush1.bf16.msra.mxu0 %v650
  %1736 = vmatprep.subr.bf16.mxu0 %v655
  %1737 = vmatpush1.bf16.msra.mxu0 %v654
  %1738 = vmatprep.subr.bf16.mxu0 0
  %1739 = vmatpush1.bf16.msra.mxu0 0
  %1740 = vmatprep.subr.bf16.mxu0 0
  %1741 = vmatpush1.bf16.msra.mxu0 0
  %1742 = vmatprep.subr.bf16.mxu0 0
  %1743 = vmatpush1.bf16.msra.mxu0 0
  %1744 = vmatprep.subr.bf16.mxu0 0
  %1745 = vmatpush1.bf16.msra.mxu0 0
  %1746 = vmatprep.subr.bf16.mxu0 0
  %1747 = vmatpush1.bf16.msra.mxu0 0
  %1748 = vmatprep.subr.bf16.mxu0 0
  %1749 = vmatpush1.bf16.msra.mxu0 0
  %1750 = vmatprep.subr.bf16.mxu0 0
  %1751 = vmatpush1.bf16.msra.mxu0 0
  %1752 = vmatprep.subr.bf16.mxu0 0
  %1753 = vmatpush1.bf16.msra.mxu0 0
  %1754 = vmatprep.mubr.bf16.mxu0 0
  %1755 = vmatmul.mubr.bf16.gmra.mrb[0].mxu0 %v1680
  %v1756 = vpop.f32.mrb[0].mxu0
  %v1757 = vadd.f32 %v1557, %v1756
  %v1758 = vpop.f32.mrb[0].mxu0
  %v1759 = vadd.f32 %v1559, %v1758
  %v1760 = vpop.f32.mrb[0].mxu0
  %v1761 = vpop.f32.mrb[0].mxu0
  %1762 = vdwg.mxu0
  %v1763 = vadd.f32 %v1716, %v459
  %v1764 = vadd.f32 %v1718, %v463
  %v1765 = vadd.f32 %v1757, %v467
  %v1766 = vadd.f32 %v1759, %v471
  %v1767 = vxor.u32 %v1763, 2147483648
  %v1768 = vxor.u32 %v1764, 2147483648
  %v1769 = vxor.u32 %v1765, 2147483648
  %v1770 = vmul.f32 %v1767, 1.442695
  %v1771 = vpow.pop %v1770
  %v1772 = vmul.f32 %v1768, 1.442695
  %v1773 = vpow.pop %v1772
  %v1774 = vmul.f32 %v1769, 1.442695
  %v1775 = vpow.pop %v1774
  %v1776 = vadd.f32 %v1771, 1.0
  %v1777 = vadd.f32 %v1773, 1.0
  %v1778 = vadd.f32 %v1775, 1.0
  %v1779 = vrcp.pop %v1776
  %v1780 = vmul.f32 1.0, %v1779
  %v1781 = vrcp.pop %v1777
  %v1782 = vmul.f32 1.0, %v1781
  %v1783 = vrcp.pop %v1778
  %v1784 = vmul.f32 1.0, %v1783
  %v1785 = vtanh.pop %v1766
  %v1786 = vmul.f32 %v1782, %v1477
  %v1787 = vmul.f32 %v1780, %v1785
  %v1788 = vadd.f32 %v1786, %v1787
  %v1789 = vtanh.pop %v1788
  %v1790 = vmul.f32 %v1784, %v1789
  %v1791 = vpack.c.bf16 %v1790, %v1790
  %1792 = vmatprep.subr.bf16.mxu0 %v915
  %1793 = vmatpush1.bf16.msra.mxu0 %v914
  %1794 = vmatprep.subr.bf16.mxu0 %v919
  %1795 = vmatpush1.bf16.msra.mxu0 %v918
  %1796 = vmatprep.subr.bf16.mxu0 %v923
  %1797 = vmatpush1.bf16.msra.mxu0 %v922
  %1798 = vmatprep.subr.bf16.mxu0 %v927
  %1799 = vmatpush1.bf16.msra.mxu0 %v926
  %1800 = vmatprep.subr.bf16.mxu0 %v931
  %1801 = vmatpush1.bf16.msra.mxu0 %v930
  %1802 = vmatprep.subr.bf16.mxu0 %v935
  %1803 = vmatpush1.bf16.msra.mxu0 %v934
  %1804 = vmatprep.subr.bf16.mxu0 %v939
  %1805 = vmatpush1.bf16.msra.mxu0 %v938
  %1806 = vmatprep.subr.bf16.mxu0 %v943
  %1807 = vmatpush1.bf16.msra.mxu0 %v942
  %1808 = vmatprep.subr.bf16.mxu0 0
  %1809 = vmatpush1.bf16.msra.mxu0 0
  %1810 = vmatprep.subr.bf16.mxu0 0
  %1811 = vmatpush1.bf16.msra.mxu0 0
  %1812 = vmatprep.subr.bf16.mxu0 0
  %1813 = vmatpush1.bf16.msra.mxu0 0
  %1814 = vmatprep.subr.bf16.mxu0 0
  %1815 = vmatpush1.bf16.msra.mxu0 0
  %1816 = vmatprep.subr.bf16.mxu0 0
  %1817 = vmatpush1.bf16.msra.mxu0 0
  %1818 = vmatprep.subr.bf16.mxu0 0
  %1819 = vmatpush1.bf16.msra.mxu0 0
  %1820 = vmatprep.subr.bf16.mxu0 0
  %1821 = vmatpush1.bf16.msra.mxu0 0
  %1822 = vmatprep.subr.bf16.mxu0 0
  %1823 = vmatpush1.bf16.msra.mxu0 0
  %1824 = vmatprep.mubr.bf16.mxu0 0
  %1825 = vmatmul.mubr.bf16.gmra.mrb[0].mxu0 %v1791
  %v1826 = vpop.f32.mrb[0].mxu0
  %v1827 = vadd.f32 0.0, %v1826
  %v1828 = vpop.f32.mrb[0].mxu0
  %v1829 = vadd.f32 0.0, %v1828
  %v1830 = vpop.f32.mrb[0].mxu0
  %v1831 = vpop.f32.mrb[0].mxu0
  %1832 = vdwg.mxu0
  %1833 = vmatprep.subr.bf16.mxu0 %v917
  %1834 = vmatpush1.bf16.msra.mxu0 %v916
  %1835 = vmatprep.subr.bf16.mxu0 %v921
  %1836 = vmatpush1.bf16.msra.mxu0 %v920
  %1837 = vmatprep.subr.bf16.mxu0 %v925
  %1838 = vmatpush1.bf16.msra.mxu0 %v924
  %1839 = vmatprep.subr.bf16.mxu0 %v929
  %1840 = vmatpush1.bf16.msra.mxu0 %v928
  %1841 = vmatprep.subr.bf16.mxu0 %v933
  %1842 = vmatpush1.bf16.msra.mxu0 %v932
  %1843 = vmatprep.subr.bf16.mxu0 %v937
  %1844 = vmatpush1.bf16.msra.mxu0 %v936
  %1845 = vmatprep.subr.bf16.mxu0 %v941
  %1846 = vmatpush1.bf16.msra.mxu0 %v940
  %1847 = vmatprep.subr.bf16.mxu0 %v945
  %1848 = vmatpush1.bf16.msra.mxu0 %v944
  %1849 = vmatprep.subr.bf16.mxu0 0
  %1850 = vmatpush1.bf16.msra.mxu0 0
  %1851 = vmatprep.subr.bf16.mxu0 0
  %1852 = vmatpush1.bf16.msra.mxu0 0
  %1853 = vmatprep.subr.bf16.mxu0 0
  %1854 = vmatpush1.bf16.msra.mxu0 0
  %1855 = vmatprep.subr.bf16.mxu0 0
  %1856 = vmatpush1.bf16.msra.mxu0 0
  %1857 = vmatprep.subr.bf16.mxu0 0
  %1858 = vmatpush1.bf16.msra.mxu0 0
  %1859 = vmatprep.subr.bf16.mxu0 0
  %1860 = vmatpush1.bf16.msra.mxu0 0
  %1861 = vmatprep.subr.bf16.mxu0 0
  %1862 = vmatpush1.bf16.msra.mxu0 0
  %1863 = vmatprep.subr.bf16.mxu0 0
  %1864 = vmatpush1.bf16.msra.mxu0 0
  %1865 = vmatprep.mubr.bf16.mxu0 0
  %1866 = vmatmul.mubr.bf16.gmra.mrb[0].mxu0 %v1791
  %v1867 = vpop.f32.mrb[0].mxu0
  %v1868 = vadd.f32 0.0, %v1867
  %v1869 = vpop.f32.mrb[0].mxu0
  %v1870 = vadd.f32 0.0, %v1869
  %v1871 = vpop.f32.mrb[0].mxu0
  %v1872 = vpop.f32.mrb[0].mxu0
  %1873 = vdwg.mxu0
  %s1874 = smul.u32 3, 4
  %s1875 = smul.addr %s1874, 8
  %s1876 = scalar_lea.vmem [#allocation2], %s1875
  %v1877 = vld [vmem:[%s1876] sm:$0xff]
  %v1878 = vld [vmem:[%s1876 + $0x8] sm:$0xff]
  %v1879 = vld [vmem:[%s1876 + $0x10] sm:$0xff]
  %v1880 = vld [vmem:[%s1876 + $0x18] sm:$0xff]
  %1881 = vmatprep.subr.bf16.mxu0 %v1196
  %1882 = vmatpush1.bf16.msra.mxu0 %v1195
  %1883 = vmatprep.subr.bf16.mxu0 %v1200
  %1884 = vmatpush1.bf16.msra.mxu0 %v1199
  %1885 = vmatprep.subr.bf16.mxu0 %v1204
  %1886 = vmatpush1.bf16.msra.mxu0 %v1203
  %1887 = vmatprep.subr.bf16.mxu0 %v1208
  %1888 = vmatpush1.bf16.msra.mxu0 %v1207
  %1889 = vmatprep.subr.bf16.mxu0 %v1212
  %1890 = vmatpush1.bf16.msra.mxu0 %v1211
  %1891 = vmatprep.subr.bf16.mxu0 %v1216
  %1892 = vmatpush1.bf16.msra.mxu0 %v1215
  %1893 = vmatprep.subr.bf16.mxu0 %v1220
  %1894 = vmatpush1.bf16.msra.mxu0 %v1219
  %1895 = vmatprep.subr.bf16.mxu0 %v1224
  %1896 = vmatpush1.bf16.msra.mxu0 %v1223
  %1897 = vmatprep.subr.bf16.mxu0 0
  %1898 = vmatpush1.bf16.msra.mxu0 0
  %1899 = vmatprep.subr.bf16.mxu0 0
  %1900 = vmatpush1.bf16.msra.mxu0 0
  %1901 = vmatprep.subr.bf16.mxu0 0
  %1902 = vmatpush1.bf16.msra.mxu0 0
  %1903 = vmatprep.subr.bf16.mxu0 0
  %1904 = vmatpush1.bf16.msra.mxu0 0
  %1905 = vmatprep.subr.bf16.mxu0 0
  %1906 = vmatpush1.bf16.msra.mxu0 0
  %1907 = vmatprep.subr.bf16.mxu0 0
  %1908 = vmatpush1.bf16.msra.mxu0 0
  %1909 = vmatprep.subr.bf16.mxu0 0
  %1910 = vmatpush1.bf16.msra.mxu0 0
  %1911 = vmatprep.subr.bf16.mxu0 0
  %1912 = vmatpush1.bf16.msra.mxu0 0
  %1913 = vmatprep.mubr.bf16.mxu0 0
  %1914 = vmatmul.mubr.bf16.gmra.mrb[0].mxu0 %v1680
  %v1915 = vpop.f32.mrb[0].mxu0
  %v1916 = vadd.f32 0.0, %v1915
  %v1917 = vpop.f32.mrb[0].mxu0
  %v1918 = vadd.f32 0.0, %v1917
  %v1919 = vpop.f32.mrb[0].mxu0
  %v1920 = vpop.f32.mrb[0].mxu0
  %1921 = vdwg.mxu0
  %1922 = vmatprep.subr.bf16.mxu0 %v1198
  %1923 = vmatpush1.bf16.msra.mxu0 %v1197
  %1924 = vmatprep.subr.bf16.mxu0 %v1202
  %1925 = vmatpush1.bf16.msra.mxu0 %v1201
  %1926 = vmatprep.subr.bf16.mxu0 %v1206
  %1927 = vmatpush1.bf16.msra.mxu0 %v1205
  %1928 = vmatprep.subr.bf16.mxu0 %v1210
  %1929 = vmatpush1.bf16.msra.mxu0 %v1209
  %1930 = vmatprep.subr.bf16.mxu0 %v1214
  %1931 = vmatpush1.bf16.msra.mxu0 %v1213
  %1932 = vmatprep.subr.bf16.mxu0 %v1218
  %1933 = vmatpush1.bf16.msra.mxu0 %v1217
  %1934 = vmatprep.subr.bf16.mxu0 %v1222
  %1935 = vmatpush1.bf16.msra.mxu0 %v1221
  %1936 = vmatprep.subr.bf16.mxu0 %v1226
  %1937 = vmatpush1.bf16.msra.mxu0 %v1225
  %1938 = vmatprep.subr.bf16.mxu0 0
  %1939 = vmatpush1.bf16.msra.mxu0 0
  %1940 = vmatprep.subr.bf16.mxu0 0
  %1941 = vmatpush1.bf16.msra.mxu0 0
  %1942 = vmatprep.subr.bf16.mxu0 0
  %1943 = vmatpush1.bf16.msra.mxu0 0
  %1944 = vmatprep.subr.bf16.mxu0 0
  %1945 = vmatpush1.bf16.msra.mxu0 0
  %1946 = vmatprep.subr.bf16.mxu0 0
  %1947 = vmatpush1.bf16.msra.mxu0 0
  %1948 = vmatprep.subr.bf16.mxu0 0
  %1949 = vmatpush1.bf16.msra.mxu0 0
  %1950 = vmatprep.subr.bf16.mxu0 0
  %1951 = vmatpush1.bf16.msra.mxu0 0
  %1952 = vmatprep.subr.bf16.mxu0 0
  %1953 = vmatpush1.bf16.msra.mxu0 0
  %1954 = vmatprep.mubr.bf16.mxu0 0
  %1955 = vmatmul.mubr.bf16.gmra.mrb[0].mxu0 %v1680
  %v1956 = vpop.f32.mrb[0].mxu0
  %v1957 = vadd.f32 0.0, %v1956
  %v1958 = vpop.f32.mrb[0].mxu0
  %v1959 = vadd.f32 0.0, %v1958
  %v1960 = vpop.f32.mrb[0].mxu0
  %v1961 = vpop.f32.mrb[0].mxu0
  %1962 = vdwg.mxu0
  %v1963 = vadd.f32 %v1877, %v1916
  %v1964 = vadd.f32 %v1878, %v1918
  %v1965 = vadd.f32 %v1879, %v1957
  %v1966 = vadd.f32 %v1880, %v1959
  %v1967 = vxor.u32 %v1963, 2147483648
  %v1968 = vxor.u32 %v1964, 2147483648
  %v1969 = vxor.u32 %v1965, 2147483648
  %v1970 = vmul.f32 %v1967, 1.442695
  %v1971 = vpow.pop %v1970
  %v1972 = vmul.f32 %v1968, 1.442695
  %v1973 = vpow.pop %v1972
  %v1974 = vmul.f32 %v1969, 1.442695
  %v1975 = vpow.pop %v1974
  %v1976 = vadd.f32 %v1971, 1.0
  %v1977 = vadd.f32 %v1973, 1.0
  %v1978 = vadd.f32 %v1975, 1.0
  %v1979 = vrcp.pop %v1976
  %v1980 = vmul.f32 1.0, %v1979
  %v1981 = vrcp.pop %v1977
  %v1982 = vmul.f32 1.0, %v1981
  %v1983 = vrcp.pop %v1978
  %v1984 = vmul.f32 1.0, %v1983
  %v1985 = vtanh.pop %v1966
  %v1986 = vmul.f32 %v1982, %v1677
  %v1987 = vmul.f32 %v1980, %v1985
  %v1988 = vadd.f32 %v1986, %v1987
  %v1989 = vtanh.pop %v1988
  %v1990 = vmul.f32 %v1984, %v1989
  %v1991 = vpack.c.bf16 %v1990, %v1990
  %1992 = vmatprep.subr.bf16.mxu0 %v625
  %1993 = vmatpush1.bf16.msra.mxu0 %v624
  %1994 = vmatprep.subr.bf16.mxu0 %v629
  %1995 = vmatpush1.bf16.msra.mxu0 %v628
  %1996 = vmatprep.subr.bf16.mxu0 %v633
  %1997 = vmatpush1.bf16.msra.mxu0 %v632
  %1998 = vmatprep.subr.bf16.mxu0 %v637
  %1999 = vmatpush1.bf16.msra.mxu0 %v636
  %2000 = vmatprep.subr.bf16.mxu0 %v641
  %2001 = vmatpush1.bf16.msra.mxu0 %v640
  %2002 = vmatprep.subr.bf16.mxu0 %v645
  %2003 = vmatpush1.bf16.msra.mxu0 %v644
  %2004 = vmatprep.subr.bf16.mxu0 %v649
  %2005 = vmatpush1.bf16.msra.mxu0 %v648
  %2006 = vmatprep.subr.bf16.mxu0 %v653
  %2007 = vmatpush1.bf16.msra.mxu0 %v652
  %2008 = vmatprep.subr.bf16.mxu0 0
  %2009 = vmatpush1.bf16.msra.mxu0 0
  %2010 = vmatprep.subr.bf16.mxu0 0
  %2011 = vmatpush1.bf16.msra.mxu0 0
  %2012 = vmatprep.subr.bf16.mxu0 0
  %2013 = vmatpush1.bf16.msra.mxu0 0
  %2014 = vmatprep.subr.bf16.mxu0 0
  %2015 = vmatpush1.bf16.msra.mxu0 0
  %2016 = vmatprep.subr.bf16.mxu0 0
  %2017 = vmatpush1.bf16.msra.mxu0 0
  %2018 = vmatprep.subr.bf16.mxu0 0
  %2019 = vmatpush1.bf16.msra.mxu0 0
  %2020 = vmatprep.subr.bf16.mxu0 0
  %2021 = vmatpush1.bf16.msra.mxu0 0
  %2022 = vmatprep.subr.bf16.mxu0 0
  %2023 = vmatpush1.bf16.msra.mxu0 0
  %2024 = vmatprep.mubr.bf16.mxu0 0
  %2025 = vmatmul.mubr.bf16.gmra.mrb[0].mxu0 %v1991
  %v2026 = vpop.f32.mrb[0].mxu0
  %v2027 = vadd.f32 %v1827, %v2026
  %v2028 = vpop.f32.mrb[0].mxu0
  %v2029 = vadd.f32 %v1829, %v2028
  %v2030 = vpop.f32.mrb[0].mxu0
  %v2031 = vpop.f32.mrb[0].mxu0
  %2032 = vdwg.mxu0
  %2033 = vmatprep.subr.bf16.mxu0 %v627
  %2034 = vmatpush1.bf16.msra.mxu0 %v626
  %2035 = vmatprep.subr.bf16.mxu0 %v631
  %2036 = vmatpush1.bf16.msra.mxu0 %v630
  %2037 = vmatprep.subr.bf16.mxu0 %v635
  %2038 = vmatpush1.bf16.msra.mxu0 %v634
  %2039 = vmatprep.subr.bf16.mxu0 %v639
  %2040 = vmatpush1.bf16.msra.mxu0 %v638
  %2041 = vmatprep.subr.bf16.mxu0 %v643
  %2042 = vmatpush1.bf16.msra.mxu0 %v642
  %2043 = vmatprep.subr.bf16.mxu0 %v647
  %2044 = vmatpush1.bf16.msra.mxu0 %v646
  %2045 = vmatprep.subr.bf16.mxu0 %v651
  %2046 = vmatpush1.bf16.msra.mxu0 %v650
  %2047 = vmatprep.subr.bf16.mxu0 %v655
  %2048 = vmatpush1.bf16.msra.mxu0 %v654
  %2049 = vmatprep.subr.bf16.mxu0 0
  %2050 = vmatpush1.bf16.msra.mxu0 0
  %2051 = vmatprep.subr.bf16.mxu0 0
  %2052 = vmatpush1.bf16.msra.mxu0 0
  %2053 = vmatprep.subr.bf16.mxu0 0
  %2054 = vmatpush1.bf16.msra.mxu0 0
  %2055 = vmatprep.subr.bf16.mxu0 0
  %2056 = vmatpush1.bf16.msra.mxu0 0
  %2057 = vmatprep.subr.bf16.mxu0 0
  %2058 = vmatpush1.bf16.msra.mxu0 0
  %2059 = vmatprep.subr.bf16.mxu0 0
  %2060 = vmatpush1.bf16.msra.mxu0 0
  %2061 = vmatprep.subr.bf16.mxu0 0
  %2062 = vmatpush1.bf16.msra.mxu0 0
  %2063 = vmatprep.subr.bf16.mxu0 0
  %2064 = vmatpush1.bf16.msra.mxu0 0
  %2065 = vmatprep.mubr.bf16.mxu0 0
  %2066 = vmatmul.mubr.bf16.gmra.mrb[0].mxu0 %v1991
  %v2067 = vpop.f32.mrb[0].mxu0
  %v2068 = vadd.f32 %v1868, %v2067
  %v2069 = vpop.f32.mrb[0].mxu0
  %v2070 = vadd.f32 %v1870, %v2069
  %v2071 = vpop.f32.mrb[0].mxu0
  %v2072 = vpop.f32.mrb[0].mxu0
  %2073 = vdwg.mxu0
  %v2074 = vadd.f32 %v2027, %v459
  %v2075 = vadd.f32 %v2029, %v463
  %v2076 = vadd.f32 %v2068, %v467
  %v2077 = vadd.f32 %v2070, %v471
  %v2078 = vxor.u32 %v2074, 2147483648
  %v2079 = vxor.u32 %v2075, 2147483648
  %v2080 = vxor.u32 %v2076, 2147483648
  %v2081 = vmul.f32 %v2078, 1.442695
  %v2082 = vpow.pop %v2081
  %v2083 = vmul.f32 %v2079, 1.442695
  %v2084 = vpow.pop %v2083
  %v2085 = vmul.f32 %v2080, 1.442695
  %v2086 = vpow.pop %v2085
  %v2087 = vadd.f32 %v2082, 1.0
  %v2088 = vadd.f32 %v2084, 1.0
  %v2089 = vadd.f32 %v2086, 1.0
  %v2090 = vrcp.pop %v2087
  %v2091 = vmul.f32 1.0, %v2090
  %v2092 = vrcp.pop %v2088
  %v2093 = vmul.f32 1.0, %v2092
  %v2094 = vrcp.pop %v2089
  %v2095 = vmul.f32 1.0, %v2094
  %v2096 = vtanh.pop %v2077
  %v2097 = vmul.f32 %v2093, %v1788
  %v2098 = vmul.f32 %v2091, %v2096
  %v2099 = vadd.f32 %v2097, %v2098
  %v2100 = vtanh.pop %v2099
  %v2101 = vmul.f32 %v2095, %v2100
  %v2102 = vpack.c.bf16 %v2101, %v2101
  %2103 = vmatprep.subr.bf16.mxu0 %v915
  %2104 = vmatpush1.bf16.msra.mxu0 %v914
  %2105 = vmatprep.subr.bf16.mxu0 %v919
  %2106 = vmatpush1.bf16.msra.mxu0 %v918
  %2107 = vmatprep.subr.bf16.mxu0 %v923
  %2108 = vmatpush1.bf16.msra.mxu0 %v922
  %2109 = vmatprep.subr.bf16.mxu0 %v927
  %2110 = vmatpush1.bf16.msra.mxu0 %v926
  %2111 = vmatprep.subr.bf16.mxu0 %v931
  %2112 = vmatpush1.bf16.msra.mxu0 %v930
  %2113 = vmatprep.subr.bf16.mxu0 %v935
  %2114 = vmatpush1.bf16.msra.mxu0 %v934
  %2115 = vmatprep.subr.bf16.mxu0 %v939
  %2116 = vmatpush1.bf16.msra.mxu0 %v938
  %2117 = vmatprep.subr.bf16.mxu0 %v943
  %2118 = vmatpush1.bf16.msra.mxu0 %v942
  %2119 = vmatprep.subr.bf16.mxu0 0
  %2120 = vmatpush1.bf16.msra.mxu0 0
  %2121 = vmatprep.subr.bf16.mxu0 0
  %2122 = vmatpush1.bf16.msra.mxu0 0
  %2123 = vmatprep.subr.bf16.mxu0 0
  %2124 = vmatpush1.bf16.msra.mxu0 0
  %2125 = vmatprep.subr.bf16.mxu0 0
  %2126 = vmatpush1.bf16.msra.mxu0 0
  %2127 = vmatprep.subr.bf16.mxu0 0
  %2128 = vmatpush1.bf16.msra.mxu0 0
  %2129 = vmatprep.subr.bf16.mxu0 0
  %2130 = vmatpush1.bf16.msra.mxu0 0
  %2131 = vmatprep.subr.bf16.mxu0 0
  %2132 = vmatpush1.bf16.msra.mxu0 0
  %2133 = vmatprep.subr.bf16.mxu0 0
  %2134 = vmatpush1.bf16.msra.mxu0 0
  %2135 = vmatprep.mubr.bf16.mxu0 0
  %2136 = vmatmul.mubr.bf16.gmra.mrb[0].mxu0 %v2102
  %v2137 = vpop.f32.mrb[0].mxu0
  %v2138 = vadd.f32 0.0, %v2137
  %v2139 = vpop.f32.mrb[0].mxu0
  %v2140 = vadd.f32 0.0, %v2139
  %v2141 = vpop.f32.mrb[0].mxu0
  %v2142 = vpop.f32.mrb[0].mxu0
  %2143 = vdwg.mxu0
  %2144 = vmatprep.subr.bf16.mxu0 %v917
  %2145 = vmatpush1.bf16.msra.mxu0 %v916
  %2146 = vmatprep.subr.bf16.mxu0 %v921
  %2147 = vmatpush1.bf16.msra.mxu0 %v920
  %2148 = vmatprep.subr.bf16.mxu0 %v925
  %2149 = vmatpush1.bf16.msra.mxu0 %v924
  %2150 = vmatprep.subr.bf16.mxu0 %v929
  %2151 = vmatpush1.bf16.msra.mxu0 %v928
  %2152 = vmatprep.subr.bf16.mxu0 %v933
  %2153 = vmatpush1.bf16.msra.mxu0 %v932
  %2154 = vmatprep.subr.bf16.mxu0 %v937
  %2155 = vmatpush1.bf16.msra.mxu0 %v936
  %2156 = vmatprep.subr.bf16.mxu0 %v941
  %2157 = vmatpush1.bf16.msra.mxu0 %v940
  %2158 = vmatprep.subr.bf16.mxu0 %v945
  %2159 = vmatpush1.bf16.msra.mxu0 %v944
  %2160 = vmatprep.subr.bf16.mxu0 0
  %2161 = vmatpush1.bf16.msra.mxu0 0
  %2162 = vmatprep.subr.bf16.mxu0 0
  %2163 = vmatpush1.bf16.msra.mxu0 0
  %2164 = vmatprep.subr.bf16.mxu0 0
  %2165 = vmatpush1.bf16.msra.mxu0 0
  %2166 = vmatprep.subr.bf16.mxu0 0
  %2167 = vmatpush1.bf16.msra.mxu0 0
  %2168 = vmatprep.subr.bf16.mxu0 0
  %2169 = vmatpush1.bf16.msra.mxu0 0
  %2170 = vmatprep.subr.bf16.mxu0 0
  %2171 = vmatpush1.bf16.msra.mxu0 0
  %2172 = vmatprep.subr.bf16.mxu0 0
  %2173 = vmatpush1.bf16.msra.mxu0 0
  %2174 = vmatprep.subr.bf16.mxu0 0
  %2175 = vmatpush1.bf16.msra.mxu0 0
  %2176 = vmatprep.mubr.bf16.mxu0 0
  %2177 = vmatmul.mubr.bf16.gmra.mrb[0].mxu0 %v2102
  %v2178 = vpop.f32.mrb[0].mxu0
  %v2179 = vadd.f32 0.0, %v2178
  %v2180 = vpop.f32.mrb[0].mxu0
  %v2181 = vadd.f32 0.0, %v2180
  %v2182 = vpop.f32.mrb[0].mxu0
  %v2183 = vpop.f32.mrb[0].mxu0
  %2184 = vdwg.mxu0
  %s2185 = smul.u32 4, 4
  %s2186 = smul.addr %s2185, 8
  %s2187 = scalar_lea.vmem [#allocation2], %s2186
  %v2188 = vld [vmem:[%s2187] sm:$0xff]
  %v2189 = vld [vmem:[%s2187 + $0x8] sm:$0xff]
  %v2190 = vld [vmem:[%s2187 + $0x10] sm:$0xff]
  %v2191 = vld [vmem:[%s2187 + $0x18] sm:$0xff]
  %2192 = vmatprep.subr.bf16.mxu0 %v1196
  %2193 = vmatpush1.bf16.msra.mxu0 %v1195
  %2194 = vmatprep.subr.bf16.mxu0 %v1200
  %2195 = vmatpush1.bf16.msra.mxu0 %v1199
  %2196 = vmatprep.subr.bf16.mxu0 %v1204
  %2197 = vmatpush1.bf16.msra.mxu0 %v1203
  %2198 = vmatprep.subr.bf16.mxu0 %v1208
  %2199 = vmatpush1.bf16.msra.mxu0 %v1207
  %2200 = vmatprep.subr.bf16.mxu0 %v1212
  %2201 = vmatpush1.bf16.msra.mxu0 %v1211
  %2202 = vmatprep.subr.bf16.mxu0 %v1216
  %2203 = vmatpush1.bf16.msra.mxu0 %v1215
  %2204 = vmatprep.subr.bf16.mxu0 %v1220
  %2205 = vmatpush1.bf16.msra.mxu0 %v1219
  %2206 = vmatprep.subr.bf16.mxu0 %v1224
  %2207 = vmatpush1.bf16.msra.mxu0 %v1223
  %2208 = vmatprep.subr.bf16.mxu0 0
  %2209 = vmatpush1.bf16.msra.mxu0 0
  %2210 = vmatprep.subr.bf16.mxu0 0
  %2211 = vmatpush1.bf16.msra.mxu0 0
  %2212 = vmatprep.subr.bf16.mxu0 0
  %2213 = vmatpush1.bf16.msra.mxu0 0
  %2214 = vmatprep.subr.bf16.mxu0 0
  %2215 = vmatpush1.bf16.msra.mxu0 0
  %2216 = vmatprep.subr.bf16.mxu0 0
  %2217 = vmatpush1.bf16.msra.mxu0 0
  %2218 = vmatprep.subr.bf16.mxu0 0
  %2219 = vmatpush1.bf16.msra.mxu0 0
  %2220 = vmatprep.subr.bf16.mxu0 0
  %2221 = vmatpush1.bf16.msra.mxu0 0
  %2222 = vmatprep.subr.bf16.mxu0 0
  %2223 = vmatpush1.bf16.msra.mxu0 0
  %2224 = vmatprep.mubr.bf16.mxu0 0
  %2225 = vmatmul.mubr.bf16.gmra.mrb[0].mxu0 %v1991
  %v2226 = vpop.f32.mrb[0].mxu0
  %v2227 = vadd.f32 0.0, %v2226
  %v2228 = vpop.f32.mrb[0].mxu0
  %v2229 = vadd.f32 0.0, %v2228
  %v2230 = vpop.f32.mrb[0].mxu0
  %v2231 = vpop.f32.mrb[0].mxu0
  %2232 = vdwg.mxu0
  %2233 = vmatprep.subr.bf16.mxu0 %v1198
  %2234 = vmatpush1.bf16.msra.mxu0 %v1197
  %2235 = vmatprep.subr.bf16.mxu0 %v1202
  %2236 = vmatpush1.bf16.msra.mxu0 %v1201
  %2237 = vmatprep.subr.bf16.mxu0 %v1206
  %2238 = vmatpush1.bf16.msra.mxu0 %v1205
  %2239 = vmatprep.subr.bf16.mxu0 %v1210
  %2240 = vmatpush1.bf16.msra.mxu0 %v1209
  %2241 = vmatprep.subr.bf16.mxu0 %v1214
  %2242 = vmatpush1.bf16.msra.mxu0 %v1213
  %2243 = vmatprep.subr.bf16.mxu0 %v1218
  %2244 = vmatpush1.bf16.msra.mxu0 %v1217
  %2245 = vmatprep.subr.bf16.mxu0 %v1222
  %2246 = vmatpush1.bf16.msra.mxu0 %v1221
  %2247 = vmatprep.subr.bf16.mxu0 %v1226
  %2248 = vmatpush1.bf16.msra.mxu0 %v1225
  %2249 = vmatprep.subr.bf16.mxu0 0
  %2250 = vmatpush1.bf16.msra.mxu0 0
  %2251 = vmatprep.subr.bf16.mxu0 0
  %2252 = vmatpush1.bf16.msra.mxu0 0
  %2253 = vmatprep.subr.bf16.mxu0 0
  %2254 = vmatpush1.bf16.msra.mxu0 0
  %2255 = vmatprep.subr.bf16.mxu0 0
  %2256 = vmatpush1.bf16.msra.mxu0 0
  %2257 = vmatprep.subr.bf16.mxu0 0
  %2258 = vmatpush1.bf16.msra.mxu0 0
  %2259 = vmatprep.subr.bf16.mxu0 0
  %2260 = vmatpush1.bf16.msra.mxu0 0
  %2261 = vmatprep.subr.bf16.mxu0 0
  %2262 = vmatpush1.bf16.msra.mxu0 0
  %2263 = vmatprep.subr.bf16.mxu0 0
  %2264 = vmatpush1.bf16.msra.mxu0 0
  %2265 = vmatprep.mubr.bf16.mxu0 0
  %2266 = vmatmul.mubr.bf16.gmra.mrb[0].mxu0 %v1991
  %v2267 = vpop.f32.mrb[0].mxu0
  %v2268 = vadd.f32 0.0, %v2267
  %v2269 = vpop.f32.mrb[0].mxu0
  %v2270 = vadd.f32 0.0, %v2269
  %v2271 = vpop.f32.mrb[0].mxu0
  %v2272 = vpop.f32.mrb[0].mxu0
  %2273 = vdwg.mxu0
  %v2274 = vadd.f32 %v2188, %v2227
  %v2275 = vadd.f32 %v2189, %v2229
  %v2276 = vadd.f32 %v2190, %v2268
  %v2277 = vadd.f32 %v2191, %v2270
  %v2278 = vxor.u32 %v2274, 2147483648
  %v2279 = vxor.u32 %v2275, 2147483648
  %v2280 = vxor.u32 %v2276, 2147483648
  %v2281 = vmul.f32 %v2278, 1.442695
  %v2282 = vpow.pop %v2281
  %v2283 = vmul.f32 %v2279, 1.442695
  %v2284 = vpow.pop %v2283
  %v2285 = vmul.f32 %v2280, 1.442695
  %v2286 = vpow.pop %v2285
  %v2287 = vadd.f32 %v2282, 1.0
  %v2288 = vadd.f32 %v2284, 1.0
  %v2289 = vadd.f32 %v2286, 1.0
  %v2290 = vrcp.pop %v2287
  %v2291 = vmul.f32 1.0, %v2290
  %v2292 = vrcp.pop %v2288
  %v2293 = vmul.f32 1.0, %v2292
  %v2294 = vrcp.pop %v2289
  %v2295 = vmul.f32 1.0, %v2294
  %v2296 = vtanh.pop %v2277
  %v2297 = vmul.f32 %v2293, %v1988
  %v2298 = vmul.f32 %v2291, %v2296
  %v2299 = vadd.f32 %v2297, %v2298
  %v2300 = vtanh.pop %v2299
  %v2301 = vmul.f32 %v2295, %v2300
  %v2302 = vpack.c.bf16 %v2301, %v2301
  %2303 = vmatprep.subr.bf16.mxu0 %v625
  %2304 = vmatpush1.bf16.msra.mxu0 %v624
  %2305 = vmatprep.subr.bf16.mxu0 %v629
  %2306 = vmatpush1.bf16.msra.mxu0 %v628
  %2307 = vmatprep.subr.bf16.mxu0 %v633
  %2308 = vmatpush1.bf16.msra.mxu0 %v632
  %2309 = vmatprep.subr.bf16.mxu0 %v637
  %2310 = vmatpush1.bf16.msra.mxu0 %v636
  %2311 = vmatprep.subr.bf16.mxu0 %v641
  %2312 = vmatpush1.bf16.msra.mxu0 %v640
  %2313 = vmatprep.subr.bf16.mxu0 %v645
  %2314 = vmatpush1.bf16.msra.mxu0 %v644
  %2315 = vmatprep.subr.bf16.mxu0 %v649
  %2316 = vmatpush1.bf16.msra.mxu0 %v648
  %2317 = vmatprep.subr.bf16.mxu0 %v653
  %2318 = vmatpush1.bf16.msra.mxu0 %v652
  %2319 = vmatprep.subr.bf16.mxu0 0
  %2320 = vmatpush1.bf16.msra.mxu0 0
  %2321 = vmatprep.subr.bf16.mxu0 0
  %2322 = vmatpush1.bf16.msra.mxu0 0
  %2323 = vmatprep.subr.bf16.mxu0 0
  %2324 = vmatpush1.bf16.msra.mxu0 0
  %2325 = vmatprep.subr.bf16.mxu0 0
  %2326 = vmatpush1.bf16.msra.mxu0 0
  %2327 = vmatprep.subr.bf16.mxu0 0
  %2328 = vmatpush1.bf16.msra.mxu0 0
  %2329 = vmatprep.subr.bf16.mxu0 0
  %2330 = vmatpush1.bf16.msra.mxu0 0
  %2331 = vmatprep.subr.bf16.mxu0 0
  %2332 = vmatpush1.bf16.msra.mxu0 0
  %2333 = vmatprep.subr.bf16.mxu0 0
  %2334 = vmatpush1.bf16.msra.mxu0 0
  %2335 = vmatprep.mubr.bf16.mxu0 0
  %2336 = vmatmul.mubr.bf16.gmra.mrb[0].mxu0 %v2302
  %v2337 = vpop.f32.mrb[0].mxu0
  %v2338 = vadd.f32 %v2138, %v2337
  %v2339 = vpop.f32.mrb[0].mxu0
  %v2340 = vadd.f32 %v2140, %v2339
  %v2341 = vpop.f32.mrb[0].mxu0
  %v2342 = vpop.f32.mrb[0].mxu0
  %2343 = vdwg.mxu0
  %2344 = vmatprep.subr.bf16.mxu0 %v627
  %2345 = vmatpush1.bf16.msra.mxu0 %v626
  %2346 = vmatprep.subr.bf16.mxu0 %v631
  %2347 = vmatpush1.bf16.msra.mxu0 %v630
  %2348 = vmatprep.subr.bf16.mxu0 %v635
  %2349 = vmatpush1.bf16.msra.mxu0 %v634
  %2350 = vmatprep.subr.bf16.mxu0 %v639
  %2351 = vmatpush1.bf16.msra.mxu0 %v638
  %2352 = vmatprep.subr.bf16.mxu0 %v643
  %2353 = vmatpush1.bf16.msra.mxu0 %v642
  %2354 = vmatprep.subr.bf16.mxu0 %v647
  %2355 = vmatpush1.bf16.msra.mxu0 %v646
  %2356 = vmatprep.subr.bf16.mxu0 %v651
  %2357 = vmatpush1.bf16.msra.mxu0 %v650
  %2358 = vmatprep.subr.bf16.mxu0 %v655
  %2359 = vmatpush1.bf16.msra.mxu0 %v654
  %2360 = vmatprep.subr.bf16.mxu0 0
  %2361 = vmatpush1.bf16.msra.mxu0 0
  %2362 = vmatprep.subr.bf16.mxu0 0
  %2363 = vmatpush1.bf16.msra.mxu0 0
  %2364 = vmatprep.subr.bf16.mxu0 0
  %2365 = vmatpush1.bf16.msra.mxu0 0
  %2366 = vmatprep.subr.bf16.mxu0 0
  %2367 = vmatpush1.bf16.msra.mxu0 0
  %2368 = vmatprep.subr.bf16.mxu0 0
  %2369 = vmatpush1.bf16.msra.mxu0 0
  %2370 = vmatprep.subr.bf16.mxu0 0
  %2371 = vmatpush1.bf16.msra.mxu0 0
  %2372 = vmatprep.subr.bf16.mxu0 0
  %2373 = vmatpush1.bf16.msra.mxu0 0
  %2374 = vmatprep.subr.bf16.mxu0 0
  %2375 = vmatpush1.bf16.msra.mxu0 0
  %2376 = vmatprep.mubr.bf16.mxu0 0
  %2377 = vmatmul.mubr.bf16.gmra.mrb[0].mxu0 %v2302
  %v2378 = vpop.f32.mrb[0].mxu0
  %v2379 = vadd.f32 %v2179, %v2378
  %v2380 = vpop.f32.mrb[0].mxu0
  %v2381 = vadd.f32 %v2181, %v2380
  %v2382 = vpop.f32.mrb[0].mxu0
  %v2383 = vpop.f32.mrb[0].mxu0
  %2384 = vdwg.mxu0
  %v2385 = vadd.f32 %v2338, %v459
  %v2386 = vadd.f32 %v2340, %v463
  %v2387 = vadd.f32 %v2379, %v467
  %v2388 = vadd.f32 %v2381, %v471
  %v2389 = vxor.u32 %v2385, 2147483648
  %v2390 = vxor.u32 %v2386, 2147483648
  %v2391 = vxor.u32 %v2387, 2147483648
  %v2392 = vmul.f32 %v2389, 1.442695
  %v2393 = vpow.pop %v2392
  %v2394 = vmul.f32 %v2390, 1.442695
  %v2395 = vpow.pop %v2394
  %v2396 = vmul.f32 %v2391, 1.442695
  %v2397 = vpow.pop %v2396
  %v2398 = vadd.f32 %v2393, 1.0
  %v2399 = vadd.f32 %v2395, 1.0
  %v2400 = vadd.f32 %v2397, 1.0
  %v2401 = vrcp.pop %v2398
  %v2402 = vmul.f32 1.0, %v2401
  %v2403 = vrcp.pop %v2399
  %v2404 = vmul.f32 1.0, %v2403
  %v2405 = vrcp.pop %v2400
  %v2406 = vmul.f32 1.0, %v2405
  %v2407 = vtanh.pop %v2388
  %v2408 = vmul.f32 %v2404, %v2099
  %v2409 = vmul.f32 %v2402, %v2407
  %v2410 = vadd.f32 %v2408, %v2409
  %v2411 = vtanh.pop %v2410
  %v2412 = vmul.f32 %v2406, %v2411
  %v2413 = vpack.c.bf16 %v2412, %v2412
  %2414 = vmatprep.subr.bf16.mxu0 %v915
  %2415 = vmatpush1.bf16.msra.mxu0 %v914
  %2416 = vmatprep.subr.bf16.mxu0 %v919
  %2417 = vmatpush1.bf16.msra.mxu0 %v918
  %2418 = vmatprep.subr.bf16.mxu0 %v923
  %2419 = vmatpush1.bf16.msra.mxu0 %v922
  %2420 = vmatprep.subr.bf16.mxu0 %v927
  %2421 = vmatpush1.bf16.msra.mxu0 %v926
  %2422 = vmatprep.subr.bf16.mxu0 %v931
  %2423 = vmatpush1.bf16.msra.mxu0 %v930
  %2424 = vmatprep.subr.bf16.mxu0 %v935
  %2425 = vmatpush1.bf16.msra.mxu0 %v934
  %2426 = vmatprep.subr.bf16.mxu0 %v939
  %2427 = vmatpush1.bf16.msra.mxu0 %v938
  %2428 = vmatprep.subr.bf16.mxu0 %v943
  %2429 = vmatpush1.bf16.msra.mxu0 %v942
  %2430 = vmatprep.subr.bf16.mxu0 0
  %2431 = vmatpush1.bf16.msra.mxu0 0
  %2432 = vmatprep.subr.bf16.mxu0 0
  %2433 = vmatpush1.bf16.msra.mxu0 0
  %2434 = vmatprep.subr.bf16.mxu0 0
  %2435 = vmatpush1.bf16.msra.mxu0 0
  %2436 = vmatprep.subr.bf16.mxu0 0
  %2437 = vmatpush1.bf16.msra.mxu0 0
  %2438 = vmatprep.subr.bf16.mxu0 0
  %2439 = vmatpush1.bf16.msra.mxu0 0
  %2440 = vmatprep.subr.bf16.mxu0 0
  %2441 = vmatpush1.bf16.msra.mxu0 0
  %2442 = vmatprep.subr.bf16.mxu0 0
  %2443 = vmatpush1.bf16.msra.mxu0 0
  %2444 = vmatprep.subr.bf16.mxu0 0
  %2445 = vmatpush1.bf16.msra.mxu0 0
  %2446 = vmatprep.mubr.bf16.mxu0 0
  %2447 = vmatmul.mubr.bf16.gmra.mrb[0].mxu0 %v2413
  %v2448 = vpop.f32.mrb[0].mxu0
  %v2449 = vadd.f32 0.0, %v2448
  %v2450 = vpop.f32.mrb[0].mxu0
  %v2451 = vadd.f32 0.0, %v2450
  %v2452 = vpop.f32.mrb[0].mxu0
  %v2453 = vpop.f32.mrb[0].mxu0
  %2454 = vdwg.mxu0
  %2455 = vmatprep.subr.bf16.mxu0 %v917
  %2456 = vmatpush1.bf16.msra.mxu0 %v916
  %2457 = vmatprep.subr.bf16.mxu0 %v921
  %2458 = vmatpush1.bf16.msra.mxu0 %v920
  %2459 = vmatprep.subr.bf16.mxu0 %v925
  %2460 = vmatpush1.bf16.msra.mxu0 %v924
  %2461 = vmatprep.subr.bf16.mxu0 %v929
  %2462 = vmatpush1.bf16.msra.mxu0 %v928
  %2463 = vmatprep.subr.bf16.mxu0 %v933
  %2464 = vmatpush1.bf16.msra.mxu0 %v932
  %2465 = vmatprep.subr.bf16.mxu0 %v937
  %2466 = vmatpush1.bf16.msra.mxu0 %v936
  %2467 = vmatprep.subr.bf16.mxu0 %v941
  %2468 = vmatpush1.bf16.msra.mxu0 %v940
  %2469 = vmatprep.subr.bf16.mxu0 %v945
  %2470 = vmatpush1.bf16.msra.mxu0 %v944
  %2471 = vmatprep.subr.bf16.mxu0 0
  %2472 = vmatpush1.bf16.msra.mxu0 0
  %2473 = vmatprep.subr.bf16.mxu0 0
  %2474 = vmatpush1.bf16.msra.mxu0 0
  %2475 = vmatprep.subr.bf16.mxu0 0
  %2476 = vmatpush1.bf16.msra.mxu0 0
  %2477 = vmatprep.subr.bf16.mxu0 0
  %2478 = vmatpush1.bf16.msra.mxu0 0
  %2479 = vmatprep.subr.bf16.mxu0 0
  %2480 = vmatpush1.bf16.msra.mxu0 0
  %2481 = vmatprep.subr.bf16.mxu0 0
  %2482 = vmatpush1.bf16.msra.mxu0 0
  %2483 = vmatprep.subr.bf16.mxu0 0
  %2484 = vmatpush1.bf16.msra.mxu0 0
  %2485 = vmatprep.subr.bf16.mxu0 0
  %2486 = vmatpush1.bf16.msra.mxu0 0
  %2487 = vmatprep.mubr.bf16.mxu0 0
  %2488 = vmatmul.mubr.bf16.gmra.mrb[0].mxu0 %v2413
  %v2489 = vpop.f32.mrb[0].mxu0
  %v2490 = vadd.f32 0.0, %v2489
  %v2491 = vpop.f32.mrb[0].mxu0
  %v2492 = vadd.f32 0.0, %v2491
  %v2493 = vpop.f32.mrb[0].mxu0
  %v2494 = vpop.f32.mrb[0].mxu0
  %2495 = vdwg.mxu0
  %s2496 = smul.u32 5, 4
  %s2497 = smul.addr %s2496, 8
  %s2498 = scalar_lea.vmem [#allocation2], %s2497
  %v2499 = vld [vmem:[%s2498] sm:$0xff]
  %v2500 = vld [vmem:[%s2498 + $0x8] sm:$0xff]
  %v2501 = vld [vmem:[%s2498 + $0x10] sm:$0xff]
  %v2502 = vld [vmem:[%s2498 + $0x18] sm:$0xff]
  %2503 = vmatprep.subr.bf16.mxu0 %v1196
  %2504 = vmatpush1.bf16.msra.mxu0 %v1195
  %2505 = vmatprep.subr.bf16.mxu0 %v1200
  %2506 = vmatpush1.bf16.msra.mxu0 %v1199
  %2507 = vmatprep.subr.bf16.mxu0 %v1204
  %2508 = vmatpush1.bf16.msra.mxu0 %v1203
  %2509 = vmatprep.subr.bf16.mxu0 %v1208
  %2510 = vmatpush1.bf16.msra.mxu0 %v1207
  %2511 = vmatprep.subr.bf16.mxu0 %v1212
  %2512 = vmatpush1.bf16.msra.mxu0 %v1211
  %2513 = vmatprep.subr.bf16.mxu0 %v1216
  %2514 = vmatpush1.bf16.msra.mxu0 %v1215
  %2515 = vmatprep.subr.bf16.mxu0 %v1220
  %2516 = vmatpush1.bf16.msra.mxu0 %v1219
  %2517 = vmatprep.subr.bf16.mxu0 %v1224
  %2518 = vmatpush1.bf16.msra.mxu0 %v1223
  %2519 = vmatprep.subr.bf16.mxu0 0
  %2520 = vmatpush1.bf16.msra.mxu0 0
  %2521 = vmatprep.subr.bf16.mxu0 0
  %2522 = vmatpush1.bf16.msra.mxu0 0
  %2523 = vmatprep.subr.bf16.mxu0 0
  %2524 = vmatpush1.bf16.msra.mxu0 0
  %2525 = vmatprep.subr.bf16.mxu0 0
  %2526 = vmatpush1.bf16.msra.mxu0 0
  %2527 = vmatprep.subr.bf16.mxu0 0
  %2528 = vmatpush1.bf16.msra.mxu0 0
  %2529 = vmatprep.subr.bf16.mxu0 0
  %2530 = vmatpush1.bf16.msra.mxu0 0
  %2531 = vmatprep.subr.bf16.mxu0 0
  %2532 = vmatpush1.bf16.msra.mxu0 0
  %2533 = vmatprep.subr.bf16.mxu0 0
  %2534 = vmatpush1.bf16.msra.mxu0 0
  %2535 = vmatprep.mubr.bf16.mxu0 0
  %2536 = vmatmul.mubr.bf16.gmra.mrb[0].mxu0 %v2302
  %v2537 = vpop.f32.mrb[0].mxu0
  %v2538 = vadd.f32 0.0, %v2537
  %v2539 = vpop.f32.mrb[0].mxu0
  %v2540 = vadd.f32 0.0, %v2539
  %v2541 = vpop.f32.mrb[0].mxu0
  %v2542 = vpop.f32.mrb[0].mxu0
  %2543 = vdwg.mxu0
  %2544 = vmatprep.subr.bf16.mxu0 %v1198
  %2545 = vmatpush1.bf16.msra.mxu0 %v1197
  %2546 = vmatprep.subr.bf16.mxu0 %v1202
  %2547 = vmatpush1.bf16.msra.mxu0 %v1201
  %2548 = vmatprep.subr.bf16.mxu0 %v1206
  %2549 = vmatpush1.bf16.msra.mxu0 %v1205
  %2550 = vmatprep.subr.bf16.mxu0 %v1210
  %2551 = vmatpush1.bf16.msra.mxu0 %v1209
  %2552 = vmatprep.subr.bf16.mxu0 %v1214
  %2553 = vmatpush1.bf16.msra.mxu0 %v1213
  %2554 = vmatprep.subr.bf16.mxu0 %v1218
  %2555 = vmatpush1.bf16.msra.mxu0 %v1217
  %2556 = vmatprep.subr.bf16.mxu0 %v1222
  %2557 = vmatpush1.bf16.msra.mxu0 %v1221
  %2558 = vmatprep.subr.bf16.mxu0 %v1226
  %2559 = vmatpush1.bf16.msra.mxu0 %v1225
  %2560 = vmatprep.subr.bf16.mxu0 0
  %2561 = vmatpush1.bf16.msra.mxu0 0
  %2562 = vmatprep.subr.bf16.mxu0 0
  %2563 = vmatpush1.bf16.msra.mxu0 0
  %2564 = vmatprep.subr.bf16.mxu0 0
  %2565 = vmatpush1.bf16.msra.mxu0 0
  %2566 = vmatprep.subr.bf16.mxu0 0
  %2567 = vmatpush1.bf16.msra.mxu0 0
  %2568 = vmatprep.subr.bf16.mxu0 0
  %2569 = vmatpush1.bf16.msra.mxu0 0
  %2570 = vmatprep.subr.bf16.mxu0 0
  %2571 = vmatpush1.bf16.msra.mxu0 0
  %2572 = vmatprep.subr.bf16.mxu0 0
  %2573 = vmatpush1.bf16.msra.mxu0 0
  %2574 = vmatprep.subr.bf16.mxu0 0
  %2575 = vmatpush1.bf16.msra.mxu0 0
  %2576 = vmatprep.mubr.bf16.mxu0 0
  %2577 = vmatmul.mubr.bf16.gmra.mrb[0].mxu0 %v2302
  %v2578 = vpop.f32.mrb[0].mxu0
  %v2579 = vadd.f32 0.0, %v2578
  %v2580 = vpop.f32.mrb[0].mxu0
  %v2581 = vadd.f32 0.0, %v2580
  %v2582 = vpop.f32.mrb[0].mxu0
  %v2583 = vpop.f32.mrb[0].mxu0
  %2584 = vdwg.mxu0
  %v2585 = vadd.f32 %v2499, %v2538
  %v2586 = vadd.f32 %v2500, %v2540
  %v2587 = vadd.f32 %v2501, %v2579
  %v2588 = vadd.f32 %v2502, %v2581
  %v2589 = vxor.u32 %v2585, 2147483648
  %v2590 = vxor.u32 %v2586, 2147483648
  %v2591 = vxor.u32 %v2587, 2147483648
  %v2592 = vmul.f32 %v2589, 1.442695
  %v2593 = vpow.pop %v2592
  %v2594 = vmul.f32 %v2590, 1.442695
  %v2595 = vpow.pop %v2594
  %v2596 = vmul.f32 %v2591, 1.442695
  %v2597 = vpow.pop %v2596
  %v2598 = vadd.f32 %v2593, 1.0
  %v2599 = vadd.f32 %v2595, 1.0
  %v2600 = vadd.f32 %v2597, 1.0
  %v2601 = vrcp.pop %v2598
  %v2602 = vmul.f32 1.0, %v2601
  %v2603 = vrcp.pop %v2599
  %v2604 = vmul.f32 1.0, %v2603
  %v2605 = vrcp.pop %v2600
  %v2606 = vmul.f32 1.0, %v2605
  %v2607 = vtanh.pop %v2588
  %v2608 = vmul.f32 %v2604, %v2299
  %v2609 = vmul.f32 %v2602, %v2607
  %v2610 = vadd.f32 %v2608, %v2609
  %v2611 = vtanh.pop %v2610
  %v2612 = vmul.f32 %v2606, %v2611
  %v2613 = vpack.c.bf16 %v2612, %v2612
  %2614 = vmatprep.subr.bf16.mxu0 %v625
  %2615 = vmatpush1.bf16.msra.mxu0 %v624
  %2616 = vmatprep.subr.bf16.mxu0 %v629
  %2617 = vmatpush1.bf16.msra.mxu0 %v628
  %2618 = vmatprep.subr.bf16.mxu0 %v633
  %2619 = vmatpush1.bf16.msra.mxu0 %v632
  %2620 = vmatprep.subr.bf16.mxu0 %v637
  %2621 = vmatpush1.bf16.msra.mxu0 %v636
  %2622 = vmatprep.subr.bf16.mxu0 %v641
  %2623 = vmatpush1.bf16.msra.mxu0 %v640
  %2624 = vmatprep.subr.bf16.mxu0 %v645
  %2625 = vmatpush1.bf16.msra.mxu0 %v644
  %2626 = vmatprep.subr.bf16.mxu0 %v649
  %2627 = vmatpush1.bf16.msra.mxu0 %v648
  %2628 = vmatprep.subr.bf16.mxu0 %v653
  %2629 = vmatpush1.bf16.msra.mxu0 %v652
  %2630 = vmatprep.subr.bf16.mxu0 0
  %2631 = vmatpush1.bf16.msra.mxu0 0
  %2632 = vmatprep.subr.bf16.mxu0 0
  %2633 = vmatpush1.bf16.msra.mxu0 0
  %2634 = vmatprep.subr.bf16.mxu0 0
  %2635 = vmatpush1.bf16.msra.mxu0 0
  %2636 = vmatprep.subr.bf16.mxu0 0
  %2637 = vmatpush1.bf16.msra.mxu0 0
  %2638 = vmatprep.subr.bf16.mxu0 0
  %2639 = vmatpush1.bf16.msra.mxu0 0
  %2640 = vmatprep.subr.bf16.mxu0 0
  %2641 = vmatpush1.bf16.msra.mxu0 0
  %2642 = vmatprep.subr.bf16.mxu0 0
  %2643 = vmatpush1.bf16.msra.mxu0 0
  %2644 = vmatprep.subr.bf16.mxu0 0
  %2645 = vmatpush1.bf16.msra.mxu0 0
  %2646 = vmatprep.mubr.bf16.mxu0 0
  %2647 = vmatmul.mubr.bf16.gmra.mrb[0].mxu0 %v2613
  %v2648 = vpop.f32.mrb[0].mxu0
  %v2649 = vadd.f32 %v2449, %v2648
  %v2650 = vpop.f32.mrb[0].mxu0
  %v2651 = vadd.f32 %v2451, %v2650
  %v2652 = vpop.f32.mrb[0].mxu0
  %v2653 = vpop.f32.mrb[0].mxu0
  %2654 = vdwg.mxu0
  %2655 = vmatprep.subr.bf16.mxu0 %v627
  %2656 = vmatpush1.bf16.msra.mxu0 %v626
  %2657 = vmatprep.subr.bf16.mxu0 %v631
  %2658 = vmatpush1.bf16.msra.mxu0 %v630
  %2659 = vmatprep.subr.bf16.mxu0 %v635
  %2660 = vmatpush1.bf16.msra.mxu0 %v634
  %2661 = vmatprep.subr.bf16.mxu0 %v639
  %2662 = vmatpush1.bf16.msra.mxu0 %v638
  %2663 = vmatprep.subr.bf16.mxu0 %v643
  %2664 = vmatpush1.bf16.msra.mxu0 %v642
  %2665 = vmatprep.subr.bf16.mxu0 %v647
  %2666 = vmatpush1.bf16.msra.mxu0 %v646
  %2667 = vmatprep.subr.bf16.mxu0 %v651
  %2668 = vmatpush1.bf16.msra.mxu0 %v650
  %2669 = vmatprep.subr.bf16.mxu0 %v655
  %2670 = vmatpush1.bf16.msra.mxu0 %v654
  %2671 = vmatprep.subr.bf16.mxu0 0
  %2672 = vmatpush1.bf16.msra.mxu0 0
  %2673 = vmatprep.subr.bf16.mxu0 0
  %2674 = vmatpush1.bf16.msra.mxu0 0
  %2675 = vmatprep.subr.bf16.mxu0 0
  %2676 = vmatpush1.bf16.msra.mxu0 0
  %2677 = vmatprep.subr.bf16.mxu0 0
  %2678 = vmatpush1.bf16.msra.mxu0 0
  %2679 = vmatprep.subr.bf16.mxu0 0
  %2680 = vmatpush1.bf16.msra.mxu0 0
  %2681 = vmatprep.subr.bf16.mxu0 0
  %2682 = vmatpush1.bf16.msra.mxu0 0
  %2683 = vmatprep.subr.bf16.mxu0 0
  %2684 = vmatpush1.bf16.msra.mxu0 0
  %2685 = vmatprep.subr.bf16.mxu0 0
  %2686 = vmatpush1.bf16.msra.mxu0 0
  %2687 = vmatprep.mubr.bf16.mxu0 0
  %2688 = vmatmul.mubr.bf16.gmra.mrb[0].mxu0 %v2613
  %v2689 = vpop.f32.mrb[0].mxu0
  %v2690 = vadd.f32 %v2490, %v2689
  %v2691 = vpop.f32.mrb[0].mxu0
  %v2692 = vadd.f32 %v2492, %v2691
  %v2693 = vpop.f32.mrb[0].mxu0
  %v2694 = vpop.f32.mrb[0].mxu0
  %2695 = vdwg.mxu0
  %v2696 = vadd.f32 %v2649, %v459
  %v2697 = vadd.f32 %v2651, %v463
  %v2698 = vadd.f32 %v2690, %v467
  %v2699 = vadd.f32 %v2692, %v471
  %v2700 = vxor.u32 %v2696, 2147483648
  %v2701 = vxor.u32 %v2697, 2147483648
  %v2702 = vxor.u32 %v2698, 2147483648
  %v2703 = vmul.f32 %v2700, 1.442695
  %v2704 = vpow.pop %v2703
  %v2705 = vmul.f32 %v2701, 1.442695
  %v2706 = vpow.pop %v2705
  %v2707 = vmul.f32 %v2702, 1.442695
  %v2708 = vpow.pop %v2707
  %v2709 = vadd.f32 %v2704, 1.0
  %v2710 = vadd.f32 %v2706, 1.0
  %v2711 = vadd.f32 %v2708, 1.0
  %v2712 = vrcp.pop %v2709
  %v2713 = vmul.f32 1.0, %v2712
  %v2714 = vrcp.pop %v2710
  %v2715 = vmul.f32 1.0, %v2714
  %v2716 = vrcp.pop %v2711
  %v2717 = vmul.f32 1.0, %v2716
  %v2718 = vtanh.pop %v2699
  %v2719 = vmul.f32 %v2715, %v2410
  %v2720 = vmul.f32 %v2713, %v2718
  %v2721 = vadd.f32 %v2719, %v2720
  %v2722 = vtanh.pop %v2721
  %v2723 = vmul.f32 %v2717, %v2722
  %v2724 = vpack.c.bf16 %v2723, %v2723
  %2725 = vmatprep.subr.bf16.mxu0 %v915
  %2726 = vmatpush1.bf16.msra.mxu0 %v914
  %2727 = vmatprep.subr.bf16.mxu0 %v919
  %2728 = vmatpush1.bf16.msra.mxu0 %v918
  %2729 = vmatprep.subr.bf16.mxu0 %v923
  %2730 = vmatpush1.bf16.msra.mxu0 %v922
  %2731 = vmatprep.subr.bf16.mxu0 %v927
  %2732 = vmatpush1.bf16.msra.mxu0 %v926
  %2733 = vmatprep.subr.bf16.mxu0 %v931
  %2734 = vmatpush1.bf16.msra.mxu0 %v930
  %2735 = vmatprep.subr.bf16.mxu0 %v935
  %2736 = vmatpush1.bf16.msra.mxu0 %v934
  %2737 = vmatprep.subr.bf16.mxu0 %v939
  %2738 = vmatpush1.bf16.msra.mxu0 %v938
  %2739 = vmatprep.subr.bf16.mxu0 %v943
  %2740 = vmatpush1.bf16.msra.mxu0 %v942
  %2741 = vmatprep.subr.bf16.mxu0 0
  %2742 = vmatpush1.bf16.msra.mxu0 0
  %2743 = vmatprep.subr.bf16.mxu0 0
  %2744 = vmatpush1.bf16.msra.mxu0 0
  %2745 = vmatprep.subr.bf16.mxu0 0
  %2746 = vmatpush1.bf16.msra.mxu0 0
  %2747 = vmatprep.subr.bf16.mxu0 0
  %2748 = vmatpush1.bf16.msra.mxu0 0
  %2749 = vmatprep.subr.bf16.mxu0 0
  %2750 = vmatpush1.bf16.msra.mxu0 0
  %2751 = vmatprep.subr.bf16.mxu0 0
  %2752 = vmatpush1.bf16.msra.mxu0 0
  %2753 = vmatprep.subr.bf16.mxu0 0
  %2754 = vmatpush1.bf16.msra.mxu0 0
  %2755 = vmatprep.subr.bf16.mxu0 0
  %2756 = vmatpush1.bf16.msra.mxu0 0
  %2757 = vmatprep.mubr.bf16.mxu0 0
  %2758 = vmatmul.mubr.bf16.gmra.mrb[0].mxu0 %v2724
  %v2759 = vpop.f32.mrb[0].mxu0
  %v2760 = vadd.f32 0.0, %v2759
  %v2761 = vpop.f32.mrb[0].mxu0
  %v2762 = vadd.f32 0.0, %v2761
  %v2763 = vpop.f32.mrb[0].mxu0
  %v2764 = vpop.f32.mrb[0].mxu0
  %2765 = vdwg.mxu0
  %2766 = vmatprep.subr.bf16.mxu0 %v917
  %2767 = vmatpush1.bf16.msra.mxu0 %v916
  %2768 = vmatprep.subr.bf16.mxu0 %v921
  %2769 = vmatpush1.bf16.msra.mxu0 %v920
  %2770 = vmatprep.subr.bf16.mxu0 %v925
  %2771 = vmatpush1.bf16.msra.mxu0 %v924
  %2772 = vmatprep.subr.bf16.mxu0 %v929
  %2773 = vmatpush1.bf16.msra.mxu0 %v928
  %2774 = vmatprep.subr.bf16.mxu0 %v933
  %2775 = vmatpush1.bf16.msra.mxu0 %v932
  %2776 = vmatprep.subr.bf16.mxu0 %v937
  %2777 = vmatpush1.bf16.msra.mxu0 %v936
  %2778 = vmatprep.subr.bf16.mxu0 %v941
  %2779 = vmatpush1.bf16.msra.mxu0 %v940
  %2780 = vmatprep.subr.bf16.mxu0 %v945
  %2781 = vmatpush1.bf16.msra.mxu0 %v944
  %2782 = vmatprep.subr.bf16.mxu0 0
  %2783 = vmatpush1.bf16.msra.mxu0 0
  %2784 = vmatprep.subr.bf16.mxu0 0
  %2785 = vmatpush1.bf16.msra.mxu0 0
  %2786 = vmatprep.subr.bf16.mxu0 0
  %2787 = vmatpush1.bf16.msra.mxu0 0
  %2788 = vmatprep.subr.bf16.mxu0 0
  %2789 = vmatpush1.bf16.msra.mxu0 0
  %2790 = vmatprep.subr.bf16.mxu0 0
  %2791 = vmatpush1.bf16.msra.mxu0 0
  %2792 = vmatprep.subr.bf16.mxu0 0
  %2793 = vmatpush1.bf16.msra.mxu0 0
  %2794 = vmatprep.subr.bf16.mxu0 0
  %2795 = vmatpush1.bf16.msra.mxu0 0
  %2796 = vmatprep.subr.bf16.mxu0 0
  %2797 = vmatpush1.bf16.msra.mxu0 0
  %2798 = vmatprep.mubr.bf16.mxu0 0
  %2799 = vmatmul.mubr.bf16.gmra.mrb[0].mxu0 %v2724
  %v2800 = vpop.f32.mrb[0].mxu0
  %v2801 = vadd.f32 0.0, %v2800
  %v2802 = vpop.f32.mrb[0].mxu0
  %v2803 = vadd.f32 0.0, %v2802
  %v2804 = vpop.f32.mrb[0].mxu0
  %v2805 = vpop.f32.mrb[0].mxu0
  %2806 = vdwg.mxu0
  %s2807 = smul.u32 6, 4
  %s2808 = smul.addr %s2807, 8
  %s2809 = scalar_lea.vmem [#allocation2], %s2808
  %v2810 = vld [vmem:[%s2809] sm:$0xff]
  %v2811 = vld [vmem:[%s2809 + $0x8] sm:$0xff]
  %v2812 = vld [vmem:[%s2809 + $0x10] sm:$0xff]
  %v2813 = vld [vmem:[%s2809 + $0x18] sm:$0xff]
  %2814 = vmatprep.subr.bf16.mxu0 %v1196
  %2815 = vmatpush1.bf16.msra.mxu0 %v1195
  %2816 = vmatprep.subr.bf16.mxu0 %v1200
  %2817 = vmatpush1.bf16.msra.mxu0 %v1199
  %2818 = vmatprep.subr.bf16.mxu0 %v1204
  %2819 = vmatpush1.bf16.msra.mxu0 %v1203
  %2820 = vmatprep.subr.bf16.mxu0 %v1208
  %2821 = vmatpush1.bf16.msra.mxu0 %v1207
  %2822 = vmatprep.subr.bf16.mxu0 %v1212
  %2823 = vmatpush1.bf16.msra.mxu0 %v1211
  %2824 = vmatprep.subr.bf16.mxu0 %v1216
  %2825 = vmatpush1.bf16.msra.mxu0 %v1215
  %2826 = vmatprep.subr.bf16.mxu0 %v1220
  %2827 = vmatpush1.bf16.msra.mxu0 %v1219
  %2828 = vmatprep.subr.bf16.mxu0 %v1224
  %2829 = vmatpush1.bf16.msra.mxu0 %v1223
  %2830 = vmatprep.subr.bf16.mxu0 0
  %2831 = vmatpush1.bf16.msra.mxu0 0
  %2832 = vmatprep.subr.bf16.mxu0 0
  %2833 = vmatpush1.bf16.msra.mxu0 0
  %2834 = vmatprep.subr.bf16.mxu0 0
  %2835 = vmatpush1.bf16.msra.mxu0 0
  %2836 = vmatprep.subr.bf16.mxu0 0
  %2837 = vmatpush1.bf16.msra.mxu0 0
  %2838 = vmatprep.subr.bf16.mxu0 0
  %2839 = vmatpush1.bf16.msra.mxu0 0
  %2840 = vmatprep.subr.bf16.mxu0 0
  %2841 = vmatpush1.bf16.msra.mxu0 0
  %2842 = vmatprep.subr.bf16.mxu0 0
  %2843 = vmatpush1.bf16.msra.mxu0 0
  %2844 = vmatprep.subr.bf16.mxu0 0
  %2845 = vmatpush1.bf16.msra.mxu0 0
  %2846 = vmatprep.mubr.bf16.mxu0 0
  %2847 = vmatmul.mubr.bf16.gmra.mrb[0].mxu0 %v2613
  %v2848 = vpop.f32.mrb[0].mxu0
  %v2849 = vadd.f32 0.0, %v2848
  %v2850 = vpop.f32.mrb[0].mxu0
  %v2851 = vadd.f32 0.0, %v2850
  %v2852 = vpop.f32.mrb[0].mxu0
  %v2853 = vpop.f32.mrb[0].mxu0
  %2854 = vdwg.mxu0
  %2855 = vmatprep.subr.bf16.mxu0 %v1198
  %2856 = vmatpush1.bf16.msra.mxu0 %v1197
  %2857 = vmatprep.subr.bf16.mxu0 %v1202
  %2858 = vmatpush1.bf16.msra.mxu0 %v1201
  %2859 = vmatprep.subr.bf16.mxu0 %v1206
  %2860 = vmatpush1.bf16.msra.mxu0 %v1205
  %2861 = vmatprep.subr.bf16.mxu0 %v1210
  %2862 = vmatpush1.bf16.msra.mxu0 %v1209
  %2863 = vmatprep.subr.bf16.mxu0 %v1214
  %2864 = vmatpush1.bf16.msra.mxu0 %v1213
  %2865 = vmatprep.subr.bf16.mxu0 %v1218
  %2866 = vmatpush1.bf16.msra.mxu0 %v1217
  %2867 = vmatprep.subr.bf16.mxu0 %v1222
  %2868 = vmatpush1.bf16.msra.mxu0 %v1221
  %2869 = vmatprep.subr.bf16.mxu0 %v1226
  %2870 = vmatpush1.bf16.msra.mxu0 %v1225
  %2871 = vmatprep.subr.bf16.mxu0 0
  %2872 = vmatpush1.bf16.msra.mxu0 0
  %2873 = vmatprep.subr.bf16.mxu0 0
  %2874 = vmatpush1.bf16.msra.mxu0 0
  %2875 = vmatprep.subr.bf16.mxu0 0
  %2876 = vmatpush1.bf16.msra.mxu0 0
  %2877 = vmatprep.subr.bf16.mxu0 0
  %2878 = vmatpush1.bf16.msra.mxu0 0
  %2879 = vmatprep.subr.bf16.mxu0 0
  %2880 = vmatpush1.bf16.msra.mxu0 0
  %2881 = vmatprep.subr.bf16.mxu0 0
  %2882 = vmatpush1.bf16.msra.mxu0 0
  %2883 = vmatprep.subr.bf16.mxu0 0
  %2884 = vmatpush1.bf16.msra.mxu0 0
  %2885 = vmatprep.subr.bf16.mxu0 0
  %2886 = vmatpush1.bf16.msra.mxu0 0
  %2887 = vmatprep.mubr.bf16.mxu0 0
  %2888 = vmatmul.mubr.bf16.gmra.mrb[0].mxu0 %v2613
  %v2889 = vpop.f32.mrb[0].mxu0
  %v2890 = vadd.f32 0.0, %v2889
  %v2891 = vpop.f32.mrb[0].mxu0
  %v2892 = vadd.f32 0.0, %v2891
  %v2893 = vpop.f32.mrb[0].mxu0
  %v2894 = vpop.f32.mrb[0].mxu0
  %2895 = vdwg.mxu0
  %v2896 = vadd.f32 %v2810, %v2849
  %v2897 = vadd.f32 %v2811, %v2851
  %v2898 = vadd.f32 %v2812, %v2890
  %v2899 = vadd.f32 %v2813, %v2892
  %v2900 = vxor.u32 %v2896, 2147483648
  %v2901 = vxor.u32 %v2897, 2147483648
  %v2902 = vxor.u32 %v2898, 2147483648
  %v2903 = vmul.f32 %v2900, 1.442695
  %v2904 = vpow.pop %v2903
  %v2905 = vmul.f32 %v2901, 1.442695
  %v2906 = vpow.pop %v2905
  %v2907 = vmul.f32 %v2902, 1.442695
  %v2908 = vpow.pop %v2907
  %v2909 = vadd.f32 %v2904, 1.0
  %v2910 = vadd.f32 %v2906, 1.0
  %v2911 = vadd.f32 %v2908, 1.0
  %v2912 = vrcp.pop %v2909
  %v2913 = vmul.f32 1.0, %v2912
  %v2914 = vrcp.pop %v2910
  %v2915 = vmul.f32 1.0, %v2914
  %v2916 = vrcp.pop %v2911
  %v2917 = vmul.f32 1.0, %v2916
  %v2918 = vtanh.pop %v2899
  %v2919 = vmul.f32 %v2915, %v2610
  %v2920 = vmul.f32 %v2913, %v2918
  %v2921 = vadd.f32 %v2919, %v2920
  %v2922 = vtanh.pop %v2921
  %v2923 = vmul.f32 %v2917, %v2922
  %v2924 = vpack.c.bf16 %v2923, %v2923
  %2925 = vmatprep.subr.bf16.mxu0 %v625
  %2926 = vmatpush1.bf16.msra.mxu0 %v624
  %2927 = vmatprep.subr.bf16.mxu0 %v629
  %2928 = vmatpush1.bf16.msra.mxu0 %v628
  %2929 = vmatprep.subr.bf16.mxu0 %v633
  %2930 = vmatpush1.bf16.msra.mxu0 %v632
  %2931 = vmatprep.subr.bf16.mxu0 %v637
  %2932 = vmatpush1.bf16.msra.mxu0 %v636
  %2933 = vmatprep.subr.bf16.mxu0 %v641
  %2934 = vmatpush1.bf16.msra.mxu0 %v640
  %2935 = vmatprep.subr.bf16.mxu0 %v645
  %2936 = vmatpush1.bf16.msra.mxu0 %v644
  %2937 = vmatprep.subr.bf16.mxu0 %v649
  %2938 = vmatpush1.bf16.msra.mxu0 %v648
  %2939 = vmatprep.subr.bf16.mxu0 %v653
  %2940 = vmatpush1.bf16.msra.mxu0 %v652
  %2941 = vmatprep.subr.bf16.mxu0 0
  %2942 = vmatpush1.bf16.msra.mxu0 0
  %2943 = vmatprep.subr.bf16.mxu0 0
  %2944 = vmatpush1.bf16.msra.mxu0 0
  %2945 = vmatprep.subr.bf16.mxu0 0
  %2946 = vmatpush1.bf16.msra.mxu0 0
  %2947 = vmatprep.subr.bf16.mxu0 0
  %2948 = vmatpush1.bf16.msra.mxu0 0
  %2949 = vmatprep.subr.bf16.mxu0 0
  %2950 = vmatpush1.bf16.msra.mxu0 0
  %2951 = vmatprep.subr.bf16.mxu0 0
  %2952 = vmatpush1.bf16.msra.mxu0 0
  %2953 = vmatprep.subr.bf16.mxu0 0
  %2954 = vmatpush1.bf16.msra.mxu0 0
  %2955 = vmatprep.subr.bf16.mxu0 0
  %2956 = vmatpush1.bf16.msra.mxu0 0
  %2957 = vmatprep.mubr.bf16.mxu0 0
  %2958 = vmatmul.mubr.bf16.gmra.mrb[0].mxu0 %v2924
  %v2959 = vpop.f32.mrb[0].mxu0
  %v2960 = vadd.f32 %v2760, %v2959
  %v2961 = vpop.f32.mrb[0].mxu0
  %v2962 = vadd.f32 %v2762, %v2961
  %v2963 = vpop.f32.mrb[0].mxu0
  %v2964 = vpop.f32.mrb[0].mxu0
  %2965 = vdwg.mxu0
  %2966 = vmatprep.subr.bf16.mxu0 %v627
  %2967 = vmatpush1.bf16.msra.mxu0 %v626
  %2968 = vmatprep.subr.bf16.mxu0 %v631
  %2969 = vmatpush1.bf16.msra.mxu0 %v630
  %2970 = vmatprep.subr.bf16.mxu0 %v635
  %2971 = vmatpush1.bf16.msra.mxu0 %v634
  %2972 = vmatprep.subr.bf16.mxu0 %v639
  %2973 = vmatpush1.bf16.msra.mxu0 %v638
  %2974 = vmatprep.subr.bf16.mxu0 %v643
  %2975 = vmatpush1.bf16.msra.mxu0 %v642
  %2976 = vmatprep.subr.bf16.mxu0 %v647
  %2977 = vmatpush1.bf16.msra.mxu0 %v646
  %2978 = vmatprep.subr.bf16.mxu0 %v651
  %2979 = vmatpush1.bf16.msra.mxu0 %v650
  %2980 = vmatprep.subr.bf16.mxu0 %v655
  %2981 = vmatpush1.bf16.msra.mxu0 %v654
  %2982 = vmatprep.subr.bf16.mxu0 0
  %2983 = vmatpush1.bf16.msra.mxu0 0
  %2984 = vmatprep.subr.bf16.mxu0 0
  %2985 = vmatpush1.bf16.msra.mxu0 0
  %2986 = vmatprep.subr.bf16.mxu0 0
  %2987 = vmatpush1.bf16.msra.mxu0 0
  %2988 = vmatprep.subr.bf16.mxu0 0
  %2989 = vmatpush1.bf16.msra.mxu0 0
  %2990 = vmatprep.subr.bf16.mxu0 0
  %2991 = vmatpush1.bf16.msra.mxu0 0
  %2992 = vmatprep.subr.bf16.mxu0 0
  %2993 = vmatpush1.bf16.msra.mxu0 0
  %2994 = vmatprep.subr.bf16.mxu0 0
  %2995 = vmatpush1.bf16.msra.mxu0 0
  %2996 = vmatprep.subr.bf16.mxu0 0
  %2997 = vmatpush1.bf16.msra.mxu0 0
  %2998 = vmatprep.mubr.bf16.mxu0 0
  %2999 = vmatmul.mubr.bf16.gmra.mrb[0].mxu0 %v2924
  %v3000 = vpop.f32.mrb[0].mxu0
  %v3001 = vadd.f32 %v2801, %v3000
  %v3002 = vpop.f32.mrb[0].mxu0
  %v3003 = vadd.f32 %v2803, %v3002
  %v3004 = vpop.f32.mrb[0].mxu0
  %v3005 = vpop.f32.mrb[0].mxu0
  %3006 = vdwg.mxu0
  %v3007 = vadd.f32 %v2960, %v459
  %v3008 = vadd.f32 %v2962, %v463
  %v3009 = vadd.f32 %v3001, %v467
  %v3010 = vadd.f32 %v3003, %v471
  %v3011 = vxor.u32 %v3007, 2147483648
  %v3012 = vxor.u32 %v3008, 2147483648
  %v3013 = vxor.u32 %v3009, 2147483648
  %v3014 = vmul.f32 %v3011, 1.442695
  %v3015 = vpow.pop %v3014
  %v3016 = vmul.f32 %v3012, 1.442695
  %v3017 = vpow.pop %v3016
  %v3018 = vmul.f32 %v3013, 1.442695
  %v3019 = vpow.pop %v3018
  %v3020 = vadd.f32 %v3015, 1.0
  %v3021 = vadd.f32 %v3017, 1.0
  %v3022 = vadd.f32 %v3019, 1.0
  %v3023 = vrcp.pop %v3020
  %v3024 = vmul.f32 1.0, %v3023
  %v3025 = vrcp.pop %v3021
  %v3026 = vmul.f32 1.0, %v3025
  %v3027 = vrcp.pop %v3022
  %v3028 = vmul.f32 1.0, %v3027
  %v3029 = vtanh.pop %v3010
  %v3030 = vmul.f32 %v3026, %v2721
  %v3031 = vmul.f32 %v3024, %v3029
  %v3032 = vadd.f32 %v3030, %v3031
  %v3033 = vtanh.pop %v3032
  %v3034 = vmul.f32 %v3028, %v3033
  %v3035 = vpack.c.bf16 %v3034, %v3034
  %3036 = vmatprep.subr.bf16.mxu0 %v915
  %3037 = vmatpush1.bf16.msra.mxu0 %v914
  %3038 = vmatprep.subr.bf16.mxu0 %v919
  %3039 = vmatpush1.bf16.msra.mxu0 %v918
  %3040 = vmatprep.subr.bf16.mxu0 %v923
  %3041 = vmatpush1.bf16.msra.mxu0 %v922
  %3042 = vmatprep.subr.bf16.mxu0 %v927
  %3043 = vmatpush1.bf16.msra.mxu0 %v926
  %3044 = vmatprep.subr.bf16.mxu0 %v931
  %3045 = vmatpush1.bf16.msra.mxu0 %v930
  %3046 = vmatprep.subr.bf16.mxu0 %v935
  %3047 = vmatpush1.bf16.msra.mxu0 %v934
  %3048 = vmatprep.subr.bf16.mxu0 %v939
  %3049 = vmatpush1.bf16.msra.mxu0 %v938
  %3050 = vmatprep.subr.bf16.mxu0 %v943
  %3051 = vmatpush1.bf16.msra.mxu0 %v942
  %3052 = vmatprep.subr.bf16.mxu0 0
  %3053 = vmatpush1.bf16.msra.mxu0 0
  %3054 = vmatprep.subr.bf16.mxu0 0
  %3055 = vmatpush1.bf16.msra.mxu0 0
  %3056 = vmatprep.subr.bf16.mxu0 0
  %3057 = vmatpush1.bf16.msra.mxu0 0
  %3058 = vmatprep.subr.bf16.mxu0 0
  %3059 = vmatpush1.bf16.msra.mxu0 0
  %3060 = vmatprep.subr.bf16.mxu0 0
  %3061 = vmatpush1.bf16.msra.mxu0 0
  %3062 = vmatprep.subr.bf16.mxu0 0
  %3063 = vmatpush1.bf16.msra.mxu0 0
  %3064 = vmatprep.subr.bf16.mxu0 0
  %3065 = vmatpush1.bf16.msra.mxu0 0
  %3066 = vmatprep.subr.bf16.mxu0 0
  %3067 = vmatpush1.bf16.msra.mxu0 0
  %3068 = vmatprep.mubr.bf16.mxu0 0
  %3069 = vmatmul.mubr.bf16.gmra.mrb[0].mxu0 %v3035
  %v3070 = vpop.f32.mrb[0].mxu0
  %v3071 = vadd.f32 0.0, %v3070
  %v3072 = vpop.f32.mrb[0].mxu0
  %v3073 = vadd.f32 0.0, %v3072
  %v3074 = vpop.f32.mrb[0].mxu0
  %v3075 = vpop.f32.mrb[0].mxu0
  %3076 = vdwg.mxu0
  %3077 = vmatprep.subr.bf16.mxu0 %v917
  %3078 = vmatpush1.bf16.msra.mxu0 %v916
  %3079 = vmatprep.subr.bf16.mxu0 %v921
  %3080 = vmatpush1.bf16.msra.mxu0 %v920
  %3081 = vmatprep.subr.bf16.mxu0 %v925
  %3082 = vmatpush1.bf16.msra.mxu0 %v924
  %3083 = vmatprep.subr.bf16.mxu0 %v929
  %3084 = vmatpush1.bf16.msra.mxu0 %v928
  %3085 = vmatprep.subr.bf16.mxu0 %v933
  %3086 = vmatpush1.bf16.msra.mxu0 %v932
  %3087 = vmatprep.subr.bf16.mxu0 %v937
  %3088 = vmatpush1.bf16.msra.mxu0 %v936
  %3089 = vmatprep.subr.bf16.mxu0 %v941
  %3090 = vmatpush1.bf16.msra.mxu0 %v940
  %3091 = vmatprep.subr.bf16.mxu0 %v945
  %3092 = vmatpush1.bf16.msra.mxu0 %v944
  %3093 = vmatprep.subr.bf16.mxu0 0
  %3094 = vmatpush1.bf16.msra.mxu0 0
  %3095 = vmatprep.subr.bf16.mxu0 0
  %3096 = vmatpush1.bf16.msra.mxu0 0
  %3097 = vmatprep.subr.bf16.mxu0 0
  %3098 = vmatpush1.bf16.msra.mxu0 0
  %3099 = vmatprep.subr.bf16.mxu0 0
  %3100 = vmatpush1.bf16.msra.mxu0 0
  %3101 = vmatprep.subr.bf16.mxu0 0
  %3102 = vmatpush1.bf16.msra.mxu0 0
  %3103 = vmatprep.subr.bf16.mxu0 0
  %3104 = vmatpush1.bf16.msra.mxu0 0
  %3105 = vmatprep.subr.bf16.mxu0 0
  %3106 = vmatpush1.bf16.msra.mxu0 0
  %3107 = vmatprep.subr.bf16.mxu0 0
  %3108 = vmatpush1.bf16.msra.mxu0 0
  %3109 = vmatprep.mubr.bf16.mxu0 0
  %3110 = vmatmul.mubr.bf16.gmra.mrb[0].mxu0 %v3035
  %v3111 = vpop.f32.mrb[0].mxu0
  %v3112 = vadd.f32 0.0, %v3111
  %v3113 = vpop.f32.mrb[0].mxu0
  %v3114 = vadd.f32 0.0, %v3113
  %v3115 = vpop.f32.mrb[0].mxu0
  %v3116 = vpop.f32.mrb[0].mxu0
  %3117 = vdwg.mxu0
  %s3118 = smul.u32 7, 4
  %s3119 = smul.addr %s3118, 8
  %s3120 = scalar_lea.vmem [#allocation2], %s3119
  %v3121 = vld [vmem:[%s3120] sm:$0xff]
  %v3122 = vld [vmem:[%s3120 + $0x8] sm:$0xff]
  %v3123 = vld [vmem:[%s3120 + $0x10] sm:$0xff]
  %v3124 = vld [vmem:[%s3120 + $0x18] sm:$0xff]
  %3125 = vmatprep.subr.bf16.mxu0 %v1196
  %3126 = vmatpush1.bf16.msra.mxu0 %v1195
  %3127 = vmatprep.subr.bf16.mxu0 %v1200
  %3128 = vmatpush1.bf16.msra.mxu0 %v1199
  %3129 = vmatprep.subr.bf16.mxu0 %v1204
  %3130 = vmatpush1.bf16.msra.mxu0 %v1203
  %3131 = vmatprep.subr.bf16.mxu0 %v1208
  %3132 = vmatpush1.bf16.msra.mxu0 %v1207
  %3133 = vmatprep.subr.bf16.mxu0 %v1212
  %3134 = vmatpush1.bf16.msra.mxu0 %v1211
  %3135 = vmatprep.subr.bf16.mxu0 %v1216
  %3136 = vmatpush1.bf16.msra.mxu0 %v1215
  %3137 = vmatprep.subr.bf16.mxu0 %v1220
  %3138 = vmatpush1.bf16.msra.mxu0 %v1219
  %3139 = vmatprep.subr.bf16.mxu0 %v1224
  %3140 = vmatpush1.bf16.msra.mxu0 %v1223
  %3141 = vmatprep.subr.bf16.mxu0 0
  %3142 = vmatpush1.bf16.msra.mxu0 0
  %3143 = vmatprep.subr.bf16.mxu0 0
  %3144 = vmatpush1.bf16.msra.mxu0 0
  %3145 = vmatprep.subr.bf16.mxu0 0
  %3146 = vmatpush1.bf16.msra.mxu0 0
  %3147 = vmatprep.subr.bf16.mxu0 0
  %3148 = vmatpush1.bf16.msra.mxu0 0
  %3149 = vmatprep.subr.bf16.mxu0 0
  %3150 = vmatpush1.bf16.msra.mxu0 0
  %3151 = vmatprep.subr.bf16.mxu0 0
  %3152 = vmatpush1.bf16.msra.mxu0 0
  %3153 = vmatprep.subr.bf16.mxu0 0
  %3154 = vmatpush1.bf16.msra.mxu0 0
  %3155 = vmatprep.subr.bf16.mxu0 0
  %3156 = vmatpush1.bf16.msra.mxu0 0
  %3157 = vmatprep.mubr.bf16.mxu0 0
  %3158 = vmatmul.mubr.bf16.gmra.mrb[0].mxu0 %v2924
  %v3159 = vpop.f32.mrb[0].mxu0
  %v3160 = vadd.f32 0.0, %v3159
  %v3161 = vpop.f32.mrb[0].mxu0
  %v3162 = vadd.f32 0.0, %v3161
  %v3163 = vpop.f32.mrb[0].mxu0
  %v3164 = vpop.f32.mrb[0].mxu0
  %3165 = vdwg.mxu0
  %3166 = vmatprep.subr.bf16.mxu0 %v1198
  %3167 = vmatpush1.bf16.msra.mxu0 %v1197
  %3168 = vmatprep.subr.bf16.mxu0 %v1202
  %3169 = vmatpush1.bf16.msra.mxu0 %v1201
  %3170 = vmatprep.subr.bf16.mxu0 %v1206
  %3171 = vmatpush1.bf16.msra.mxu0 %v1205
  %3172 = vmatprep.subr.bf16.mxu0 %v1210
  %3173 = vmatpush1.bf16.msra.mxu0 %v1209
  %3174 = vmatprep.subr.bf16.mxu0 %v1214
  %3175 = vmatpush1.bf16.msra.mxu0 %v1213
  %3176 = vmatprep.subr.bf16.mxu0 %v1218
  %3177 = vmatpush1.bf16.msra.mxu0 %v1217
  %3178 = vmatprep.subr.bf16.mxu0 %v1222
  %3179 = vmatpush1.bf16.msra.mxu0 %v1221
  %3180 = vmatprep.subr.bf16.mxu0 %v1226
  %3181 = vmatpush1.bf16.msra.mxu0 %v1225
  %3182 = vmatprep.subr.bf16.mxu0 0
  %3183 = vmatpush1.bf16.msra.mxu0 0
  %3184 = vmatprep.subr.bf16.mxu0 0
  %3185 = vmatpush1.bf16.msra.mxu0 0
  %3186 = vmatprep.subr.bf16.mxu0 0
  %3187 = vmatpush1.bf16.msra.mxu0 0
  %3188 = vmatprep.subr.bf16.mxu0 0
  %3189 = vmatpush1.bf16.msra.mxu0 0
  %3190 = vmatprep.subr.bf16.mxu0 0
  %3191 = vmatpush1.bf16.msra.mxu0 0
  %3192 = vmatprep.subr.bf16.mxu0 0
  %3193 = vmatpush1.bf16.msra.mxu0 0
  %3194 = vmatprep.subr.bf16.mxu0 0
  %3195 = vmatpush1.bf16.msra.mxu0 0
  %3196 = vmatprep.subr.bf16.mxu0 0
  %3197 = vmatpush1.bf16.msra.mxu0 0
  %3198 = vmatprep.mubr.bf16.mxu0 0
  %3199 = vmatmul.mubr.bf16.gmra.mrb[0].mxu0 %v2924
  %v3200 = vpop.f32.mrb[0].mxu0
  %v3201 = vadd.f32 0.0, %v3200
  %v3202 = vpop.f32.mrb[0].mxu0
  %v3203 = vadd.f32 0.0, %v3202
  %v3204 = vpop.f32.mrb[0].mxu0
  %v3205 = vpop.f32.mrb[0].mxu0
  %3206 = vdwg.mxu0
  %v3207 = vadd.f32 %v3121, %v3160
  %v3208 = vadd.f32 %v3122, %v3162
  %v3209 = vadd.f32 %v3123, %v3201
  %v3210 = vadd.f32 %v3124, %v3203
  %v3211 = vxor.u32 %v3207, 2147483648
  %v3212 = vxor.u32 %v3208, 2147483648
  %v3213 = vxor.u32 %v3209, 2147483648
  %v3214 = vmul.f32 %v3211, 1.442695
  %v3215 = vpow.pop %v3214
  %v3216 = vmul.f32 %v3212, 1.442695
  %v3217 = vpow.pop %v3216
  %v3218 = vmul.f32 %v3213, 1.442695
  %v3219 = vpow.pop %v3218
  %v3220 = vadd.f32 %v3215, 1.0
  %v3221 = vadd.f32 %v3217, 1.0
  %v3222 = vadd.f32 %v3219, 1.0
  %v3223 = vrcp.pop %v3220
  %v3224 = vmul.f32 1.0, %v3223
  %v3225 = vrcp.pop %v3221
  %v3226 = vmul.f32 1.0, %v3225
  %v3227 = vrcp.pop %v3222
  %v3228 = vmul.f32 1.0, %v3227
  %v3229 = vtanh.pop %v3210
  %v3230 = vmul.f32 %v3226, %v2921
  %v3231 = vmul.f32 %v3224, %v3229
  %v3232 = vadd.f32 %v3230, %v3231
  %v3233 = vtanh.pop %v3232
  %v3234 = vmul.f32 %v3228, %v3233
  %v3235 = vpack.c.bf16 %v3234, %v3234
  %3236 = vmatprep.subr.bf16.mxu0 %v625
  %3237 = vmatpush1.bf16.msra.mxu0 %v624
  %3238 = vmatprep.subr.bf16.mxu0 %v629
  %3239 = vmatpush1.bf16.msra.mxu0 %v628
  %3240 = vmatprep.subr.bf16.mxu0 %v633
  %3241 = vmatpush1.bf16.msra.mxu0 %v632
  %3242 = vmatprep.subr.bf16.mxu0 %v637
  %3243 = vmatpush1.bf16.msra.mxu0 %v636
  %3244 = vmatprep.subr.bf16.mxu0 %v641
  %3245 = vmatpush1.bf16.msra.mxu0 %v640
  %3246 = vmatprep.subr.bf16.mxu0 %v645
  %3247 = vmatpush1.bf16.msra.mxu0 %v644
  %3248 = vmatprep.subr.bf16.mxu0 %v649
  %3249 = vmatpush1.bf16.msra.mxu0 %v648
  %3250 = vmatprep.subr.bf16.mxu0 %v653
  %3251 = vmatpush1.bf16.msra.mxu0 %v652
  %3252 = vmatprep.subr.bf16.mxu0 0
  %3253 = vmatpush1.bf16.msra.mxu0 0
  %3254 = vmatprep.subr.bf16.mxu0 0
  %3255 = vmatpush1.bf16.msra.mxu0 0
  %3256 = vmatprep.subr.bf16.mxu0 0
  %3257 = vmatpush1.bf16.msra.mxu0 0
  %3258 = vmatprep.subr.bf16.mxu0 0
  %3259 = vmatpush1.bf16.msra.mxu0 0
  %3260 = vmatprep.subr.bf16.mxu0 0
  %3261 = vmatpush1.bf16.msra.mxu0 0
  %3262 = vmatprep.subr.bf16.mxu0 0
  %3263 = vmatpush1.bf16.msra.mxu0 0
  %3264 = vmatprep.subr.bf16.mxu0 0
  %3265 = vmatpush1.bf16.msra.mxu0 0
  %3266 = vmatprep.subr.bf16.mxu0 0
  %3267 = vmatpush1.bf16.msra.mxu0 0
  %3268 = vmatprep.mubr.bf16.mxu0 0
  %3269 = vmatmul.mubr.bf16.gmra.mrb[0].mxu0 %v3235
  %v3270 = vpop.f32.mrb[0].mxu0
  %v3271 = vadd.f32 %v3071, %v3270
  %v3272 = vpop.f32.mrb[0].mxu0
  %v3273 = vadd.f32 %v3073, %v3272
  %v3274 = vpop.f32.mrb[0].mxu0
  %v3275 = vpop.f32.mrb[0].mxu0
  %3276 = vdwg.mxu0
  %3277 = vmatprep.subr.bf16.mxu0 %v627
  %3278 = vmatpush1.bf16.msra.mxu0 %v626
  %3279 = vmatprep.subr.bf16.mxu0 %v631
  %3280 = vmatpush1.bf16.msra.mxu0 %v630
  %3281 = vmatprep.subr.bf16.mxu0 %v635
  %3282 = vmatpush1.bf16.msra.mxu0 %v634
  %3283 = vmatprep.subr.bf16.mxu0 %v639
  %3284 = vmatpush1.bf16.msra.mxu0 %v638
  %3285 = vmatprep.subr.bf16.mxu0 %v643
  %3286 = vmatpush1.bf16.msra.mxu0 %v642
  %3287 = vmatprep.subr.bf16.mxu0 %v647
  %3288 = vmatpush1.bf16.msra.mxu0 %v646
  %3289 = vmatprep.subr.bf16.mxu0 %v651
  %3290 = vmatpush1.bf16.msra.mxu0 %v650
  %3291 = vmatprep.subr.bf16.mxu0 %v655
  %3292 = vmatpush1.bf16.msra.mxu0 %v654
  %3293 = vmatprep.subr.bf16.mxu0 0
  %3294 = vmatpush1.bf16.msra.mxu0 0
  %3295 = vmatprep.subr.bf16.mxu0 0
  %3296 = vmatpush1.bf16.msra.mxu0 0
  %3297 = vmatprep.subr.bf16.mxu0 0
  %3298 = vmatpush1.bf16.msra.mxu0 0
  %3299 = vmatprep.subr.bf16.mxu0 0
  %3300 = vmatpush1.bf16.msra.mxu0 0
  %3301 = vmatprep.subr.bf16.mxu0 0
  %3302 = vmatpush1.bf16.msra.mxu0 0
  %3303 = vmatprep.subr.bf16.mxu0 0
  %3304 = vmatpush1.bf16.msra.mxu0 0
  %3305 = vmatprep.subr.bf16.mxu0 0
  %3306 = vmatpush1.bf16.msra.mxu0 0
  %3307 = vmatprep.subr.bf16.mxu0 0
  %3308 = vmatpush1.bf16.msra.mxu0 0
  %3309 = vmatprep.mubr.bf16.mxu0 0
  %3310 = vmatmul.mubr.bf16.gmra.mrb[0].mxu0 %v3235
  %v3311 = vpop.f32.mrb[0].mxu0
  %v3312 = vadd.f32 %v3112, %v3311
  %v3313 = vpop.f32.mrb[0].mxu0
  %v3314 = vadd.f32 %v3114, %v3313
  %v3315 = vpop.f32.mrb[0].mxu0
  %v3316 = vpop.f32.mrb[0].mxu0
  %3317 = vdwg.mxu0
  %v3318 = vadd.f32 %v3271, %v459
  %v3319 = vadd.f32 %v3273, %v463
  %v3320 = vadd.f32 %v3312, %v467
  %v3321 = vadd.f32 %v3314, %v471
  %v3322 = vxor.u32 %v3318, 2147483648
  %v3323 = vxor.u32 %v3319, 2147483648
  %v3324 = vxor.u32 %v3320, 2147483648
  %v3325 = vmul.f32 %v3322, 1.442695
  %v3326 = vpow.pop %v3325
  %v3327 = vmul.f32 %v3323, 1.442695
  %v3328 = vpow.pop %v3327
  %v3329 = vmul.f32 %v3324, 1.442695
  %v3330 = vpow.pop %v3329
  %v3331 = vadd.f32 %v3326, 1.0
  %v3332 = vadd.f32 %v3328, 1.0
  %v3333 = vadd.f32 %v3330, 1.0
  %v3334 = vrcp.pop %v3331
  %v3335 = vmul.f32 1.0, %v3334
  %v3336 = vrcp.pop %v3332
  %v3337 = vmul.f32 1.0, %v3336
  %v3338 = vrcp.pop %v3333
  %v3339 = vmul.f32 1.0, %v3338
  %v3340 = vtanh.pop %v3321
  %v3341 = vmul.f32 %v3337, %v3032
  %v3342 = vmul.f32 %v3335, %v3340
  %v3343 = vadd.f32 %v3341, %v3342
  %v3344 = vtanh.pop %v3343
  %v3345 = vmul.f32 %v3339, %v3344
  %v3346 = vpack.c.bf16 %v3345, %v3345
  %v3347 = vld [vmem:[%s7] sm:$0xf]
  %v3348 = vld [vmem:[%s7 + $0x4] sm:$0xf]
  %v3349 = vld [vmem:[%s7 + $0x8] sm:$0xf]
  %v3350 = vld [vmem:[%s7 + $0xc] sm:$0xf]
  %v3351 = vld [vmem:[%s7 + $0x10] sm:$0xf]
  %v3352 = vld [vmem:[%s7 + $0x14] sm:$0xf]
  %v3353 = vld [vmem:[%s7 + $0x18] sm:$0xf]
  %v3354 = vld [vmem:[%s7 + $0x1c] sm:$0xf]
  %v3355 = vld [vmem:[%s7 + $0x20] sm:$0xf]
  %v3356 = vld [vmem:[%s7 + $0x24] sm:$0xf]
  %v3357 = vld [vmem:[%s7 + $0x28] sm:$0xf]
  %v3358 = vld [vmem:[%s7 + $0x2c] sm:$0xf]
  %v3359 = vld [vmem:[%s7 + $0x30] sm:$0xf]
  %v3360 = vld [vmem:[%s7 + $0x34] sm:$0xf]
  %v3361 = vld [vmem:[%s7 + $0x38] sm:$0xf]
  %v3362 = vld [vmem:[%s7 + $0x3c] sm:$0xf]
  %v3379 = vunpack.c.l.b16 %v3347
  %v3380 = vunpack.c.l.b16 %v3348
  %v3381 = vunpack.c.l.b16 %v3349
  %v3382 = vunpack.c.l.b16 %v3350
  %v3383 = vunpack.c.l.b16 %v3351
  %v3384 = vunpack.c.l.b16 %v3352
  %v3385 = vunpack.c.l.b16 %v3353
  %v3386 = vunpack.c.l.b16 %v3354
  %v3387 = vunpack.c.l.b16 %v3355
  %v3388 = vunpack.c.l.b16 %v3356
  %v3389 = vunpack.c.l.b16 %v3357
  %v3390 = vunpack.c.l.b16 %v3358
  %v3391 = vunpack.c.l.b16 %v3359
  %v3392 = vunpack.c.l.b16 %v3360
  %v3393 = vunpack.c.l.b16 %v3361
  %v3394 = vunpack.c.l.b16 %v3362
  %v3395 = vpack.c.b16 %v3380, %v3379
  %v3396 = vpack.c.b16 %v3382, %v3381
  %v3397 = vpack.c.b16 %v3384, %v3383
  %v3398 = vpack.c.b16 %v3386, %v3385
  %v3399 = vpack.c.b16 %v3388, %v3387
  %v3400 = vpack.c.b16 %v3390, %v3389
  %v3401 = vpack.c.b16 %v3392, %v3391
  %v3402 = vpack.c.b16 %v3394, %v3393
  %3411 = vmatprep.subr.bf16.mxu0 0
  %3412 = vmatpush1.bf16.msra.mxu0 %v3395
  %3413 = vmatprep.subr.bf16.mxu0 0
  %3414 = vmatpush1.bf16.msra.mxu0 %v3396
  %3415 = vmatprep.subr.bf16.mxu0 0
  %3416 = vmatpush1.bf16.msra.mxu0 %v3397
  %3417 = vmatprep.subr.bf16.mxu0 0
  %3418 = vmatpush1.bf16.msra.mxu0 %v3398
  %3419 = vmatprep.subr.bf16.mxu0 0
  %3420 = vmatpush1.bf16.msra.mxu0 %v3399
  %3421 = vmatprep.subr.bf16.mxu0 0
  %3422 = vmatpush1.bf16.msra.mxu0 %v3400
  %3423 = vmatprep.subr.bf16.mxu0 0
  %3424 = vmatpush1.bf16.msra.mxu0 %v3401
  %3425 = vmatprep.subr.bf16.mxu0 0
  %3426 = vmatpush1.bf16.msra.mxu0 %v3402
  %3427 = vmatprep.subr.bf16.mxu0 0
  %3428 = vmatpush1.bf16.msra.mxu0 0
  %3429 = vmatprep.subr.bf16.mxu0 0
  %3430 = vmatpush1.bf16.msra.mxu0 0
  %3431 = vmatprep.subr.bf16.mxu0 0
  %3432 = vmatpush1.bf16.msra.mxu0 0
  %3433 = vmatprep.subr.bf16.mxu0 0
  %3434 = vmatpush1.bf16.msra.mxu0 0
  %3435 = vmatprep.subr.bf16.mxu0 0
  %3436 = vmatpush1.bf16.msra.mxu0 0
  %3437 = vmatprep.subr.bf16.mxu0 0
  %3438 = vmatpush1.bf16.msra.mxu0 0
  %3439 = vmatprep.subr.bf16.mxu0 0
  %3440 = vmatpush1.bf16.msra.mxu0 0
  %3441 = vmatprep.subr.bf16.mxu0 0
  %3442 = vmatpush1.bf16.msra.mxu0 0
  %3443 = vmatprep.mubr.bf16.mxu0 0
  %3444 = vmatmul.mubr.bf16.gmra.mrb[0].mxu0 %v3346
  %v3445 = vpop.f32.mrb[0].mxu0
  %v3446 = vadd.f32 0.0, %v3445
  %v3447 = vpop.f32.mrb[0].mxu0
  %v3448 = vpop.f32.mrb[0].mxu0
  %v3449 = vpop.f32.mrb[0].mxu0
  %3450 = vdwg.mxu0
  %3451 = vst [vmem:[%s8] sm:$0xff] %v3446
  // Predicated region
  $region34: #{lstm_forward.1} parent=0 // pred_check
    _
  $region35: #{lstm_forward.1} parent=0 // pred_check_branch
    %3453 = sbr.rel (0) target = $region37
  $region36: #{lstm_forward.1} parent=0 // pred_region
    _
  $region37: #{lstm_forward.1} parent=0 // pred_fallthru
    _
  // Predicated region
  $region38: #{lstm_forward.1} parent=0 // pred_check
    _
  $region39: #{lstm_forward.1} parent=0 // pred_check_branch
    %3455 = sbr.rel (0) target = $region41
  $region40: #{lstm_forward.1} parent=0 // pred_region
    _
  $region41: #{lstm_forward.1} parent=0 // pred_fallthru
    _

</llo_original>
